<compile_context>
chip_gen: v5e
topology: v5e:2x2
jax: 0.10.0
libtpu: 0.0.40
codegen_flags: <defaults>
</compile_context>

<pallas_src>
import jax
import jax.numpy as jnp
from jax import lax
from jax.experimental import pallas as pl
from jax.experimental.pallas import tpu as pltpu

# ---------------------------- configuration ----------------------------
BATCH_SIZE  = 2
SEQ_LEN     = 16
PRED_LEN    = 16
EMB_DIM     = 32
CONV_DIM    = 4
KERNEL_SIZE = 3
NUM_SAMPLES = 4
T_LEN       = SEQ_LEN + PRED_LEN
L_OUT       = SEQ_LEN - KERNEL_SIZE + 1
FC_DIM      = CONV_DIM * L_OUT

_VMEM = pl.BlockSpec(memory_space=pltpu.MemorySpace.VMEM)
_SMEM = pl.BlockSpec(memory_space=pltpu.MemorySpace.SMEM)


# ------------------------------ fused kernel -----------------------------
def _grl_kernel(x_ref, y_ref, epsm_ref, perm_ref,          # VMEM inputs
                convw_ref, convb_ref,                       # SMEM inputs
                fcw_ref, fcb_ref, recw_ref, recb_ref,       # VMEM inputs
                cwy_ref, cby_ref, cw1_ref, cb1_ref, cw2_ref, cb2_ref,
                fea_ref, loss_ref,                          # outputs
                feat_ref, cat_ref):                         # VMEM scratch
    """Entire GRL forward: 2x encoder (conv+BN+FC), reparam, 2x rec+MSE,
    2x KL, 4x critic (batched) and the MLBO terms — in one kernel."""
    TwoB, L = x_ref.shape
    B = TwoB // 2
    C = convb_ref.shape[1]
    K = convw_ref.shape[1] // C
    Lout = L - K + 1
    FC = C * Lout
    E = fea_ref.shape[1]
    T = y_ref.shape[1]
    bn_eps = 1e-5

    x_all = x_ref[...]                                       # (2B, L)

    # ---- Conv1d(1->C, K) + BatchNorm1d (train mode) for the 4 paths ----
    # path p: 0 = trend/mean, 1 = trend/var, 2 = season/mean, 3 = season/var.
    # Normalized channels are written lane-dense into the (4B, FC_DIM) scratch
    # so the flatten+Linear below is a single wide matmul per path.
    for br in range(2):                                      # 0=trend, 1=season
        x = x_all[br * B:(br + 1) * B, :]
        xs = [x[:, k:k + Lout] for k in range(K)]            # hoisted shifted views
        for mv in range(2):                                  # 0=mean conv, 1=var conv
            p = 2 * br + mv
            for c in range(C):
                ch = jnp.zeros((B, Lout), jnp.float32) + convb_ref[p, c]
                for k in range(K):
                    ch = ch + convw_ref[p, c * K + k] * xs[k]
                mu = jnp.mean(ch)                            # BatchNorm1d, training
                var = jnp.mean((ch - mu) ** 2)
                feat_ref[p * B:(p + 1) * B, c * Lout:(c + 1) * Lout] = (
                    (ch - mu) * lax.rsqrt(var + bn_eps))

    # ---- flatten + Linear: one (B, FC) x (FC, E) dot per conv path ----
    def fc(p):
        return (jnp.dot(feat_ref[p * B:(p + 1) * B, :],
                        fcw_ref[p * FC:(p + 1) * FC, :],
                        preferred_element_type=jnp.float32)
                + fcb_ref[p:p + 1, :])

    means, logvars, feas = [], [], []
    for br in range(2):
        m = fc(2 * br)                                       # mean branch
        pre = fc(2 * br + 1)                                 # var branch (pre-softplus)
        # numerically stable softplus == log(1 + exp(pre))
        lv = jnp.maximum(pre, 0.0) + jnp.log(1.0 + jnp.exp(-jnp.abs(pre)))
        # reparameterization: samples.mean(0) = mu + mean(eps) * sqrt(exp(lv))
        fea = m + epsm_ref[br * B:(br + 1) * B, :] * jnp.exp(0.5 * lv)
        fea_ref[br * B:(br + 1) * B, :] = fea
        means.append(m)
        logvars.append(lv)
        feas.append(fea)

    fea_all = fea_ref[...]                                   # (2B, E)

    # ---- reconstruction + MSE and KL per branch (elbo) ----
    elbo = 0.0
    for br in range(2):
        rec = (jnp.dot(feas[br], recw_ref[br * E:(br + 1) * E, :],
                       preferred_element_type=jnp.float32)
               + recb_ref[br:br + 1, :])
        dd = rec - y_ref[br * B:(br + 1) * B, :]
        mse = jnp.sum(dd * dd) / (B * T)
        diff = feas[br] - means[br]
        lv = logvars[br]
        # KL = log q(z|m,lv) - log p(z); the 0.5*log(2*pi) constants cancel.
        kl = jnp.sum(-0.5 * (lv + diff * diff * jnp.exp(-lv))
                     + 0.5 * feas[br] * feas[br]) / B
        elbo = elbo - mse - kl
    # TODO(synk): fft_sim / trend_sim are undefined in the reference source;
    # they are omitted (treated as 0) in the elbo.

    # ---- critic: 4 evaluations (trend/season x real/shuffled), one batch ----
    hy = (jnp.dot(y_ref[...], cwy_ref[...], preferred_element_type=jnp.float32)
          + cby_ref[...])                                    # (2B, E), reused twice
    zsh = jnp.dot(perm_ref[...], fea_all,
                  preferred_element_type=jnp.float32)        # block-diag batch shuffle
    cat_ref[0:TwoB,          0:E]     = hy
    cat_ref[TwoB:2 * TwoB,   0:E]     = hy
    cat_ref[0:TwoB,          E:2 * E] = fea_all
    cat_ref[TwoB:2 * TwoB,   E:2 * E] = zsh
    h = (jnp.dot(cat_ref[...], cw1_ref[...], preferred_element_type=jnp.float32)
         + cb1_ref[...])
    h = jnp.maximum(h, 0.0)
    o = jnp.sum(h * cw2_ref[...], axis=1, keepdims=True) + cb2_ref[...]   # (4B, 1)
    crit = pl.reciprocal(1.0 + jnp.exp(-o), approx=True)     # sigmoid via EUP recip

    mlbo = 0.0
    for br in range(2):
        c_real = crit[br * B:(br + 1) * B, :]
        e_shuf = jnp.exp(crit[TwoB + br * B:TwoB + (br + 1) * B, :])
        # 'point' is .detach()'d in the reference; forward value is identical.
        point = 1.0 / jnp.mean(e_shuf)
        mlbo = mlbo + jnp.mean(c_real - point * e_shuf)

    loss_ref[...] = jnp.full((1, 1), elbo + mlbo, jnp.float32)


def grl_fused(x_all, y_all, eps_mean, perm, p):
    TwoB = x_all.shape[0]
    return pl.pallas_call(
        _grl_kernel,
        out_shape=(jax.ShapeDtypeStruct((TwoB, EMB_DIM), jnp.float32),
                   jax.ShapeDtypeStruct((1, 1), jnp.float32)),
        in_specs=[_VMEM, _VMEM, _VMEM, _VMEM,                # x, y, eps_mean, perm
                  _SMEM, _SMEM,                              # conv weights / biases
                  _VMEM, _VMEM, _VMEM, _VMEM,                # fc_w, fc_b, rec_w, rec_b
                  _VMEM, _VMEM, _VMEM, _VMEM, _VMEM, _VMEM], # critic params
        out_specs=(_VMEM, _VMEM),
        scratch_shapes=[pltpu.VMEM((2 * TwoB, FC_DIM), jnp.float32),     # conv features
                        pltpu.VMEM((2 * TwoB, 2 * EMB_DIM), jnp.float32)],  # critic cat
    )(x_all, y_all, eps_mean, perm,
      p['conv_w'], p['conv_b'],
      p['fc_w'], p['fc_b'], p['rec_w'], p['rec_b'],
      p['critic_wy'], p['critic_by'], p['critic_w1'], p['critic_b1'],
      p['critic_w2'], p['critic_b2'])


# ------------------------------ parameters ------------------------------
def init_params(key):
    """Parameters pre-packed in the layout the fused kernel consumes.
    Row/block order for the 4 conv/fc paths: [t_mean, t_var, s_mean, s_var];
    for rec: [trend, season]."""
    C, K, E, T, FC = CONV_DIM, KERNEL_SIZE, EMB_DIM, T_LEN, FC_DIM
    H = EMB_DIM // 4
    keys = iter(jax.random.split(key, 16))

    def lin(fan_in, shape):  # PyTorch-default-ish uniform init, deterministic
        bound = 1.0 / (fan_in ** 0.5)
        return jax.random.uniform(next(keys), shape, jnp.float32, -bound, bound)

    return dict(
        conv_w=lin(K, (4, C * K)),
        conv_b=lin(K, (4, C)),
        fc_w=lin(FC, (4 * FC, E)),
        fc_b=lin(FC, (4, E)),
        rec_w=lin(E, (2 * E, T)),
        rec_b=lin(E, (2, T)),
        critic_wy=lin(T, (T, E)),
        critic_by=lin(T, (1, E)),
        critic_w1=lin(2 * E, (2 * E, H)),
        critic_b1=lin(2 * E, (1, H)),
        critic_w2=lin(H, (1, H)),          # stored as a row; applied as h @ w2
        critic_b2=lin(H, (1, 1)),
    )


# ------------------------------- forward --------------------------------
def grl_forward(params, trend_x, season_x, trend_y, season_y, key):
    B = trend_x.shape[0]
    k_eps_t, k_eps_s, k_perm_t, k_perm_s = jax.random.split(key, 4)

    # RNG stays in plain JAX (mirrors torch.rand / torch.randperm).
    eps_t = jax.random.uniform(k_eps_t, (NUM_SAMPLES, B, EMB_DIM), jnp.float32).mean(0)
    eps_s = jax.random.uniform(k_eps_s, (NUM_SAMPLES, B, EMB_DIM), jnp.float32).mean(0)
    eps_mean = jnp.concatenate([eps_t, eps_s], axis=0)               # (2B, E)

    # Batch permutations expressed as a block-diagonal matrix so the shuffle is
    # a single in-kernel matmul: z_shuf = P @ z.
    idx_t = jax.random.permutation(k_perm_t, B)
    idx_s = jax.random.permutation(k_perm_s, B)
    zero = jnp.zeros((B, B), jnp.float32)
    perm = jnp.block([[jax.nn.one_hot(idx_t, B, dtype=jnp.float32), zero],
                      [zero, jax.nn.one_hot(idx_s, B, dtype=jnp.float32)]])  # (2B, 2B)

    # Stack trend/season: rows [0:B] = trend, [B:2B] = season.
    x_all = jnp.concatenate([trend_x[..., 0], season_x[..., 0]], axis=0)   # (2B, L)
    y_all = jnp.concatenate([trend_y[..., 0], season_y[..., 0]], axis=0)   # (2B, T)

    fea_all, loss = grl_fused(x_all, y_all, eps_mean, perm, params)
    return fea_all[:B], fea_all[B:], loss[0, 0]


# --------------------------------- main ----------------------------------
if __name__ == "__main__":
    root = jax.random.PRNGKey(0)
    kp, kx1, kx2, ky1, ky2, kfwd = jax.random.split(root, 6)

    params = init_params(kp)
    trend_x = jax.random.normal(kx1, (BATCH_SIZE, SEQ_LEN, 1), jnp.float32)
    season_x = jax.random.normal(kx2, (BATCH_SIZE, SEQ_LEN, 1), jnp.float32)
    trend_y = jax.random.normal(ky1, (BATCH_SIZE, T_LEN, 1), jnp.float32)
    season_y = jax.random.normal(ky2, (BATCH_SIZE, T_LEN, 1), jnp.float32)

    t_fea, s_fea, loss = jax.jit(grl_forward)(
        params, trend_x, season_x, trend_y, season_y, kfwd)
    jax.block_until_ready((t_fea, s_fea, loss))

    assert t_fea.shape == (BATCH_SIZE, EMB_DIM)
    assert s_fea.shape == (BATCH_SIZE, EMB_DIM)
    assert loss.shape == ()
    assert bool(jnp.isfinite(loss))
    print("KERNEL_OK")
</pallas_src>

<mosaic_0001>
module attributes {stable_mosaic.version = 11 : i64} {
  func.func @_grl_kernel(%arg0: memref<4x16xf32, #tpu.memory_space<vmem>>, %arg1: memref<4x32xf32, #tpu.memory_space<vmem>>, %arg2: memref<4x32xf32, #tpu.memory_space<vmem>>, %arg3: memref<4x4xf32, #tpu.memory_space<vmem>>, %arg4: memref<4x12xf32, #tpu.memory_space<smem>>, %arg5: memref<4x4xf32, #tpu.memory_space<smem>>, %arg6: memref<224x32xf32, #tpu.memory_space<vmem>>, %arg7: memref<4x32xf32, #tpu.memory_space<vmem>>, %arg8: memref<64x32xf32, #tpu.memory_space<vmem>>, %arg9: memref<2x32xf32, #tpu.memory_space<vmem>>, %arg10: memref<32x32xf32, #tpu.memory_space<vmem>>, %arg11: memref<1x32xf32, #tpu.memory_space<vmem>>, %arg12: memref<64x8xf32, #tpu.memory_space<vmem>>, %arg13: memref<1x8xf32, #tpu.memory_space<vmem>>, %arg14: memref<1x8xf32, #tpu.memory_space<vmem>>, %arg15: memref<1x1xf32, #tpu.memory_space<vmem>>, %arg16: memref<4x32xf32, #tpu.memory_space<vmem>>, %arg17: memref<1x1xf32, #tpu.memory_space<vmem>>, %arg18: memref<8x56xf32, #tpu.memory_space<vmem>>, %arg19: memref<8x64xf32, #tpu.memory_space<vmem>>) attributes {dimension_semantics = [], scalar_prefetch = 0 : i64, scratch_operands = 2 : i64, tpu.core_type = #tpu.core_type<tc>} {
    %c0 = arith.constant 0 : index
    %c0_0 = arith.constant 0 : index
    %0 = vector.load %arg0[%c0, %c0_0] : memref<4x16xf32, #tpu.memory_space<vmem>>, vector<4x16xf32>
    %1 = vector.extract_strided_slice %0 {offsets = [0, 0], sizes = [2, 16], strides = [1, 1]} : vector<4x16xf32> to vector<2x16xf32>
    %2 = vector.extract_strided_slice %1 {offsets = [0, 0], sizes = [2, 14], strides = [1, 1]} : vector<2x16xf32> to vector<2x14xf32>
    %3 = vector.extract_strided_slice %1 {offsets = [0, 1], sizes = [2, 14], strides = [1, 1]} : vector<2x16xf32> to vector<2x14xf32>
    %4 = vector.extract_strided_slice %1 {offsets = [0, 2], sizes = [2, 14], strides = [1, 1]} : vector<2x16xf32> to vector<2x14xf32>
    %cst = arith.constant 0.000000e+00 : f32
    %5 = vector.broadcast %cst : f32 to vector<2x14xf32>
    %c0_1 = arith.constant 0 : index
    %c0_2 = arith.constant 0 : index
    %6 = memref.load %arg5[%c0_1, %c0_2] : memref<4x4xf32, #tpu.memory_space<smem>>
    %7 = vector.broadcast %6 : f32 to vector<2x14xf32>
    %8 = arith.addf %5, %7 : vector<2x14xf32>
    %c0_3 = arith.constant 0 : index
    %c0_4 = arith.constant 0 : index
    %9 = memref.load %arg4[%c0_3, %c0_4] : memref<4x12xf32, #tpu.memory_space<smem>>
    %10 = vector.broadcast %9 : f32 to vector<2x14xf32>
    %11 = arith.mulf %10, %2 : vector<2x14xf32>
    %12 = arith.addf %8, %11 : vector<2x14xf32>
    %c0_5 = arith.constant 0 : index
    %c1 = arith.constant 1 : index
    %13 = memref.load %arg4[%c0_5, %c1] : memref<4x12xf32, #tpu.memory_space<smem>>
    %14 = vector.broadcast %13 : f32 to vector<2x14xf32>
    %15 = arith.mulf %14, %3 : vector<2x14xf32>
    %16 = arith.addf %12, %15 : vector<2x14xf32>
    %c0_6 = arith.constant 0 : index
    %c2 = arith.constant 2 : index
    %17 = memref.load %arg4[%c0_6, %c2] : memref<4x12xf32, #tpu.memory_space<smem>>
    %18 = vector.broadcast %17 : f32 to vector<2x14xf32>
    %19 = arith.mulf %18, %4 : vector<2x14xf32>
    %20 = arith.addf %16, %19 : vector<2x14xf32>
    %21 = vector.shape_cast %20 : vector<2x14xf32> to vector<1x2x14xf32>
    %cst_7 = arith.constant dense<0.000000e+00> : vector<1xf32>
    %22 = vector.multi_reduction <add>, %21, %cst_7 [1, 2] : vector<1x2x14xf32> to vector<1xf32>
    %23 = vector.shape_cast %22 : vector<1xf32> to vector<1x1x1xf32>
    %24 = vector.extract %23[0, 0, 0] : f32 from vector<1x1x1xf32>
    %cst_8 = arith.constant 2.800000e+01 : f32
    %25 = arith.divf %24, %cst_8 : f32
    %26 = vector.broadcast %25 : f32 to vector<2x14xf32>
    %27 = arith.subf %20, %26 : vector<2x14xf32>
    %28 = arith.mulf %27, %27 : vector<2x14xf32>
    %29 = vector.shape_cast %28 : vector<2x14xf32> to vector<1x2x14xf32>
    %cst_9 = arith.constant dense<0.000000e+00> : vector<1xf32>
    %30 = vector.multi_reduction <add>, %29, %cst_9 [1, 2] : vector<1x2x14xf32> to vector<1xf32>
    %31 = vector.shape_cast %30 : vector<1xf32> to vector<1x1x1xf32>
    %32 = vector.extract %31[0, 0, 0] : f32 from vector<1x1x1xf32>
    %cst_10 = arith.constant 2.800000e+01 : f32
    %33 = arith.divf %32, %cst_10 : f32
    %34 = vector.broadcast %25 : f32 to vector<2x14xf32>
    %35 = arith.subf %20, %34 : vector<2x14xf32>
    %cst_11 = arith.constant 9.99999974E-6 : f32
    %36 = arith.addf %33, %cst_11 : f32
    %37 = math.rsqrt %36 : f32
    %38 = vector.broadcast %37 : f32 to vector<2x14xf32>
    %39 = arith.mulf %35, %38 : vector<2x14xf32>
    %c0_12 = arith.constant 0 : index
    %c0_13 = arith.constant 0 : index
    %40 = vector.load %arg18[%c0_12, %c0_13] : memref<8x56xf32, #tpu.memory_space<vmem>>, vector<2x14xf32>
    tpu.vector_store %arg18[%c0_12, %c0_13], %39 {strides = array<i32>} : memref<8x56xf32, #tpu.memory_space<vmem>>, vector<2x14xf32>,
    %cst_14 = arith.constant 0.000000e+00 : f32
    %41 = vector.broadcast %cst_14 : f32 to vector<2x14xf32>
    %c0_15 = arith.constant 0 : index
    %c1_16 = arith.constant 1 : index
    %42 = memref.load %arg5[%c0_15, %c1_16] : memref<4x4xf32, #tpu.memory_space<smem>>
    %43 = vector.broadcast %42 : f32 to vector<2x14xf32>
    %44 = arith.addf %41, %43 : vector<2x14xf32>
    %c0_17 = arith.constant 0 : index
    %c3 = arith.constant 3 : index
    %45 = memref.load %arg4[%c0_17, %c3] : memref<4x12xf32, #tpu.memory_space<smem>>
    %46 = vector.broadcast %45 : f32 to vector<2x14xf32>
    %47 = arith.mulf %46, %2 : vector<2x14xf32>
    %48 = arith.addf %44, %47 : vector<2x14xf32>
    %c0_18 = arith.constant 0 : index
    %c4 = arith.constant 4 : index
    %49 = memref.load %arg4[%c0_18, %c4] : memref<4x12xf32, #tpu.memory_space<smem>>
    %50 = vector.broadcast %49 : f32 to vector<2x14xf32>
    %51 = arith.mulf %50, %3 : vector<2x14xf32>
    %52 = arith.addf %48, %51 : vector<2x14xf32>
    %c0_19 = arith.constant 0 : index
    %c5 = arith.constant 5 : index
    %53 = memref.load %arg4[%c0_19, %c5] : memref<4x12xf32, #tpu.memory_space<smem>>
    %54 = vector.broadcast %53 : f32 to vector<2x14xf32>
    %55 = arith.mulf %54, %4 : vector<2x14xf32>
    %56 = arith.addf %52, %55 : vector<2x14xf32>
    %57 = vector.shape_cast %56 : vector<2x14xf32> to vector<1x2x14xf32>
    %cst_20 = arith.constant dense<0.000000e+00> : vector<1xf32>
    %58 = vector.multi_reduction <add>, %57, %cst_20 [1, 2] : vector<1x2x14xf32> to vector<1xf32>
    %59 = vector.shape_cast %58 : vector<1xf32> to vector<1x1x1xf32>
    %60 = vector.extract %59[0, 0, 0] : f32 from vector<1x1x1xf32>
    %cst_21 = arith.constant 2.800000e+01 : f32
    %61 = arith.divf %60, %cst_21 : f32
    %62 = vector.broadcast %61 : f32 to vector<2x14xf32>
    %63 = arith.subf %56, %62 : vector<2x14xf32>
    %64 = arith.mulf %63, %63 : vector<2x14xf32>
    %65 = vector.shape_cast %64 : vector<2x14xf32> to vector<1x2x14xf32>
    %cst_22 = arith.constant dense<0.000000e+00> : vector<1xf32>
    %66 = vector.multi_reduction <add>, %65, %cst_22 [1, 2] : vector<1x2x14xf32> to vector<1xf32>
    %67 = vector.shape_cast %66 : vector<1xf32> to vector<1x1x1xf32>
    %68 = vector.extract %67[0, 0, 0] : f32 from vector<1x1x1xf32>
    %cst_23 = arith.constant 2.800000e+01 : f32
    %69 = arith.divf %68, %cst_23 : f32
    %70 = vector.broadcast %61 : f32 to vector<2x14xf32>
    %71 = arith.subf %56, %70 : vector<2x14xf32>
    %cst_24 = arith.constant 9.99999974E-6 : f32
    %72 = arith.addf %69, %cst_24 : f32
    %73 = math.rsqrt %72 : f32
    %74 = vector.broadcast %73 : f32 to vector<2x14xf32>
    %75 = arith.mulf %71, %74 : vector<2x14xf32>
    %c0_25 = arith.constant 0 : index
    %c14 = arith.constant 14 : index
    %76 = vector.load %arg18[%c0_25, %c14] : memref<8x56xf32, #tpu.memory_space<vmem>>, vector<2x14xf32>
    tpu.vector_store %arg18[%c0_25, %c14], %75 {strides = array<i32>} : memref<8x56xf32, #tpu.memory_space<vmem>>, vector<2x14xf32>,
    %cst_26 = arith.constant 0.000000e+00 : f32
    %77 = vector.broadcast %cst_26 : f32 to vector<2x14xf32>
    %c0_27 = arith.constant 0 : index
    %c2_28 = arith.constant 2 : index
    %78 = memref.load %arg5[%c0_27, %c2_28] : memref<4x4xf32, #tpu.memory_space<smem>>
    %79 = vector.broadcast %78 : f32 to vector<2x14xf32>
    %80 = arith.addf %77, %79 : vector<2x14xf32>
    %c0_29 = arith.constant 0 : index
    %c6 = arith.constant 6 : index
    %81 = memref.load %arg4[%c0_29, %c6] : memref<4x12xf32, #tpu.memory_space<smem>>
    %82 = vector.broadcast %81 : f32 to vector<2x14xf32>
    %83 = arith.mulf %82, %2 : vector<2x14xf32>
    %84 = arith.addf %80, %83 : vector<2x14xf32>
    %c0_30 = arith.constant 0 : index
    %c7 = arith.constant 7 : index
    %85 = memref.load %arg4[%c0_30, %c7] : memref<4x12xf32, #tpu.memory_space<smem>>
    %86 = vector.broadcast %85 : f32 to vector<2x14xf32>
    %87 = arith.mulf %86, %3 : vector<2x14xf32>
    %88 = arith.addf %84, %87 : vector<2x14xf32>
    %c0_31 = arith.constant 0 : index
    %c8 = arith.constant 8 : index
    %89 = memref.load %arg4[%c0_31, %c8] : memref<4x12xf32, #tpu.memory_space<smem>>
    %90 = vector.broadcast %89 : f32 to vector<2x14xf32>
    %91 = arith.mulf %90, %4 : vector<2x14xf32>
    %92 = arith.addf %88, %91 : vector<2x14xf32>
    %93 = vector.shape_cast %92 : vector<2x14xf32> to vector<1x2x14xf32>
    %cst_32 = arith.constant dense<0.000000e+00> : vector<1xf32>
    %94 = vector.multi_reduction <add>, %93, %cst_32 [1, 2] : vector<1x2x14xf32> to vector<1xf32>
    %95 = vector.shape_cast %94 : vector<1xf32> to vector<1x1x1xf32>
    %96 = vector.extract %95[0, 0, 0] : f32 from vector<1x1x1xf32>
    %cst_33 = arith.constant 2.800000e+01 : f32
    %97 = arith.divf %96, %cst_33 : f32
    %98 = vector.broadcast %97 : f32 to vector<2x14xf32>
    %99 = arith.subf %92, %98 : vector<2x14xf32>
    %100 = arith.mulf %99, %99 : vector<2x14xf32>
    %101 = vector.shape_cast %100 : vector<2x14xf32> to vector<1x2x14xf32>
    %cst_34 = arith.constant dense<0.000000e+00> : vector<1xf32>
    %102 = vector.multi_reduction <add>, %101, %cst_34 [1, 2] : vector<1x2x14xf32> to vector<1xf32>
    %103 = vector.shape_cast %102 : vector<1xf32> to vector<1x1x1xf32>
    %104 = vector.extract %103[0, 0, 0] : f32 from vector<1x1x1xf32>
    %cst_35 = arith.constant 2.800000e+01 : f32
    %105 = arith.divf %104, %cst_35 : f32
    %106 = vector.broadcast %97 : f32 to vector<2x14xf32>
    %107 = arith.subf %92, %106 : vector<2x14xf32>
    %cst_36 = arith.constant 9.99999974E-6 : f32
    %108 = arith.addf %105, %cst_36 : f32
    %109 = math.rsqrt %108 : f32
    %110 = vector.broadcast %109 : f32 to vector<2x14xf32>
    %111 = arith.mulf %107, %110 : vector<2x14xf32>
    %c0_37 = arith.constant 0 : index
    %c28 = arith.constant 28 : index
    %112 = vector.load %arg18[%c0_37, %c28] : memref<8x56xf32, #tpu.memory_space<vmem>>, vector<2x14xf32>
    tpu.vector_store %arg18[%c0_37, %c28], %111 {strides = array<i32>} : memref<8x56xf32, #tpu.memory_space<vmem>>, vector<2x14xf32>,
    %cst_38 = arith.constant 0.000000e+00 : f32
    %113 = vector.broadcast %cst_38 : f32 to vector<2x14xf32>
    %c0_39 = arith.constant 0 : index
    %c3_40 = arith.constant 3 : index
    %114 = memref.load %arg5[%c0_39, %c3_40] : memref<4x4xf32, #tpu.memory_space<smem>>
    %115 = vector.broadcast %114 : f32 to vector<2x14xf32>
    %116 = arith.addf %113, %115 : vector<2x14xf32>
    %c0_41 = arith.constant 0 : index
    %c9 = arith.constant 9 : index
    %117 = memref.load %arg4[%c0_41, %c9] : memref<4x12xf32, #tpu.memory_space<smem>>
    %118 = vector.broadcast %117 : f32 to vector<2x14xf32>
    %119 = arith.mulf %118, %2 : vector<2x14xf32>
    %120 = arith.addf %116, %119 : vector<2x14xf32>
    %c0_42 = arith.constant 0 : index
    %c10 = arith.constant 10 : index
    %121 = memref.load %arg4[%c0_42, %c10] : memref<4x12xf32, #tpu.memory_space<smem>>
    %122 = vector.broadcast %121 : f32 to vector<2x14xf32>
    %123 = arith.mulf %122, %3 : vector<2x14xf32>
    %124 = arith.addf %120, %123 : vector<2x14xf32>
    %c0_43 = arith.constant 0 : index
    %c11 = arith.constant 11 : index
    %125 = memref.load %arg4[%c0_43, %c11] : memref<4x12xf32, #tpu.memory_space<smem>>
    %126 = vector.broadcast %125 : f32 to vector<2x14xf32>
    %127 = arith.mulf %126, %4 : vector<2x14xf32>
    %128 = arith.addf %124, %127 : vector<2x14xf32>
    %129 = vector.shape_cast %128 : vector<2x14xf32> to vector<1x2x14xf32>
    %cst_44 = arith.constant dense<0.000000e+00> : vector<1xf32>
    %130 = vector.multi_reduction <add>, %129, %cst_44 [1, 2] : vector<1x2x14xf32> to vector<1xf32>
    %131 = vector.shape_cast %130 : vector<1xf32> to vector<1x1x1xf32>
    %132 = vector.extract %131[0, 0, 0] : f32 from vector<1x1x1xf32>
    %cst_45 = arith.constant 2.800000e+01 : f32
    %133 = arith.divf %132, %cst_45 : f32
    %134 = vector.broadcast %133 : f32 to vector<2x14xf32>
    %135 = arith.subf %128, %134 : vector<2x14xf32>
    %136 = arith.mulf %135, %135 : vector<2x14xf32>
    %137 = vector.shape_cast %136 : vector<2x14xf32> to vector<1x2x14xf32>
    %cst_46 = arith.constant dense<0.000000e+00> : vector<1xf32>
    %138 = vector.multi_reduction <add>, %137, %cst_46 [1, 2] : vector<1x2x14xf32> to vector<1xf32>
    %139 = vector.shape_cast %138 : vector<1xf32> to vector<1x1x1xf32>
    %140 = vector.extract %139[0, 0, 0] : f32 from vector<1x1x1xf32>
    %cst_47 = arith.constant 2.800000e+01 : f32
    %141 = arith.divf %140, %cst_47 : f32
    %142 = vector.broadcast %133 : f32 to vector<2x14xf32>
    %143 = arith.subf %128, %142 : vector<2x14xf32>
    %cst_48 = arith.constant 9.99999974E-6 : f32
    %144 = arith.addf %141, %cst_48 : f32
    %145 = math.rsqrt %144 : f32
    %146 = vector.broadcast %145 : f32 to vector<2x14xf32>
    %147 = arith.mulf %143, %146 : vector<2x14xf32>
    %c0_49 = arith.constant 0 : index
    %c42 = arith.constant 42 : index
    %148 = vector.load %arg18[%c0_49, %c42] : memref<8x56xf32, #tpu.memory_space<vmem>>, vector<2x14xf32>
    tpu.vector_store %arg18[%c0_49, %c42], %147 {strides = array<i32>} : memref<8x56xf32, #tpu.memory_space<vmem>>, vector<2x14xf32>,
    %cst_50 = arith.constant 0.000000e+00 : f32
    %149 = vector.broadcast %cst_50 : f32 to vector<2x14xf32>
    %c1_51 = arith.constant 1 : index
    %c0_52 = arith.constant 0 : index
    %150 = memref.load %arg5[%c1_51, %c0_52] : memref<4x4xf32, #tpu.memory_space<smem>>
    %151 = vector.broadcast %150 : f32 to vector<2x14xf32>
    %152 = arith.addf %149, %151 : vector<2x14xf32>
    %c1_53 = arith.constant 1 : index
    %c0_54 = arith.constant 0 : index
    %153 = memref.load %arg4[%c1_53, %c0_54] : memref<4x12xf32, #tpu.memory_space<smem>>
    %154 = vector.broadcast %153 : f32 to vector<2x14xf32>
    %155 = arith.mulf %154, %2 : vector<2x14xf32>
    %156 = arith.addf %152, %155 : vector<2x14xf32>
    %c1_55 = arith.constant 1 : index
    %c1_56 = arith.constant 1 : index
    %157 = memref.load %arg4[%c1_55, %c1_56] : memref<4x12xf32, #tpu.memory_space<smem>>
    %158 = vector.broadcast %157 : f32 to vector<2x14xf32>
    %159 = arith.mulf %158, %3 : vector<2x14xf32>
    %160 = arith.addf %156, %159 : vector<2x14xf32>
    %c1_57 = arith.constant 1 : index
    %c2_58 = arith.constant 2 : index
    %161 = memref.load %arg4[%c1_57, %c2_58] : memref<4x12xf32, #tpu.memory_space<smem>>
    %162 = vector.broadcast %161 : f32 to vector<2x14xf32>
    %163 = arith.mulf %162, %4 : vector<2x14xf32>
    %164 = arith.addf %160, %163 : vector<2x14xf32>
    %165 = vector.shape_cast %164 : vector<2x14xf32> to vector<1x2x14xf32>
    %cst_59 = arith.constant dense<0.000000e+00> : vector<1xf32>
    %166 = vector.multi_reduction <add>, %165, %cst_59 [1, 2] : vector<1x2x14xf32> to vector<1xf32>
    %167 = vector.shape_cast %166 : vector<1xf32> to vector<1x1x1xf32>
    %168 = vector.extract %167[0, 0, 0] : f32 from vector<1x1x1xf32>
    %cst_60 = arith.constant 2.800000e+01 : f32
    %169 = arith.divf %168, %cst_60 : f32
    %170 = vector.broadcast %169 : f32 to vector<2x14xf32>
    %171 = arith.subf %164, %170 : vector<2x14xf32>
    %172 = arith.mulf %171, %171 : vector<2x14xf32>
    %173 = vector.shape_cast %172 : vector<2x14xf32> to vector<1x2x14xf32>
    %cst_61 = arith.constant dense<0.000000e+00> : vector<1xf32>
    %174 = vector.multi_reduction <add>, %173, %cst_61 [1, 2] : vector<1x2x14xf32> to vector<1xf32>
    %175 = vector.shape_cast %174 : vector<1xf32> to vector<1x1x1xf32>
    %176 = vector.extract %175[0, 0, 0] : f32 from vector<1x1x1xf32>
    %cst_62 = arith.constant 2.800000e+01 : f32
    %177 = arith.divf %176, %cst_62 : f32
    %178 = vector.broadcast %169 : f32 to vector<2x14xf32>
    %179 = arith.subf %164, %178 : vector<2x14xf32>
    %cst_63 = arith.constant 9.99999974E-6 : f32
    %180 = arith.addf %177, %cst_63 : f32
    %181 = math.rsqrt %180 : f32
    %182 = vector.broadcast %181 : f32 to vector<2x14xf32>
    %183 = arith.mulf %179, %182 : vector<2x14xf32>
    %c2_64 = arith.constant 2 : index
    %c0_65 = arith.constant 0 : index
    %184 = vector.load %arg18[%c2_64, %c0_65] : memref<8x56xf32, #tpu.memory_space<vmem>>, vector<2x14xf32>
    tpu.vector_store %arg18[%c2_64, %c0_65], %183 {strides = array<i32>} : memref<8x56xf32, #tpu.memory_space<vmem>>, vector<2x14xf32>,
    %cst_66 = arith.constant 0.000000e+00 : f32
    %185 = vector.broadcast %cst_66 : f32 to vector<2x14xf32>
    %c1_67 = arith.constant 1 : index
    %c1_68 = arith.constant 1 : index
    %186 = memref.load %arg5[%c1_67, %c1_68] : memref<4x4xf32, #tpu.memory_space<smem>>
    %187 = vector.broadcast %186 : f32 to vector<2x14xf32>
    %188 = arith.addf %185, %187 : vector<2x14xf32>
    %c1_69 = arith.constant 1 : index
    %c3_70 = arith.constant 3 : index
    %189 = memref.load %arg4[%c1_69, %c3_70] : memref<4x12xf32, #tpu.memory_space<smem>>
    %190 = vector.broadcast %189 : f32 to vector<2x14xf32>
    %191 = arith.mulf %190, %2 : vector<2x14xf32>
    %192 = arith.addf %188, %191 : vector<2x14xf32>
    %c1_71 = arith.constant 1 : index
    %c4_72 = arith.constant 4 : index
    %193 = memref.load %arg4[%c1_71, %c4_72] : memref<4x12xf32, #tpu.memory_space<smem>>
    %194 = vector.broadcast %193 : f32 to vector<2x14xf32>
    %195 = arith.mulf %194, %3 : vector<2x14xf32>
    %196 = arith.addf %192, %195 : vector<2x14xf32>
    %c1_73 = arith.constant 1 : index
    %c5_74 = arith.constant 5 : index
    %197 = memref.load %arg4[%c1_73, %c5_74] : memref<4x12xf32, #tpu.memory_space<smem>>
    %198 = vector.broadcast %197 : f32 to vector<2x14xf32>
    %199 = arith.mulf %198, %4 : vector<2x14xf32>
    %200 = arith.addf %196, %199 : vector<2x14xf32>
    %201 = vector.shape_cast %200 : vector<2x14xf32> to vector<1x2x14xf32>
    %cst_75 = arith.constant dense<0.000000e+00> : vector<1xf32>
    %202 = vector.multi_reduction <add>, %201, %cst_75 [1, 2] : vector<1x2x14xf32> to vector<1xf32>
    %203 = vector.shape_cast %202 : vector<1xf32> to vector<1x1x1xf32>
    %204 = vector.extract %203[0, 0, 0] : f32 from vector<1x1x1xf32>
    %cst_76 = arith.constant 2.800000e+01 : f32
    %205 = arith.divf %204, %cst_76 : f32
    %206 = vector.broadcast %205 : f32 to vector<2x14xf32>
    %207 = arith.subf %200, %206 : vector<2x14xf32>
    %208 = arith.mulf %207, %207 : vector<2x14xf32>
    %209 = vector.shape_cast %208 : vector<2x14xf32> to vector<1x2x14xf32>
    %cst_77 = arith.constant dense<0.000000e+00> : vector<1xf32>
    %210 = vector.multi_reduction <add>, %209, %cst_77 [1, 2] : vector<1x2x14xf32> to vector<1xf32>
    %211 = vector.shape_cast %210 : vector<1xf32> to vector<1x1x1xf32>
    %212 = vector.extract %211[0, 0, 0] : f32 from vector<1x1x1xf32>
    %cst_78 = arith.constant 2.800000e+01 : f32
    %213 = arith.divf %212, %cst_78 : f32
    %214 = vector.broadcast %205 : f32 to vector<2x14xf32>
    %215 = arith.subf %200, %214 : vector<2x14xf32>
    %cst_79 = arith.constant 9.99999974E-6 : f32
    %216 = arith.addf %213, %cst_79 : f32
    %217 = math.rsqrt %216 : f32
    %218 = vector.broadcast %217 : f32 to vector<2x14xf32>
    %219 = arith.mulf %215, %218 : vector<2x14xf32>
    %c2_80 = arith.constant 2 : index
    %c14_81 = arith.constant 14 : index
    %220 = vector.load %arg18[%c2_80, %c14_81] : memref<8x56xf32, #tpu.memory_space<vmem>>, vector<2x14xf32>
    tpu.vector_store %arg18[%c2_80, %c14_81], %219 {strides = array<i32>} : memref<8x56xf32, #tpu.memory_space<vmem>>, vector<2x14xf32>,
    %cst_82 = arith.constant 0.000000e+00 : f32
    %221 = vector.broadcast %cst_82 : f32 to vector<2x14xf32>
    %c1_83 = arith.constant 1 : index
    %c2_84 = arith.constant 2 : index
    %222 = memref.load %arg5[%c1_83, %c2_84] : memref<4x4xf32, #tpu.memory_space<smem>>
    %223 = vector.broadcast %222 : f32 to vector<2x14xf32>
    %224 = arith.addf %221, %223 : vector<2x14xf32>
    %c1_85 = arith.constant 1 : index
    %c6_86 = arith.constant 6 : index
    %225 = memref.load %arg4[%c1_85, %c6_86] : memref<4x12xf32, #tpu.memory_space<smem>>
    %226 = vector.broadcast %225 : f32 to vector<2x14xf32>
    %227 = arith.mulf %226, %2 : vector<2x14xf32>
    %228 = arith.addf %224, %227 : vector<2x14xf32>
    %c1_87 = arith.constant 1 : index
    %c7_88 = arith.constant 7 : index
    %229 = memref.load %arg4[%c1_87, %c7_88] : memref<4x12xf32, #tpu.memory_space<smem>>
    %230 = vector.broadcast %229 : f32 to vector<2x14xf32>
    %231 = arith.mulf %230, %3 : vector<2x14xf32>
    %232 = arith.addf %228, %231 : vector<2x14xf32>
    %c1_89 = arith.constant 1 : index
    %c8_90 = arith.constant 8 : index
    %233 = memref.load %arg4[%c1_89, %c8_90] : memref<4x12xf32, #tpu.memory_space<smem>>
    %234 = vector.broadcast %233 : f32 to vector<2x14xf32>
    %235 = arith.mulf %234, %4 : vector<2x14xf32>
    %236 = arith.addf %232, %235 : vector<2x14xf32>
    %237 = vector.shape_cast %236 : vector<2x14xf32> to vector<1x2x14xf32>
    %cst_91 = arith.constant dense<0.000000e+00> : vector<1xf32>
    %238 = vector.multi_reduction <add>, %237, %cst_91 [1, 2] : vector<1x2x14xf32> to vector<1xf32>
    %239 = vector.shape_cast %238 : vector<1xf32> to vector<1x1x1xf32>
    %240 = vector.extract %239[0, 0, 0] : f32 from vector<1x1x1xf32>
    %cst_92 = arith.constant 2.800000e+01 : f32
    %241 = arith.divf %240, %cst_92 : f32
    %242 = vector.broadcast %241 : f32 to vector<2x14xf32>
    %243 = arith.subf %236, %242 : vector<2x14xf32>
    %244 = arith.mulf %243, %243 : vector<2x14xf32>
    %245 = vector.shape_cast %244 : vector<2x14xf32> to vector<1x2x14xf32>
    %cst_93 = arith.constant dense<0.000000e+00> : vector<1xf32>
    %246 = vector.multi_reduction <add>, %245, %cst_93 [1, 2] : vector<1x2x14xf32> to vector<1xf32>
    %247 = vector.shape_cast %246 : vector<1xf32> to vector<1x1x1xf32>
    %248 = vector.extract %247[0, 0, 0] : f32 from vector<1x1x1xf32>
    %cst_94 = arith.constant 2.800000e+01 : f32
    %249 = arith.divf %248, %cst_94 : f32
    %250 = vector.broadcast %241 : f32 to vector<2x14xf32>
    %251 = arith.subf %236, %250 : vector<2x14xf32>
    %cst_95 = arith.constant 9.99999974E-6 : f32
    %252 = arith.addf %249, %cst_95 : f32
    %253 = math.rsqrt %252 : f32
    %254 = vector.broadcast %253 : f32 to vector<2x14xf32>
    %255 = arith.mulf %251, %254 : vector<2x14xf32>
    %c2_96 = arith.constant 2 : index
    %c28_97 = arith.constant 28 : index
    %256 = vector.load %arg18[%c2_96, %c28_97] : memref<8x56xf32, #tpu.memory_space<vmem>>, vector<2x14xf32>
    tpu.vector_store %arg18[%c2_96, %c28_97], %255 {strides = array<i32>} : memref<8x56xf32, #tpu.memory_space<vmem>>, vector<2x14xf32>,
    %cst_98 = arith.constant 0.000000e+00 : f32
    %257 = vector.broadcast %cst_98 : f32 to vector<2x14xf32>
    %c1_99 = arith.constant 1 : index
    %c3_100 = arith.constant 3 : index
    %258 = memref.load %arg5[%c1_99, %c3_100] : memref<4x4xf32, #tpu.memory_space<smem>>
    %259 = vector.broadcast %258 : f32 to vector<2x14xf32>
    %260 = arith.addf %257, %259 : vector<2x14xf32>
    %c1_101 = arith.constant 1 : index
    %c9_102 = arith.constant 9 : index
    %261 = memref.load %arg4[%c1_101, %c9_102] : memref<4x12xf32, #tpu.memory_space<smem>>
    %262 = vector.broadcast %261 : f32 to vector<2x14xf32>
    %263 = arith.mulf %262, %2 : vector<2x14xf32>
    %264 = arith.addf %260, %263 : vector<2x14xf32>
    %c1_103 = arith.constant 1 : index
    %c10_104 = arith.constant 10 : index
    %265 = memref.load %arg4[%c1_103, %c10_104] : memref<4x12xf32, #tpu.memory_space<smem>>
    %266 = vector.broadcast %265 : f32 to vector<2x14xf32>
    %267 = arith.mulf %266, %3 : vector<2x14xf32>
    %268 = arith.addf %264, %267 : vector<2x14xf32>
    %c1_105 = arith.constant 1 : index
    %c11_106 = arith.constant 11 : index
    %269 = memref.load %arg4[%c1_105, %c11_106] : memref<4x12xf32, #tpu.memory_space<smem>>
    %270 = vector.broadcast %269 : f32 to vector<2x14xf32>
    %271 = arith.mulf %270, %4 : vector<2x14xf32>
    %272 = arith.addf %268, %271 : vector<2x14xf32>
    %273 = vector.shape_cast %272 : vector<2x14xf32> to vector<1x2x14xf32>
    %cst_107 = arith.constant dense<0.000000e+00> : vector<1xf32>
    %274 = vector.multi_reduction <add>, %273, %cst_107 [1, 2] : vector<1x2x14xf32> to vector<1xf32>
    %275 = vector.shape_cast %274 : vector<1xf32> to vector<1x1x1xf32>
    %276 = vector.extract %275[0, 0, 0] : f32 from vector<1x1x1xf32>
    %cst_108 = arith.constant 2.800000e+01 : f32
    %277 = arith.divf %276, %cst_108 : f32
    %278 = vector.broadcast %277 : f32 to vector<2x14xf32>
    %279 = arith.subf %272, %278 : vector<2x14xf32>
    %280 = arith.mulf %279, %279 : vector<2x14xf32>
    %281 = vector.shape_cast %280 : vector<2x14xf32> to vector<1x2x14xf32>
    %cst_109 = arith.constant dense<0.000000e+00> : vector<1xf32>
    %282 = vector.multi_reduction <add>, %281, %cst_109 [1, 2] : vector<1x2x14xf32> to vector<1xf32>
    %283 = vector.shape_cast %282 : vector<1xf32> to vector<1x1x1xf32>
    %284 = vector.extract %283[0, 0, 0] : f32 from vector<1x1x1xf32>
    %cst_110 = arith.constant 2.800000e+01 : f32
    %285 = arith.divf %284, %cst_110 : f32
    %286 = vector.broadcast %277 : f32 to vector<2x14xf32>
    %287 = arith.subf %272, %286 : vector<2x14xf32>
    %cst_111 = arith.constant 9.99999974E-6 : f32
    %288 = arith.addf %285, %cst_111 : f32
    %289 = math.rsqrt %288 : f32
    %290 = vector.broadcast %289 : f32 to vector<2x14xf32>
    %291 = arith.mulf %287, %290 : vector<2x14xf32>
    %c2_112 = arith.constant 2 : index
    %c42_113 = arith.constant 42 : index
    %292 = vector.load %arg18[%c2_112, %c42_113] : memref<8x56xf32, #tpu.memory_space<vmem>>, vector<2x14xf32>
    tpu.vector_store %arg18[%c2_112, %c42_113], %291 {strides = array<i32>} : memref<8x56xf32, #tpu.memory_space<vmem>>, vector<2x14xf32>,
    %293 = vector.extract_strided_slice %0 {offsets = [2, 0], sizes = [2, 16], strides = [1, 1]} : vector<4x16xf32> to vector<2x16xf32>
    %294 = vector.extract_strided_slice %293 {offsets = [0, 0], sizes = [2, 14], strides = [1, 1]} : vector<2x16xf32> to vector<2x14xf32>
    %295 = vector.extract_strided_slice %293 {offsets = [0, 1], sizes = [2, 14], strides = [1, 1]} : vector<2x16xf32> to vector<2x14xf32>
    %296 = vector.extract_strided_slice %293 {offsets = [0, 2], sizes = [2, 14], strides = [1, 1]} : vector<2x16xf32> to vector<2x14xf32>
    %cst_114 = arith.constant 0.000000e+00 : f32
    %297 = vector.broadcast %cst_114 : f32 to vector<2x14xf32>
    %c2_115 = arith.constant 2 : index
    %c0_116 = arith.constant 0 : index
    %298 = memref.load %arg5[%c2_115, %c0_116] : memref<4x4xf32, #tpu.memory_space<smem>>
    %299 = vector.broadcast %298 : f32 to vector<2x14xf32>
    %300 = arith.addf %297, %299 : vector<2x14xf32>
    %c2_117 = arith.constant 2 : index
    %c0_118 = arith.constant 0 : index
    %301 = memref.load %arg4[%c2_117, %c0_118] : memref<4x12xf32, #tpu.memory_space<smem>>
    %302 = vector.broadcast %301 : f32 to vector<2x14xf32>
    %303 = arith.mulf %302, %294 : vector<2x14xf32>
    %304 = arith.addf %300, %303 : vector<2x14xf32>
    %c2_119 = arith.constant 2 : index
    %c1_120 = arith.constant 1 : index
    %305 = memref.load %arg4[%c2_119, %c1_120] : memref<4x12xf32, #tpu.memory_space<smem>>
    %306 = vector.broadcast %305 : f32 to vector<2x14xf32>
    %307 = arith.mulf %306, %295 : vector<2x14xf32>
    %308 = arith.addf %304, %307 : vector<2x14xf32>
    %c2_121 = arith.constant 2 : index
    %c2_122 = arith.constant 2 : index
    %309 = memref.load %arg4[%c2_121, %c2_122] : memref<4x12xf32, #tpu.memory_space<smem>>
    %310 = vector.broadcast %309 : f32 to vector<2x14xf32>
    %311 = arith.mulf %310, %296 : vector<2x14xf32>
    %312 = arith.addf %308, %311 : vector<2x14xf32>
    %313 = vector.shape_cast %312 : vector<2x14xf32> to vector<1x2x14xf32>
    %cst_123 = arith.constant dense<0.000000e+00> : vector<1xf32>
    %314 = vector.multi_reduction <add>, %313, %cst_123 [1, 2] : vector<1x2x14xf32> to vector<1xf32>
    %315 = vector.shape_cast %314 : vector<1xf32> to vector<1x1x1xf32>
    %316 = vector.extract %315[0, 0, 0] : f32 from vector<1x1x1xf32>
    %cst_124 = arith.constant 2.800000e+01 : f32
    %317 = arith.divf %316, %cst_124 : f32
    %318 = vector.broadcast %317 : f32 to vector<2x14xf32>
    %319 = arith.subf %312, %318 : vector<2x14xf32>
    %320 = arith.mulf %319, %319 : vector<2x14xf32>
    %321 = vector.shape_cast %320 : vector<2x14xf32> to vector<1x2x14xf32>
    %cst_125 = arith.constant dense<0.000000e+00> : vector<1xf32>
    %322 = vector.multi_reduction <add>, %321, %cst_125 [1, 2] : vector<1x2x14xf32> to vector<1xf32>
    %323 = vector.shape_cast %322 : vector<1xf32> to vector<1x1x1xf32>
    %324 = vector.extract %323[0, 0, 0] : f32 from vector<1x1x1xf32>
    %cst_126 = arith.constant 2.800000e+01 : f32
    %325 = arith.divf %324, %cst_126 : f32
    %326 = vector.broadcast %317 : f32 to vector<2x14xf32>
    %327 = arith.subf %312, %326 : vector<2x14xf32>
    %cst_127 = arith.constant 9.99999974E-6 : f32
    %328 = arith.addf %325, %cst_127 : f32
    %329 = math.rsqrt %328 : f32
    %330 = vector.broadcast %329 : f32 to vector<2x14xf32>
    %331 = arith.mulf %327, %330 : vector<2x14xf32>
    %c4_128 = arith.constant 4 : index
    %c0_129 = arith.constant 0 : index
    %332 = vector.load %arg18[%c4_128, %c0_129] : memref<8x56xf32, #tpu.memory_space<vmem>>, vector<2x14xf32>
    tpu.vector_store %arg18[%c4_128, %c0_129], %331 {strides = array<i32>} : memref<8x56xf32, #tpu.memory_space<vmem>>, vector<2x14xf32>,
    %cst_130 = arith.constant 0.000000e+00 : f32
    %333 = vector.broadcast %cst_130 : f32 to vector<2x14xf32>
    %c2_131 = arith.constant 2 : index
    %c1_132 = arith.constant 1 : index
    %334 = memref.load %arg5[%c2_131, %c1_132] : memref<4x4xf32, #tpu.memory_space<smem>>
    %335 = vector.broadcast %334 : f32 to vector<2x14xf32>
    %336 = arith.addf %333, %335 : vector<2x14xf32>
    %c2_133 = arith.constant 2 : index
    %c3_134 = arith.constant 3 : index
    %337 = memref.load %arg4[%c2_133, %c3_134] : memref<4x12xf32, #tpu.memory_space<smem>>
    %338 = vector.broadcast %337 : f32 to vector<2x14xf32>
    %339 = arith.mulf %338, %294 : vector<2x14xf32>
    %340 = arith.addf %336, %339 : vector<2x14xf32>
    %c2_135 = arith.constant 2 : index
    %c4_136 = arith.constant 4 : index
    %341 = memref.load %arg4[%c2_135, %c4_136] : memref<4x12xf32, #tpu.memory_space<smem>>
    %342 = vector.broadcast %341 : f32 to vector<2x14xf32>
    %343 = arith.mulf %342, %295 : vector<2x14xf32>
    %344 = arith.addf %340, %343 : vector<2x14xf32>
    %c2_137 = arith.constant 2 : index
    %c5_138 = arith.constant 5 : index
    %345 = memref.load %arg4[%c2_137, %c5_138] : memref<4x12xf32, #tpu.memory_space<smem>>
    %346 = vector.broadcast %345 : f32 to vector<2x14xf32>
    %347 = arith.mulf %346, %296 : vector<2x14xf32>
    %348 = arith.addf %344, %347 : vector<2x14xf32>
    %349 = vector.shape_cast %348 : vector<2x14xf32> to vector<1x2x14xf32>
    %cst_139 = arith.constant dense<0.000000e+00> : vector<1xf32>
    %350 = vector.multi_reduction <add>, %349, %cst_139 [1, 2] : vector<1x2x14xf32> to vector<1xf32>
    %351 = vector.shape_cast %350 : vector<1xf32> to vector<1x1x1xf32>
    %352 = vector.extract %351[0, 0, 0] : f32 from vector<1x1x1xf32>
    %cst_140 = arith.constant 2.800000e+01 : f32
    %353 = arith.divf %352, %cst_140 : f32
    %354 = vector.broadcast %353 : f32 to vector<2x14xf32>
    %355 = arith.subf %348, %354 : vector<2x14xf32>
    %356 = arith.mulf %355, %355 : vector<2x14xf32>
    %357 = vector.shape_cast %356 : vector<2x14xf32> to vector<1x2x14xf32>
    %cst_141 = arith.constant dense<0.000000e+00> : vector<1xf32>
    %358 = vector.multi_reduction <add>, %357, %cst_141 [1, 2] : vector<1x2x14xf32> to vector<1xf32>
    %359 = vector.shape_cast %358 : vector<1xf32> to vector<1x1x1xf32>
    %360 = vector.extract %359[0, 0, 0] : f32 from vector<1x1x1xf32>
    %cst_142 = arith.constant 2.800000e+01 : f32
    %361 = arith.divf %360, %cst_142 : f32
    %362 = vector.broadcast %353 : f32 to vector<2x14xf32>
    %363 = arith.subf %348, %362 : vector<2x14xf32>
    %cst_143 = arith.constant 9.99999974E-6 : f32
    %364 = arith.addf %361, %cst_143 : f32
    %365 = math.rsqrt %364 : f32
    %366 = vector.broadcast %365 : f32 to vector<2x14xf32>
    %367 = arith.mulf %363, %366 : vector<2x14xf32>
    %c4_144 = arith.constant 4 : index
    %c14_145 = arith.constant 14 : index
    %368 = vector.load %arg18[%c4_144, %c14_145] : memref<8x56xf32, #tpu.memory_space<vmem>>, vector<2x14xf32>
    tpu.vector_store %arg18[%c4_144, %c14_145], %367 {strides = array<i32>} : memref<8x56xf32, #tpu.memory_space<vmem>>, vector<2x14xf32>,
    %cst_146 = arith.constant 0.000000e+00 : f32
    %369 = vector.broadcast %cst_146 : f32 to vector<2x14xf32>
    %c2_147 = arith.constant 2 : index
    %c2_148 = arith.constant 2 : index
    %370 = memref.load %arg5[%c2_147, %c2_148] : memref<4x4xf32, #tpu.memory_space<smem>>
    %371 = vector.broadcast %370 : f32 to vector<2x14xf32>
    %372 = arith.addf %369, %371 : vector<2x14xf32>
    %c2_149 = arith.constant 2 : index
    %c6_150 = arith.constant 6 : index
    %373 = memref.load %arg4[%c2_149, %c6_150] : memref<4x12xf32, #tpu.memory_space<smem>>
    %374 = vector.broadcast %373 : f32 to vector<2x14xf32>
    %375 = arith.mulf %374, %294 : vector<2x14xf32>
    %376 = arith.addf %372, %375 : vector<2x14xf32>
    %c2_151 = arith.constant 2 : index
    %c7_152 = arith.constant 7 : index
    %377 = memref.load %arg4[%c2_151, %c7_152] : memref<4x12xf32, #tpu.memory_space<smem>>
    %378 = vector.broadcast %377 : f32 to vector<2x14xf32>
    %379 = arith.mulf %378, %295 : vector<2x14xf32>
    %380 = arith.addf %376, %379 : vector<2x14xf32>
    %c2_153 = arith.constant 2 : index
    %c8_154 = arith.constant 8 : index
    %381 = memref.load %arg4[%c2_153, %c8_154] : memref<4x12xf32, #tpu.memory_space<smem>>
    %382 = vector.broadcast %381 : f32 to vector<2x14xf32>
    %383 = arith.mulf %382, %296 : vector<2x14xf32>
    %384 = arith.addf %380, %383 : vector<2x14xf32>
    %385 = vector.shape_cast %384 : vector<2x14xf32> to vector<1x2x14xf32>
    %cst_155 = arith.constant dense<0.000000e+00> : vector<1xf32>
    %386 = vector.multi_reduction <add>, %385, %cst_155 [1, 2] : vector<1x2x14xf32> to vector<1xf32>
    %387 = vector.shape_cast %386 : vector<1xf32> to vector<1x1x1xf32>
    %388 = vector.extract %387[0, 0, 0] : f32 from vector<1x1x1xf32>
    %cst_156 = arith.constant 2.800000e+01 : f32
    %389 = arith.divf %388, %cst_156 : f32
    %390 = vector.broadcast %389 : f32 to vector<2x14xf32>
    %391 = arith.subf %384, %390 : vector<2x14xf32>
    %392 = arith.mulf %391, %391 : vector<2x14xf32>
    %393 = vector.shape_cast %392 : vector<2x14xf32> to vector<1x2x14xf32>
    %cst_157 = arith.constant dense<0.000000e+00> : vector<1xf32>
    %394 = vector.multi_reduction <add>, %393, %cst_157 [1, 2] : vector<1x2x14xf32> to vector<1xf32>
    %395 = vector.shape_cast %394 : vector<1xf32> to vector<1x1x1xf32>
    %396 = vector.extract %395[0, 0, 0] : f32 from vector<1x1x1xf32>
    %cst_158 = arith.constant 2.800000e+01 : f32
    %397 = arith.divf %396, %cst_158 : f32
    %398 = vector.broadcast %389 : f32 to vector<2x14xf32>
    %399 = arith.subf %384, %398 : vector<2x14xf32>
    %cst_159 = arith.constant 9.99999974E-6 : f32
    %400 = arith.addf %397, %cst_159 : f32
    %401 = math.rsqrt %400 : f32
    %402 = vector.broadcast %401 : f32 to vector<2x14xf32>
    %403 = arith.mulf %399, %402 : vector<2x14xf32>
    %c4_160 = arith.constant 4 : index
    %c28_161 = arith.constant 28 : index
    %404 = vector.load %arg18[%c4_160, %c28_161] : memref<8x56xf32, #tpu.memory_space<vmem>>, vector<2x14xf32>
    tpu.vector_store %arg18[%c4_160, %c28_161], %403 {strides = array<i32>} : memref<8x56xf32, #tpu.memory_space<vmem>>, vector<2x14xf32>,
    %cst_162 = arith.constant 0.000000e+00 : f32
    %405 = vector.broadcast %cst_162 : f32 to vector<2x14xf32>
    %c2_163 = arith.constant 2 : index
    %c3_164 = arith.constant 3 : index
    %406 = memref.load %arg5[%c2_163, %c3_164] : memref<4x4xf32, #tpu.memory_space<smem>>
    %407 = vector.broadcast %406 : f32 to vector<2x14xf32>
    %408 = arith.addf %405, %407 : vector<2x14xf32>
    %c2_165 = arith.constant 2 : index
    %c9_166 = arith.constant 9 : index
    %409 = memref.load %arg4[%c2_165, %c9_166] : memref<4x12xf32, #tpu.memory_space<smem>>
    %410 = vector.broadcast %409 : f32 to vector<2x14xf32>
    %411 = arith.mulf %410, %294 : vector<2x14xf32>
    %412 = arith.addf %408, %411 : vector<2x14xf32>
    %c2_167 = arith.constant 2 : index
    %c10_168 = arith.constant 10 : index
    %413 = memref.load %arg4[%c2_167, %c10_168] : memref<4x12xf32, #tpu.memory_space<smem>>
    %414 = vector.broadcast %413 : f32 to vector<2x14xf32>
    %415 = arith.mulf %414, %295 : vector<2x14xf32>
    %416 = arith.addf %412, %415 : vector<2x14xf32>
    %c2_169 = arith.constant 2 : index
    %c11_170 = arith.constant 11 : index
    %417 = memref.load %arg4[%c2_169, %c11_170] : memref<4x12xf32, #tpu.memory_space<smem>>
    %418 = vector.broadcast %417 : f32 to vector<2x14xf32>
    %419 = arith.mulf %418, %296 : vector<2x14xf32>
    %420 = arith.addf %416, %419 : vector<2x14xf32>
    %421 = vector.shape_cast %420 : vector<2x14xf32> to vector<1x2x14xf32>
    %cst_171 = arith.constant dense<0.000000e+00> : vector<1xf32>
    %422 = vector.multi_reduction <add>, %421, %cst_171 [1, 2] : vector<1x2x14xf32> to vector<1xf32>
    %423 = vector.shape_cast %422 : vector<1xf32> to vector<1x1x1xf32>
    %424 = vector.extract %423[0, 0, 0] : f32 from vector<1x1x1xf32>
    %cst_172 = arith.constant 2.800000e+01 : f32
    %425 = arith.divf %424, %cst_172 : f32
    %426 = vector.broadcast %425 : f32 to vector<2x14xf32>
    %427 = arith.subf %420, %426 : vector<2x14xf32>
    %428 = arith.mulf %427, %427 : vector<2x14xf32>
    %429 = vector.shape_cast %428 : vector<2x14xf32> to vector<1x2x14xf32>
    %cst_173 = arith.constant dense<0.000000e+00> : vector<1xf32>
    %430 = vector.multi_reduction <add>, %429, %cst_173 [1, 2] : vector<1x2x14xf32> to vector<1xf32>
    %431 = vector.shape_cast %430 : vector<1xf32> to vector<1x1x1xf32>
    %432 = vector.extract %431[0, 0, 0] : f32 from vector<1x1x1xf32>
    %cst_174 = arith.constant 2.800000e+01 : f32
    %433 = arith.divf %432, %cst_174 : f32
    %434 = vector.broadcast %425 : f32 to vector<2x14xf32>
    %435 = arith.subf %420, %434 : vector<2x14xf32>
    %cst_175 = arith.constant 9.99999974E-6 : f32
    %436 = arith.addf %433, %cst_175 : f32
    %437 = math.rsqrt %436 : f32
    %438 = vector.broadcast %437 : f32 to vector<2x14xf32>
    %439 = arith.mulf %435, %438 : vector<2x14xf32>
    %c4_176 = arith.constant 4 : index
    %c42_177 = arith.constant 42 : index
    %440 = vector.load %arg18[%c4_176, %c42_177] : memref<8x56xf32, #tpu.memory_space<vmem>>, vector<2x14xf32>
    tpu.vector_store %arg18[%c4_176, %c42_177], %439 {strides = array<i32>} : memref<8x56xf32, #tpu.memory_space<vmem>>, vector<2x14xf32>,
    %cst_178 = arith.constant 0.000000e+00 : f32
    %441 = vector.broadcast %cst_178 : f32 to vector<2x14xf32>
    %c3_179 = arith.constant 3 : index
    %c0_180 = arith.constant 0 : index
    %442 = memref.load %arg5[%c3_179, %c0_180] : memref<4x4xf32, #tpu.memory_space<smem>>
    %443 = vector.broadcast %442 : f32 to vector<2x14xf32>
    %444 = arith.addf %441, %443 : vector<2x14xf32>
    %c3_181 = arith.constant 3 : index
    %c0_182 = arith.constant 0 : index
    %445 = memref.load %arg4[%c3_181, %c0_182] : memref<4x12xf32, #tpu.memory_space<smem>>
    %446 = vector.broadcast %445 : f32 to vector<2x14xf32>
    %447 = arith.mulf %446, %294 : vector<2x14xf32>
    %448 = arith.addf %444, %447 : vector<2x14xf32>
    %c3_183 = arith.constant 3 : index
    %c1_184 = arith.constant 1 : index
    %449 = memref.load %arg4[%c3_183, %c1_184] : memref<4x12xf32, #tpu.memory_space<smem>>
    %450 = vector.broadcast %449 : f32 to vector<2x14xf32>
    %451 = arith.mulf %450, %295 : vector<2x14xf32>
    %452 = arith.addf %448, %451 : vector<2x14xf32>
    %c3_185 = arith.constant 3 : index
    %c2_186 = arith.constant 2 : index
    %453 = memref.load %arg4[%c3_185, %c2_186] : memref<4x12xf32, #tpu.memory_space<smem>>
    %454 = vector.broadcast %453 : f32 to vector<2x14xf32>
    %455 = arith.mulf %454, %296 : vector<2x14xf32>
    %456 = arith.addf %452, %455 : vector<2x14xf32>
    %457 = vector.shape_cast %456 : vector<2x14xf32> to vector<1x2x14xf32>
    %cst_187 = arith.constant dense<0.000000e+00> : vector<1xf32>
    %458 = vector.multi_reduction <add>, %457, %cst_187 [1, 2] : vector<1x2x14xf32> to vector<1xf32>
    %459 = vector.shape_cast %458 : vector<1xf32> to vector<1x1x1xf32>
    %460 = vector.extract %459[0, 0, 0] : f32 from vector<1x1x1xf32>
    %cst_188 = arith.constant 2.800000e+01 : f32
    %461 = arith.divf %460, %cst_188 : f32
    %462 = vector.broadcast %461 : f32 to vector<2x14xf32>
    %463 = arith.subf %456, %462 : vector<2x14xf32>
    %464 = arith.mulf %463, %463 : vector<2x14xf32>
    %465 = vector.shape_cast %464 : vector<2x14xf32> to vector<1x2x14xf32>
    %cst_189 = arith.constant dense<0.000000e+00> : vector<1xf32>
    %466 = vector.multi_reduction <add>, %465, %cst_189 [1, 2] : vector<1x2x14xf32> to vector<1xf32>
    %467 = vector.shape_cast %466 : vector<1xf32> to vector<1x1x1xf32>
    %468 = vector.extract %467[0, 0, 0] : f32 from vector<1x1x1xf32>
    %cst_190 = arith.constant 2.800000e+01 : f32
    %469 = arith.divf %468, %cst_190 : f32
    %470 = vector.broadcast %461 : f32 to vector<2x14xf32>
    %471 = arith.subf %456, %470 : vector<2x14xf32>
    %cst_191 = arith.constant 9.99999974E-6 : f32
    %472 = arith.addf %469, %cst_191 : f32
    %473 = math.rsqrt %472 : f32
    %474 = vector.broadcast %473 : f32 to vector<2x14xf32>
    %475 = arith.mulf %471, %474 : vector<2x14xf32>
    %c6_192 = arith.constant 6 : index
    %c0_193 = arith.constant 0 : index
    %476 = vector.load %arg18[%c6_192, %c0_193] : memref<8x56xf32, #tpu.memory_space<vmem>>, vector<2x14xf32>
    tpu.vector_store %arg18[%c6_192, %c0_193], %475 {strides = array<i32>} : memref<8x56xf32, #tpu.memory_space<vmem>>, vector<2x14xf32>,
    %cst_194 = arith.constant 0.000000e+00 : f32
    %477 = vector.broadcast %cst_194 : f32 to vector<2x14xf32>
    %c3_195 = arith.constant 3 : index
    %c1_196 = arith.constant 1 : index
    %478 = memref.load %arg5[%c3_195, %c1_196] : memref<4x4xf32, #tpu.memory_space<smem>>
    %479 = vector.broadcast %478 : f32 to vector<2x14xf32>
    %480 = arith.addf %477, %479 : vector<2x14xf32>
    %c3_197 = arith.constant 3 : index
    %c3_198 = arith.constant 3 : index
    %481 = memref.load %arg4[%c3_197, %c3_198] : memref<4x12xf32, #tpu.memory_space<smem>>
    %482 = vector.broadcast %481 : f32 to vector<2x14xf32>
    %483 = arith.mulf %482, %294 : vector<2x14xf32>
    %484 = arith.addf %480, %483 : vector<2x14xf32>
    %c3_199 = arith.constant 3 : index
    %c4_200 = arith.constant 4 : index
    %485 = memref.load %arg4[%c3_199, %c4_200] : memref<4x12xf32, #tpu.memory_space<smem>>
    %486 = vector.broadcast %485 : f32 to vector<2x14xf32>
    %487 = arith.mulf %486, %295 : vector<2x14xf32>
    %488 = arith.addf %484, %487 : vector<2x14xf32>
    %c3_201 = arith.constant 3 : index
    %c5_202 = arith.constant 5 : index
    %489 = memref.load %arg4[%c3_201, %c5_202] : memref<4x12xf32, #tpu.memory_space<smem>>
    %490 = vector.broadcast %489 : f32 to vector<2x14xf32>
    %491 = arith.mulf %490, %296 : vector<2x14xf32>
    %492 = arith.addf %488, %491 : vector<2x14xf32>
    %493 = vector.shape_cast %492 : vector<2x14xf32> to vector<1x2x14xf32>
    %cst_203 = arith.constant dense<0.000000e+00> : vector<1xf32>
    %494 = vector.multi_reduction <add>, %493, %cst_203 [1, 2] : vector<1x2x14xf32> to vector<1xf32>
    %495 = vector.shape_cast %494 : vector<1xf32> to vector<1x1x1xf32>
    %496 = vector.extract %495[0, 0, 0] : f32 from vector<1x1x1xf32>
    %cst_204 = arith.constant 2.800000e+01 : f32
    %497 = arith.divf %496, %cst_204 : f32
    %498 = vector.broadcast %497 : f32 to vector<2x14xf32>
    %499 = arith.subf %492, %498 : vector<2x14xf32>
    %500 = arith.mulf %499, %499 : vector<2x14xf32>
    %501 = vector.shape_cast %500 : vector<2x14xf32> to vector<1x2x14xf32>
    %cst_205 = arith.constant dense<0.000000e+00> : vector<1xf32>
    %502 = vector.multi_reduction <add>, %501, %cst_205 [1, 2] : vector<1x2x14xf32> to vector<1xf32>
    %503 = vector.shape_cast %502 : vector<1xf32> to vector<1x1x1xf32>
    %504 = vector.extract %503[0, 0, 0] : f32 from vector<1x1x1xf32>
    %cst_206 = arith.constant 2.800000e+01 : f32
    %505 = arith.divf %504, %cst_206 : f32
    %506 = vector.broadcast %497 : f32 to vector<2x14xf32>
    %507 = arith.subf %492, %506 : vector<2x14xf32>
    %cst_207 = arith.constant 9.99999974E-6 : f32
    %508 = arith.addf %505, %cst_207 : f32
    %509 = math.rsqrt %508 : f32
    %510 = vector.broadcast %509 : f32 to vector<2x14xf32>
    %511 = arith.mulf %507, %510 : vector<2x14xf32>
    %c6_208 = arith.constant 6 : index
    %c14_209 = arith.constant 14 : index
    %512 = vector.load %arg18[%c6_208, %c14_209] : memref<8x56xf32, #tpu.memory_space<vmem>>, vector<2x14xf32>
    tpu.vector_store %arg18[%c6_208, %c14_209], %511 {strides = array<i32>} : memref<8x56xf32, #tpu.memory_space<vmem>>, vector<2x14xf32>,
    %cst_210 = arith.constant 0.000000e+00 : f32
    %513 = vector.broadcast %cst_210 : f32 to vector<2x14xf32>
    %c3_211 = arith.constant 3 : index
    %c2_212 = arith.constant 2 : index
    %514 = memref.load %arg5[%c3_211, %c2_212] : memref<4x4xf32, #tpu.memory_space<smem>>
    %515 = vector.broadcast %514 : f32 to vector<2x14xf32>
    %516 = arith.addf %513, %515 : vector<2x14xf32>
    %c3_213 = arith.constant 3 : index
    %c6_214 = arith.constant 6 : index
    %517 = memref.load %arg4[%c3_213, %c6_214] : memref<4x12xf32, #tpu.memory_space<smem>>
    %518 = vector.broadcast %517 : f32 to vector<2x14xf32>
    %519 = arith.mulf %518, %294 : vector<2x14xf32>
    %520 = arith.addf %516, %519 : vector<2x14xf32>
    %c3_215 = arith.constant 3 : index
    %c7_216 = arith.constant 7 : index
    %521 = memref.load %arg4[%c3_215, %c7_216] : memref<4x12xf32, #tpu.memory_space<smem>>
    %522 = vector.broadcast %521 : f32 to vector<2x14xf32>
    %523 = arith.mulf %522, %295 : vector<2x14xf32>
    %524 = arith.addf %520, %523 : vector<2x14xf32>
    %c3_217 = arith.constant 3 : index
    %c8_218 = arith.constant 8 : index
    %525 = memref.load %arg4[%c3_217, %c8_218] : memref<4x12xf32, #tpu.memory_space<smem>>
    %526 = vector.broadcast %525 : f32 to vector<2x14xf32>
    %527 = arith.mulf %526, %296 : vector<2x14xf32>
    %528 = arith.addf %524, %527 : vector<2x14xf32>
    %529 = vector.shape_cast %528 : vector<2x14xf32> to vector<1x2x14xf32>
    %cst_219 = arith.constant dense<0.000000e+00> : vector<1xf32>
    %530 = vector.multi_reduction <add>, %529, %cst_219 [1, 2] : vector<1x2x14xf32> to vector<1xf32>
    %531 = vector.shape_cast %530 : vector<1xf32> to vector<1x1x1xf32>
    %532 = vector.extract %531[0, 0, 0] : f32 from vector<1x1x1xf32>
    %cst_220 = arith.constant 2.800000e+01 : f32
    %533 = arith.divf %532, %cst_220 : f32
    %534 = vector.broadcast %533 : f32 to vector<2x14xf32>
    %535 = arith.subf %528, %534 : vector<2x14xf32>
    %536 = arith.mulf %535, %535 : vector<2x14xf32>
    %537 = vector.shape_cast %536 : vector<2x14xf32> to vector<1x2x14xf32>
    %cst_221 = arith.constant dense<0.000000e+00> : vector<1xf32>
    %538 = vector.multi_reduction <add>, %537, %cst_221 [1, 2] : vector<1x2x14xf32> to vector<1xf32>
    %539 = vector.shape_cast %538 : vector<1xf32> to vector<1x1x1xf32>
    %540 = vector.extract %539[0, 0, 0] : f32 from vector<1x1x1xf32>
    %cst_222 = arith.constant 2.800000e+01 : f32
    %541 = arith.divf %540, %cst_222 : f32
    %542 = vector.broadcast %533 : f32 to vector<2x14xf32>
    %543 = arith.subf %528, %542 : vector<2x14xf32>
    %cst_223 = arith.constant 9.99999974E-6 : f32
    %544 = arith.addf %541, %cst_223 : f32
    %545 = math.rsqrt %544 : f32
    %546 = vector.broadcast %545 : f32 to vector<2x14xf32>
    %547 = arith.mulf %543, %546 : vector<2x14xf32>
    %c6_224 = arith.constant 6 : index
    %c28_225 = arith.constant 28 : index
    %548 = vector.load %arg18[%c6_224, %c28_225] : memref<8x56xf32, #tpu.memory_space<vmem>>, vector<2x14xf32>
    tpu.vector_store %arg18[%c6_224, %c28_225], %547 {strides = array<i32>} : memref<8x56xf32, #tpu.memory_space<vmem>>, vector<2x14xf32>,
    %cst_226 = arith.constant 0.000000e+00 : f32
    %549 = vector.broadcast %cst_226 : f32 to vector<2x14xf32>
    %c3_227 = arith.constant 3 : index
    %c3_228 = arith.constant 3 : index
    %550 = memref.load %arg5[%c3_227, %c3_228] : memref<4x4xf32, #tpu.memory_space<smem>>
    %551 = vector.broadcast %550 : f32 to vector<2x14xf32>
    %552 = arith.addf %549, %551 : vector<2x14xf32>
    %c3_229 = arith.constant 3 : index
    %c9_230 = arith.constant 9 : index
    %553 = memref.load %arg4[%c3_229, %c9_230] : memref<4x12xf32, #tpu.memory_space<smem>>
    %554 = vector.broadcast %553 : f32 to vector<2x14xf32>
    %555 = arith.mulf %554, %294 : vector<2x14xf32>
    %556 = arith.addf %552, %555 : vector<2x14xf32>
    %c3_231 = arith.constant 3 : index
    %c10_232 = arith.constant 10 : index
    %557 = memref.load %arg4[%c3_231, %c10_232] : memref<4x12xf32, #tpu.memory_space<smem>>
    %558 = vector.broadcast %557 : f32 to vector<2x14xf32>
    %559 = arith.mulf %558, %295 : vector<2x14xf32>
    %560 = arith.addf %556, %559 : vector<2x14xf32>
    %c3_233 = arith.constant 3 : index
    %c11_234 = arith.constant 11 : index
    %561 = memref.load %arg4[%c3_233, %c11_234] : memref<4x12xf32, #tpu.memory_space<smem>>
    %562 = vector.broadcast %561 : f32 to vector<2x14xf32>
    %563 = arith.mulf %562, %296 : vector<2x14xf32>
    %564 = arith.addf %560, %563 : vector<2x14xf32>
    %565 = vector.shape_cast %564 : vector<2x14xf32> to vector<1x2x14xf32>
    %cst_235 = arith.constant dense<0.000000e+00> : vector<1xf32>
    %566 = vector.multi_reduction <add>, %565, %cst_235 [1, 2] : vector<1x2x14xf32> to vector<1xf32>
    %567 = vector.shape_cast %566 : vector<1xf32> to vector<1x1x1xf32>
    %568 = vector.extract %567[0, 0, 0] : f32 from vector<1x1x1xf32>
    %cst_236 = arith.constant 2.800000e+01 : f32
    %569 = arith.divf %568, %cst_236 : f32
    %570 = vector.broadcast %569 : f32 to vector<2x14xf32>
    %571 = arith.subf %564, %570 : vector<2x14xf32>
    %572 = arith.mulf %571, %571 : vector<2x14xf32>
    %573 = vector.shape_cast %572 : vector<2x14xf32> to vector<1x2x14xf32>
    %cst_237 = arith.constant dense<0.000000e+00> : vector<1xf32>
    %574 = vector.multi_reduction <add>, %573, %cst_237 [1, 2] : vector<1x2x14xf32> to vector<1xf32>
    %575 = vector.shape_cast %574 : vector<1xf32> to vector<1x1x1xf32>
    %576 = vector.extract %575[0, 0, 0] : f32 from vector<1x1x1xf32>
    %cst_238 = arith.constant 2.800000e+01 : f32
    %577 = arith.divf %576, %cst_238 : f32
    %578 = vector.broadcast %569 : f32 to vector<2x14xf32>
    %579 = arith.subf %564, %578 : vector<2x14xf32>
    %cst_239 = arith.constant 9.99999974E-6 : f32
    %580 = arith.addf %577, %cst_239 : f32
    %581 = math.rsqrt %580 : f32
    %582 = vector.broadcast %581 : f32 to vector<2x14xf32>
    %583 = arith.mulf %579, %582 : vector<2x14xf32>
    %c6_240 = arith.constant 6 : index
    %c42_241 = arith.constant 42 : index
    %584 = vector.load %arg18[%c6_240, %c42_241] : memref<8x56xf32, #tpu.memory_space<vmem>>, vector<2x14xf32>
    tpu.vector_store %arg18[%c6_240, %c42_241], %583 {strides = array<i32>} : memref<8x56xf32, #tpu.memory_space<vmem>>, vector<2x14xf32>,
    %c0_242 = arith.constant 0 : index
    %c0_243 = arith.constant 0 : index
    %585 = vector.load %arg18[%c0_242, %c0_243] : memref<8x56xf32, #tpu.memory_space<vmem>>, vector<2x56xf32>
    %c0_244 = arith.constant 0 : index
    %c0_245 = arith.constant 0 : index
    %586 = vector.load %arg6[%c0_244, %c0_245] : memref<224x32xf32, #tpu.memory_space<vmem>>, vector<56x32xf32>
    %cst_246 = arith.constant dense<0.000000e+00> : vector<2x32xf32>
    %587 = tpu.matmul %585, %586, %cst_246 {dimension_numbers = #tpu.dot_dimension_numbers<[1], [0], [0], [1], [0, 0, 1, 1], [], []>} : vector<2x56xf32>, vector<56x32xf32>, vector<2x32xf32> -> vector<2x32xf32>
    %c0_247 = arith.constant 0 : index
    %c0_248 = arith.constant 0 : index
    %588 = vector.load %arg7[%c0_247, %c0_248] : memref<4x32xf32, #tpu.memory_space<vmem>>, vector<1x32xf32>
    %589 = vector.broadcast %588 : vector<1x32xf32> to vector<2x32xf32>
    %590 = arith.addf %587, %589 : vector<2x32xf32>
    %c2_249 = arith.constant 2 : index
    %c0_250 = arith.constant 0 : index
    %591 = vector.load %arg18[%c2_249, %c0_250] : memref<8x56xf32, #tpu.memory_space<vmem>>, vector<2x56xf32>
    %c56 = arith.constant 56 : index
    %c0_251 = arith.constant 0 : index
    %592 = vector.load %arg6[%c56, %c0_251] : memref<224x32xf32, #tpu.memory_space<vmem>>, vector<56x32xf32>
    %cst_252 = arith.constant dense<0.000000e+00> : vector<2x32xf32>
    %593 = tpu.matmul %591, %592, %cst_252 {dimension_numbers = #tpu.dot_dimension_numbers<[1], [0], [0], [1], [0, 0, 1, 1], [], []>} : vector<2x56xf32>, vector<56x32xf32>, vector<2x32xf32> -> vector<2x32xf32>
    %c1_253 = arith.constant 1 : index
    %c0_254 = arith.constant 0 : index
    %594 = vector.load %arg7[%c1_253, %c0_254] : memref<4x32xf32, #tpu.memory_space<vmem>>, vector<1x32xf32>
    %595 = vector.broadcast %594 : vector<1x32xf32> to vector<2x32xf32>
    %596 = arith.addf %593, %595 : vector<2x32xf32>
    %cst_255 = arith.constant 0.000000e+00 : f32
    %597 = vector.broadcast %cst_255 : f32 to vector<2x32xf32>
    %598 = arith.maximumf %596, %597 : vector<2x32xf32>
    %599 = math.absf %596 : vector<2x32xf32>
    %cst_256 = arith.constant 0.000000e+00 : f32
    %600 = vector.broadcast %cst_256 : f32 to vector<2x32xf32>
    %601 = arith.subf %600, %599 : vector<2x32xf32>
    %602 = math.exp %601 : vector<2x32xf32>
    %cst_257 = arith.constant 1.000000e+00 : f32
    %603 = vector.broadcast %cst_257 : f32 to vector<2x32xf32>
    %604 = arith.addf %603, %602 : vector<2x32xf32>
    %605 = math.log %604 : vector<2x32xf32>
    %606 = arith.addf %598, %605 : vector<2x32xf32>
    %c0_258 = arith.constant 0 : index
    %c0_259 = arith.constant 0 : index
    %607 = vector.load %arg2[%c0_258, %c0_259] : memref<4x32xf32, #tpu.memory_space<vmem>>, vector<2x32xf32>
    %cst_260 = arith.constant 5.000000e-01 : f32
    %608 = vector.broadcast %cst_260 : f32 to vector<2x32xf32>
    %609 = arith.mulf %608, %606 : vector<2x32xf32>
    %610 = math.exp %609 : vector<2x32xf32>
    %611 = arith.mulf %607, %610 : vector<2x32xf32>
    %612 = arith.addf %590, %611 : vector<2x32xf32>
    %c0_261 = arith.constant 0 : index
    %c0_262 = arith.constant 0 : index
    %613 = vector.load %arg16[%c0_261, %c0_262] : memref<4x32xf32, #tpu.memory_space<vmem>>, vector<2x32xf32>
    tpu.vector_store %arg16[%c0_261, %c0_262], %612 {strides = array<i32>} : memref<4x32xf32, #tpu.memory_space<vmem>>, vector<2x32xf32>,
    %c4_263 = arith.constant 4 : index
    %c0_264 = arith.constant 0 : index
    %614 = vector.load %arg18[%c4_263, %c0_264] : memref<8x56xf32, #tpu.memory_space<vmem>>, vector<2x56xf32>
    %c112 = arith.constant 112 : index
    %c0_265 = arith.constant 0 : index
    %615 = vector.load %arg6[%c112, %c0_265] : memref<224x32xf32, #tpu.memory_space<vmem>>, vector<56x32xf32>
    %cst_266 = arith.constant dense<0.000000e+00> : vector<2x32xf32>
    %616 = tpu.matmul %614, %615, %cst_266 {dimension_numbers = #tpu.dot_dimension_numbers<[1], [0], [0], [1], [0, 0, 1, 1], [], []>} : vector<2x56xf32>, vector<56x32xf32>, vector<2x32xf32> -> vector<2x32xf32>
    %c2_267 = arith.constant 2 : index
    %c0_268 = arith.constant 0 : index
    %617 = vector.load %arg7[%c2_267, %c0_268] : memref<4x32xf32, #tpu.memory_space<vmem>>, vector<1x32xf32>
    %618 = vector.broadcast %617 : vector<1x32xf32> to vector<2x32xf32>
    %619 = arith.addf %616, %618 : vector<2x32xf32>
    %c6_269 = arith.constant 6 : index
    %c0_270 = arith.constant 0 : index
    %620 = vector.load %arg18[%c6_269, %c0_270] : memref<8x56xf32, #tpu.memory_space<vmem>>, vector<2x56xf32>
    %c168 = arith.constant 168 : index
    %c0_271 = arith.constant 0 : index
    %621 = vector.load %arg6[%c168, %c0_271] : memref<224x32xf32, #tpu.memory_space<vmem>>, vector<56x32xf32>
    %cst_272 = arith.constant dense<0.000000e+00> : vector<2x32xf32>
    %622 = tpu.matmul %620, %621, %cst_272 {dimension_numbers = #tpu.dot_dimension_numbers<[1], [0], [0], [1], [0, 0, 1, 1], [], []>} : vector<2x56xf32>, vector<56x32xf32>, vector<2x32xf32> -> vector<2x32xf32>
    %c3_273 = arith.constant 3 : index
    %c0_274 = arith.constant 0 : index
    %623 = vector.load %arg7[%c3_273, %c0_274] : memref<4x32xf32, #tpu.memory_space<vmem>>, vector<1x32xf32>
    %624 = vector.broadcast %623 : vector<1x32xf32> to vector<2x32xf32>
    %625 = arith.addf %622, %624 : vector<2x32xf32>
    %cst_275 = arith.constant 0.000000e+00 : f32
    %626 = vector.broadcast %cst_275 : f32 to vector<2x32xf32>
    %627 = arith.maximumf %625, %626 : vector<2x32xf32>
    %628 = math.absf %625 : vector<2x32xf32>
    %cst_276 = arith.constant 0.000000e+00 : f32
    %629 = vector.broadcast %cst_276 : f32 to vector<2x32xf32>
    %630 = arith.subf %629, %628 : vector<2x32xf32>
    %631 = math.exp %630 : vector<2x32xf32>
    %cst_277 = arith.constant 1.000000e+00 : f32
    %632 = vector.broadcast %cst_277 : f32 to vector<2x32xf32>
    %633 = arith.addf %632, %631 : vector<2x32xf32>
    %634 = math.log %633 : vector<2x32xf32>
    %635 = arith.addf %627, %634 : vector<2x32xf32>
    %c2_278 = arith.constant 2 : index
    %c0_279 = arith.constant 0 : index
    %636 = vector.load %arg2[%c2_278, %c0_279] : memref<4x32xf32, #tpu.memory_space<vmem>>, vector<2x32xf32>
    %cst_280 = arith.constant 5.000000e-01 : f32
    %637 = vector.broadcast %cst_280 : f32 to vector<2x32xf32>
    %638 = arith.mulf %637, %635 : vector<2x32xf32>
    %639 = math.exp %638 : vector<2x32xf32>
    %640 = arith.mulf %636, %639 : vector<2x32xf32>
    %641 = arith.addf %619, %640 : vector<2x32xf32>
    %c2_281 = arith.constant 2 : index
    %c0_282 = arith.constant 0 : index
    %642 = vector.load %arg16[%c2_281, %c0_282] : memref<4x32xf32, #tpu.memory_space<vmem>>, vector<2x32xf32>
    tpu.vector_store %arg16[%c2_281, %c0_282], %641 {strides = array<i32>} : memref<4x32xf32, #tpu.memory_space<vmem>>, vector<2x32xf32>,
    %c0_283 = arith.constant 0 : index
    %c0_284 = arith.constant 0 : index
    %643 = vector.load %arg16[%c0_283, %c0_284] : memref<4x32xf32, #tpu.memory_space<vmem>>, vector<4x32xf32>
    %c0_285 = arith.constant 0 : index
    %c0_286 = arith.constant 0 : index
    %644 = vector.load %arg8[%c0_285, %c0_286] : memref<64x32xf32, #tpu.memory_space<vmem>>, vector<32x32xf32>
    %cst_287 = arith.constant dense<0.000000e+00> : vector<2x32xf32>
    %645 = tpu.matmul %612, %644, %cst_287 {dimension_numbers = #tpu.dot_dimension_numbers<[1], [0], [0], [1], [0, 0, 1, 1], [], []>} : vector<2x32xf32>, vector<32x32xf32>, vector<2x32xf32> -> vector<2x32xf32>
    %c0_288 = arith.constant 0 : index
    %c0_289 = arith.constant 0 : index
    %646 = vector.load %arg9[%c0_288, %c0_289] : memref<2x32xf32, #tpu.memory_space<vmem>>, vector<1x32xf32>
    %647 = vector.broadcast %646 : vector<1x32xf32> to vector<2x32xf32>
    %648 = arith.addf %645, %647 : vector<2x32xf32>
    %c0_290 = arith.constant 0 : index
    %c0_291 = arith.constant 0 : index
    %649 = vector.load %arg1[%c0_290, %c0_291] : memref<4x32xf32, #tpu.memory_space<vmem>>, vector<2x32xf32>
    %650 = arith.subf %648, %649 : vector<2x32xf32>
    %651 = arith.mulf %650, %650 : vector<2x32xf32>
    %652 = vector.shape_cast %651 : vector<2x32xf32> to vector<1x2x32xf32>
    %cst_292 = arith.constant dense<0.000000e+00> : vector<1xf32>
    %653 = vector.multi_reduction <add>, %652, %cst_292 [1, 2] : vector<1x2x32xf32> to vector<1xf32>
    %654 = vector.shape_cast %653 : vector<1xf32> to vector<1x1x1xf32>
    %655 = vector.extract %654[0, 0, 0] : f32 from vector<1x1x1xf32>
    %cst_293 = arith.constant 6.400000e+01 : f32
    %656 = arith.divf %655, %cst_293 : f32
    %657 = arith.subf %612, %590 : vector<2x32xf32>
    %658 = arith.mulf %657, %657 : vector<2x32xf32>
    %cst_294 = arith.constant 0.000000e+00 : f32
    %659 = vector.broadcast %cst_294 : f32 to vector<2x32xf32>
    %660 = arith.subf %659, %606 : vector<2x32xf32>
    %661 = math.exp %660 : vector<2x32xf32>
    %662 = arith.mulf %658, %661 : vector<2x32xf32>
    %663 = arith.addf %606, %662 : vector<2x32xf32>
    %cst_295 = arith.constant -5.000000e-01 : f32
    %664 = vector.broadcast %cst_295 : f32 to vector<2x32xf32>
    %665 = arith.mulf %664, %663 : vector<2x32xf32>
    %cst_296 = arith.constant 5.000000e-01 : f32
    %666 = vector.broadcast %cst_296 : f32 to vector<2x32xf32>
    %667 = arith.mulf %666, %612 : vector<2x32xf32>
    %668 = arith.mulf %667, %612 : vector<2x32xf32>
    %669 = arith.addf %665, %668 : vector<2x32xf32>
    %670 = vector.shape_cast %669 : vector<2x32xf32> to vector<1x2x32xf32>
    %cst_297 = arith.constant dense<0.000000e+00> : vector<1xf32>
    %671 = vector.multi_reduction <add>, %670, %cst_297 [1, 2] : vector<1x2x32xf32> to vector<1xf32>
    %672 = vector.shape_cast %671 : vector<1xf32> to vector<1x1x1xf32>
    %673 = vector.extract %672[0, 0, 0] : f32 from vector<1x1x1xf32>
    %cst_298 = arith.constant 2.000000e+00 : f32
    %674 = arith.divf %673, %cst_298 : f32
    %cst_299 = arith.constant 0.000000e+00 : f32
    %675 = arith.subf %cst_299, %656 : f32
    %676 = arith.subf %675, %674 : f32
    %c32 = arith.constant 32 : index
    %c0_300 = arith.constant 0 : index
    %677 = vector.load %arg8[%c32, %c0_300] : memref<64x32xf32, #tpu.memory_space<vmem>>, vector<32x32xf32>
    %cst_301 = arith.constant dense<0.000000e+00> : vector<2x32xf32>
    %678 = tpu.matmul %641, %677, %cst_301 {dimension_numbers = #tpu.dot_dimension_numbers<[1], [0], [0], [1], [0, 0, 1, 1], [], []>} : vector<2x32xf32>, vector<32x32xf32>, vector<2x32xf32> -> vector<2x32xf32>
    %c1_302 = arith.constant 1 : index
    %c0_303 = arith.constant 0 : index
    %679 = vector.load %arg9[%c1_302, %c0_303] : memref<2x32xf32, #tpu.memory_space<vmem>>, vector<1x32xf32>
    %680 = vector.broadcast %679 : vector<1x32xf32> to vector<2x32xf32>
    %681 = arith.addf %678, %680 : vector<2x32xf32>
    %c2_304 = arith.constant 2 : index
    %c0_305 = arith.constant 0 : index
    %682 = vector.load %arg1[%c2_304, %c0_305] : memref<4x32xf32, #tpu.memory_space<vmem>>, vector<2x32xf32>
    %683 = arith.subf %681, %682 : vector<2x32xf32>
    %684 = arith.mulf %683, %683 : vector<2x32xf32>
    %685 = vector.shape_cast %684 : vector<2x32xf32> to vector<1x2x32xf32>
    %cst_306 = arith.constant dense<0.000000e+00> : vector<1xf32>
    %686 = vector.multi_reduction <add>, %685, %cst_306 [1, 2] : vector<1x2x32xf32> to vector<1xf32>
    %687 = vector.shape_cast %686 : vector<1xf32> to vector<1x1x1xf32>
    %688 = vector.extract %687[0, 0, 0] : f32 from vector<1x1x1xf32>
    %cst_307 = arith.constant 6.400000e+01 : f32
    %689 = arith.divf %688, %cst_307 : f32
    %690 = arith.subf %641, %619 : vector<2x32xf32>
    %691 = arith.mulf %690, %690 : vector<2x32xf32>
    %cst_308 = arith.constant 0.000000e+00 : f32
    %692 = vector.broadcast %cst_308 : f32 to vector<2x32xf32>
    %693 = arith.subf %692, %635 : vector<2x32xf32>
    %694 = math.exp %693 : vector<2x32xf32>
    %695 = arith.mulf %691, %694 : vector<2x32xf32>
    %696 = arith.addf %635, %695 : vector<2x32xf32>
    %cst_309 = arith.constant -5.000000e-01 : f32
    %697 = vector.broadcast %cst_309 : f32 to vector<2x32xf32>
    %698 = arith.mulf %697, %696 : vector<2x32xf32>
    %cst_310 = arith.constant 5.000000e-01 : f32
    %699 = vector.broadcast %cst_310 : f32 to vector<2x32xf32>
    %700 = arith.mulf %699, %641 : vector<2x32xf32>
    %701 = arith.mulf %700, %641 : vector<2x32xf32>
    %702 = arith.addf %698, %701 : vector<2x32xf32>
    %703 = vector.shape_cast %702 : vector<2x32xf32> to vector<1x2x32xf32>
    %cst_311 = arith.constant dense<0.000000e+00> : vector<1xf32>
    %704 = vector.multi_reduction <add>, %703, %cst_311 [1, 2] : vector<1x2x32xf32> to vector<1xf32>
    %705 = vector.shape_cast %704 : vector<1xf32> to vector<1x1x1xf32>
    %706 = vector.extract %705[0, 0, 0] : f32 from vector<1x1x1xf32>
    %cst_312 = arith.constant 2.000000e+00 : f32
    %707 = arith.divf %706, %cst_312 : f32
    %708 = arith.subf %676, %689 : f32
    %709 = arith.subf %708, %707 : f32
    %c0_313 = arith.constant 0 : index
    %c0_314 = arith.constant 0 : index
    %710 = vector.load %arg1[%c0_313, %c0_314] : memref<4x32xf32, #tpu.memory_space<vmem>>, vector<4x32xf32>
    %c0_315 = arith.constant 0 : index
    %c0_316 = arith.constant 0 : index
    %711 = vector.load %arg10[%c0_315, %c0_316] : memref<32x32xf32, #tpu.memory_space<vmem>>, vector<32x32xf32>
    %cst_317 = arith.constant dense<0.000000e+00> : vector<4x32xf32>
    %712 = tpu.matmul %710, %711, %cst_317 {dimension_numbers = #tpu.dot_dimension_numbers<[1], [0], [0], [1], [0, 0, 1, 1], [], []>} : vector<4x32xf32>, vector<32x32xf32>, vector<4x32xf32> -> vector<4x32xf32>
    %c0_318 = arith.constant 0 : index
    %c0_319 = arith.constant 0 : index
    %713 = vector.load %arg11[%c0_318, %c0_319] : memref<1x32xf32, #tpu.memory_space<vmem>>, vector<1x32xf32>
    %714 = vector.broadcast %713 : vector<1x32xf32> to vector<4x32xf32>
    %715 = arith.addf %712, %714 : vector<4x32xf32>
    %c0_320 = arith.constant 0 : index
    %c0_321 = arith.constant 0 : index
    %716 = vector.load %arg3[%c0_320, %c0_321] : memref<4x4xf32, #tpu.memory_space<vmem>>, vector<4x4xf32>
    %cst_322 = arith.constant dense<0.000000e+00> : vector<4x32xf32>
    %717 = tpu.matmul %716, %643, %cst_322 {dimension_numbers = #tpu.dot_dimension_numbers<[1], [0], [0], [1], [0, 0, 1, 1], [], []>} : vector<4x4xf32>, vector<4x32xf32>, vector<4x32xf32> -> vector<4x32xf32>
    %c0_323 = arith.constant 0 : index
    %c0_324 = arith.constant 0 : index
    %718 = vector.load %arg19[%c0_323, %c0_324] : memref<8x64xf32, #tpu.memory_space<vmem>>, vector<4x32xf32>
    tpu.vector_store %arg19[%c0_323, %c0_324], %715 {strides = array<i32>} : memref<8x64xf32, #tpu.memory_space<vmem>>, vector<4x32xf32>,
    %c4_325 = arith.constant 4 : index
    %c0_326 = arith.constant 0 : index
    %719 = vector.load %arg19[%c4_325, %c0_326] : memref<8x64xf32, #tpu.memory_space<vmem>>, vector<4x32xf32>
    tpu.vector_store %arg19[%c4_325, %c0_326], %715 {strides = array<i32>} : memref<8x64xf32, #tpu.memory_space<vmem>>, vector<4x32xf32>,
    %c0_327 = arith.constant 0 : index
    %c32_328 = arith.constant 32 : index
    %720 = vector.load %arg19[%c0_327, %c32_328] : memref<8x64xf32, #tpu.memory_space<vmem>>, vector<4x32xf32>
    tpu.vector_store %arg19[%c0_327, %c32_328], %643 {strides = array<i32>} : memref<8x64xf32, #tpu.memory_space<vmem>>, vector<4x32xf32>,
    %c4_329 = arith.constant 4 : index
    %c32_330 = arith.constant 32 : index
    %721 = vector.load %arg19[%c4_329, %c32_330] : memref<8x64xf32, #tpu.memory_space<vmem>>, vector<4x32xf32>
    tpu.vector_store %arg19[%c4_329, %c32_330], %717 {strides = array<i32>} : memref<8x64xf32, #tpu.memory_space<vmem>>, vector<4x32xf32>,
    %c0_331 = arith.constant 0 : index
    %c0_332 = arith.constant 0 : index
    %722 = vector.load %arg19[%c0_331, %c0_332] : memref<8x64xf32, #tpu.memory_space<vmem>>, vector<8x64xf32>
    %c0_333 = arith.constant 0 : index
    %c0_334 = arith.constant 0 : index
    %723 = vector.load %arg12[%c0_333, %c0_334] : memref<64x8xf32, #tpu.memory_space<vmem>>, vector<64x8xf32>
    %cst_335 = arith.constant dense<0.000000e+00> : vector<8x8xf32>
    %724 = tpu.matmul %722, %723, %cst_335 {dimension_numbers = #tpu.dot_dimension_numbers<[1], [0], [0], [1], [0, 0, 1, 1], [], []>} : vector<8x64xf32>, vector<64x8xf32>, vector<8x8xf32> -> vector<8x8xf32>
    %c0_336 = arith.constant 0 : index
    %c0_337 = arith.constant 0 : index
    %725 = vector.load %arg13[%c0_336, %c0_337] : memref<1x8xf32, #tpu.memory_space<vmem>>, vector<1x8xf32>
    %726 = vector.broadcast %725 : vector<1x8xf32> to vector<8x8xf32>
    %727 = arith.addf %724, %726 : vector<8x8xf32>
    %cst_338 = arith.constant 0.000000e+00 : f32
    %728 = vector.broadcast %cst_338 : f32 to vector<8x8xf32>
    %729 = arith.maximumf %727, %728 : vector<8x8xf32>
    %c0_339 = arith.constant 0 : index
    %c0_340 = arith.constant 0 : index
    %730 = vector.load %arg14[%c0_339, %c0_340] : memref<1x8xf32, #tpu.memory_space<vmem>>, vector<1x8xf32>
    %731 = vector.broadcast %730 : vector<1x8xf32> to vector<8x8xf32>
    %732 = arith.mulf %729, %731 : vector<8x8xf32>
    %cst_341 = arith.constant dense<0.000000e+00> : vector<8xf32>
    %733 = vector.multi_reduction <add>, %732, %cst_341 [1] : vector<8x8xf32> to vector<8xf32>
    %734 = vector.shape_cast %733 : vector<8xf32> to vector<8x1xf32>
    %c0_342 = arith.constant 0 : index
    %c0_343 = arith.constant 0 : index
    %735 = vector.load %arg15[%c0_342, %c0_343] : memref<1x1xf32, #tpu.memory_space<vmem>>, vector<1x1xf32>
    %736 = vector.broadcast %735 : vector<1x1xf32> to vector<8x1xf32>
    %737 = arith.addf %734, %736 : vector<8x1xf32>
    %cst_344 = arith.constant 0.000000e+00 : f32
    %738 = vector.broadcast %cst_344 : f32 to vector<8x1xf32>
    %739 = arith.subf %738, %737 : vector<8x1xf32>
    %740 = math.exp %739 : vector<8x1xf32>
    %cst_345 = arith.constant 1.000000e+00 : f32
    %741 = vector.broadcast %cst_345 : f32 to vector<8x1xf32>
    %742 = arith.addf %741, %740 : vector<8x1xf32>
    %743 = tpu.reciprocal %742 {approx = true} : vector<8x1xf32> -> vector<8x1xf32>
    %744 = vector.extract_strided_slice %743 {offsets = [0, 0], sizes = [2, 1], strides = [1, 1]} : vector<8x1xf32> to vector<2x1xf32>
    %745 = vector.extract_strided_slice %743 {offsets = [4, 0], sizes = [2, 1], strides = [1, 1]} : vector<8x1xf32> to vector<2x1xf32>
    %746 = math.exp %745 : vector<2x1xf32>
    %747 = vector.shape_cast %746 : vector<2x1xf32> to vector<1x2x1xf32>
    %cst_346 = arith.constant dense<0.000000e+00> : vector<1xf32>
    %748 = vector.multi_reduction <add>, %747, %cst_346 [1, 2] : vector<1x2x1xf32> to vector<1xf32>
    %749 = vector.shape_cast %748 : vector<1xf32> to vector<1x1x1xf32>
    %750 = vector.extract %749[0, 0, 0] : f32 from vector<1x1x1xf32>
    %cst_347 = arith.constant 2.000000e+00 : f32
    %751 = arith.divf %750, %cst_347 : f32
    %cst_348 = arith.constant 1.000000e+00 : f32
    %752 = arith.divf %cst_348, %751 : f32
    %753 = vector.broadcast %752 : f32 to vector<2x1xf32>
    %754 = arith.mulf %753, %746 : vector<2x1xf32>
    %755 = arith.subf %744, %754 : vector<2x1xf32>
    %756 = vector.shape_cast %755 : vector<2x1xf32> to vector<1x2x1xf32>
    %cst_349 = arith.constant dense<0.000000e+00> : vector<1xf32>
    %757 = vector.multi_reduction <add>, %756, %cst_349 [1, 2] : vector<1x2x1xf32> to vector<1xf32>
    %758 = vector.shape_cast %757 : vector<1xf32> to vector<1x1x1xf32>
    %759 = vector.extract %758[0, 0, 0] : f32 from vector<1x1x1xf32>
    %cst_350 = arith.constant 2.000000e+00 : f32
    %760 = arith.divf %759, %cst_350 : f32
    %cst_351 = arith.constant 0.000000e+00 : f32
    %761 = arith.addf %cst_351, %760 : f32
    %762 = vector.extract_strided_slice %743 {offsets = [2, 0], sizes = [2, 1], strides = [1, 1]} : vector<8x1xf32> to vector<2x1xf32>
    %763 = vector.extract_strided_slice %743 {offsets = [6, 0], sizes = [2, 1], strides = [1, 1]} : vector<8x1xf32> to vector<2x1xf32>
    %764 = math.exp %763 : vector<2x1xf32>
    %765 = vector.shape_cast %764 : vector<2x1xf32> to vector<1x2x1xf32>
    %cst_352 = arith.constant dense<0.000000e+00> : vector<1xf32>
    %766 = vector.multi_reduction <add>, %765, %cst_352 [1, 2] : vector<1x2x1xf32> to vector<1xf32>
    %767 = vector.shape_cast %766 : vector<1xf32> to vector<1x1x1xf32>
    %768 = vector.extract %767[0, 0, 0] : f32 from vector<1x1x1xf32>
    %cst_353 = arith.constant 2.000000e+00 : f32
    %769 = arith.divf %768, %cst_353 : f32
    %cst_354 = arith.constant 1.000000e+00 : f32
    %770 = arith.divf %cst_354, %769 : f32
    %771 = vector.broadcast %770 : f32 to vector<2x1xf32>
    %772 = arith.mulf %771, %764 : vector<2x1xf32>
    %773 = arith.subf %762, %772 : vector<2x1xf32>
    %774 = vector.shape_cast %773 : vector<2x1xf32> to vector<1x2x1xf32>
    %cst_355 = arith.constant dense<0.000000e+00> : vector<1xf32>
    %775 = vector.multi_reduction <add>, %774, %cst_355 [1, 2] : vector<1x2x1xf32> to vector<1xf32>
    %776 = vector.shape_cast %775 : vector<1xf32> to vector<1x1x1xf32>
    %777 = vector.extract %776[0, 0, 0] : f32 from vector<1x1x1xf32>
    %cst_356 = arith.constant 2.000000e+00 : f32
    %778 = arith.divf %777, %cst_356 : f32
    %779 = arith.addf %761, %778 : f32
    %780 = arith.addf %709, %779 : f32
    %781 = vector.broadcast %780 : f32 to vector<1x1xf32>
    %c0_357 = arith.constant 0 : index
    %c0_358 = arith.constant 0 : index
    %782 = vector.load %arg17[%c0_357, %c0_358] : memref<1x1xf32, #tpu.memory_space<vmem>>, vector<1x1xf32>
    tpu.vector_store %arg17[%c0_357, %c0_358], %781 {strides = array<i32>} : memref<1x1xf32, #tpu.memory_space<vmem>>, vector<1x1xf32>,
    return
  }
}

</mosaic_0001>

<llo_original>
// kernel: grl_forward.3
$region0: #{grl_forward.3}
  #allocation0 [shape = 'u32[]', space=smem, size = 0x4, offset = 0x4, fixed_abs, tag = 'smem constant byte address 0x4 - core index']
  #allocation1 [shape = 'u32[72,128]{1,0:T(1,128)}', space=vmem, size = 0x9000, scoped, tag = 'internal scratch']
  #allocation2 [shape = 'f32[8,56]{1,0:T(8,128)}', space=vmem, size = 0x1000, scoped, tag = 'scratch operand']
  #allocation3 [shape = 'f32[8,64]{1,0:T(8,128)}', space=vmem, size = 0x1000, scoped, tag = 'scratch operand']
  #allocation4 [shape = 'f32[1,1]{1,0:T(1,128)S(1)}', space=vmem, size = 0x200, scoped, tag = 'scoped memory for grl_forward.3']
  %s0 = inlined_call_operand.vmem [shape: f32[4,16], index: 0, kind: input, shape index: {}]
  %s1 = inlined_call_operand.vmem [shape: f32[4,32], index: 1, kind: input, shape index: {}]
  %s2 = inlined_call_operand.vmem [shape: f32[4,32], index: 2, kind: input, shape index: {}]
  %s3 = inlined_call_operand.vmem [shape: f32[4,4], index: 3, kind: input, shape index: {}]
  %s4 = inlined_call_operand.vmem [shape: f32[4,12], index: 4, kind: input, shape index: {}]
  %s5 = inlined_call_operand.vmem [shape: f32[4,4], index: 5, kind: input, shape index: {}]
  %s6 = inlined_call_operand.vmem [shape: f32[224,32], index: 6, kind: input, shape index: {}]
  %s7 = inlined_call_operand.vmem [shape: f32[4,32], index: 7, kind: input, shape index: {}]
  %s8 = inlined_call_operand.vmem [shape: f32[64,32], index: 8, kind: input, shape index: {}]
  %s9 = inlined_call_operand.vmem [shape: f32[2,32], index: 9, kind: input, shape index: {}]
  %s10 = inlined_call_operand.vmem [shape: f32[32,32], index: 10, kind: input, shape index: {}]
  %s11 = inlined_call_operand.vmem [shape: f32[1,32], index: 11, kind: input, shape index: {}]
  %s12 = inlined_call_operand.vmem [shape: f32[64,8], index: 12, kind: input, shape index: {}]
  %s13 = inlined_call_operand.vmem [shape: f32[1,8], index: 13, kind: input, shape index: {}]
  %s14 = inlined_call_operand.vmem [shape: f32[1,8], index: 14, kind: input, shape index: {}]
  %s15 = inlined_call_operand.<no memory space> [shape: f32[1,1], index: 15, kind: input, shape index: {}]
  %s16 = inlined_call_operand.vmem [shape: f32[4,32], index: 16, kind: output, shape index: {0}]
  %s17 = inlined_call_operand.hbm [shape: f32[1,1], index: 17, kind: output, shape index: {1}]
  %18 = xla_tuple %s16, %s17
  %s19 = sld [smem:[#allocation0]]
  $region90: #{grl_forward.3} parent=0
    _
  %s21 = ssub.s32 1, %s19
  %s22 = scalar_select 0, %s21, %s19
  %v23 = vstv %s15
  %24 = vst [vmem:[#allocation4] sm:$0x1] %v23
  $region1: #{grl_forward.3} parent=0
    #allocation5 [shape = 'u8[2048]{0}', space=smem, size = 0x800, scoped, tag = 'input window, operand 4, single buffered']
    #allocation6 [shape = 's32[1]{0}', space=sflag, size = 0x4, scoped, tag = 'scoped memory for grl_forward.3']
    #allocation7 [shape = 's32[1]{0}', space=sflag, size = 0x4, scoped, tag = 'scoped memory for grl_forward.3']
    #allocation8 [shape = 'u8[2048]{0}', space=smem, size = 0x800, scoped, tag = 'input window, operand 5, single buffered']
    #allocation9 [shape = 's32[1]{0}', space=sflag, size = 0x4, scoped, tag = 'scoped memory for grl_forward.3']
    #allocation10 [shape = 'u8[512]{0}', space=vmem, size = 0x400, scoped, tag = 'output window, operand 1, single buffered']
    %25 = vsyncpa [#allocation7], 0
    %26 = vsyncpa [#allocation9], 0
    %27 = vsyncpa [#allocation6], 0
    // Predicated region
    $region2: #{grl_forward.3} parent=1 // pred_check
      _
    $region3: #{grl_forward.3} parent=1 // pred_check_branch
      %29 = sbr.rel (0) target = $region5
    $region4: #{grl_forward.3} parent=1 // pred_region
      _
    $region5: #{grl_forward.3} parent=1 // pred_fallthru
      _
    // Predicated region
    $region6: #{grl_forward.3} parent=1 // pred_check
      _
    $region7: #{grl_forward.3} parent=1 // pred_check_branch
      %31 = sbr.rel (0) target = $region9
    $region8: #{grl_forward.3} parent=1 // pred_region
      _
    $region9: #{grl_forward.3} parent=1 // pred_fallthru
      _
    // Predicated region
    $region10: #{grl_forward.3} parent=1 // pred_check
      _
    $region11: #{grl_forward.3} parent=1 // pred_check_branch
      %33 = sbr.rel (0) target = $region13
    $region12: #{grl_forward.3} parent=1 // pred_region
      _
    $region13: #{grl_forward.3} parent=1 // pred_fallthru
      _
    // Predicated region
    $region14: #{grl_forward.3} parent=1 // pred_check
      _
    $region15: #{grl_forward.3} parent=1 // pred_check_branch
      %35 = sbr.rel (0) target = $region17
    $region16: #{grl_forward.3} parent=1 // pred_region
      _
    $region17: #{grl_forward.3} parent=1 // pred_fallthru
      _
    // Predicated region
    $region18: #{grl_forward.3} parent=1 // pred_check
      _
    $region19: #{grl_forward.3} parent=1 // pred_check_branch
      %37 = sbr.rel (0) target = $region21
    $region20: #{grl_forward.3} parent=1 // pred_region
      %39 = vsyncadd [#allocation7], 0
      %s41 = sshll.u32 %s4, 4
      %s42 = int_to_ptr.vmem [resolvable:$true] %s41
      %44 = dma.vmem_to_smem %s42, 64, [#allocation5], [#allocation7]
    $region21: #{grl_forward.3} parent=1 // pred_fallthru
      _
    // Predicated region
    $region22: #{grl_forward.3} parent=1 // pred_check
      _
    $region23: #{grl_forward.3} parent=1 // pred_check_branch
      %46 = sbr.rel (0) target = $region25
    $region24: #{grl_forward.3} parent=1 // pred_region
      %48 = vsyncadd [#allocation9], 0
      %s50 = sshll.u32 %s5, 4
      %s51 = int_to_ptr.vmem [resolvable:$true] %s50
      %53 = dma.vmem_to_smem %s51, 64, [#allocation8], [#allocation9]
    $region25: #{grl_forward.3} parent=1 // pred_fallthru
      _
    // Predicated region
    $region26: #{grl_forward.3} parent=1 // pred_check
      _
    $region27: #{grl_forward.3} parent=1 // pred_check_branch
      %55 = sbr.rel (0) target = $region29
    $region28: #{grl_forward.3} parent=1 // pred_region
      _
    $region29: #{grl_forward.3} parent=1 // pred_fallthru
      _
    // Predicated region
    $region30: #{grl_forward.3} parent=1 // pred_check
      _
    $region31: #{grl_forward.3} parent=1 // pred_check_branch
      %57 = sbr.rel (0) target = $region33
    $region32: #{grl_forward.3} parent=1 // pred_region
      _
    $region33: #{grl_forward.3} parent=1 // pred_fallthru
      _
    // Predicated region
    $region34: #{grl_forward.3} parent=1 // pred_check
      _
    $region35: #{grl_forward.3} parent=1 // pred_check_branch
      %59 = sbr.rel (0) target = $region37
    $region36: #{grl_forward.3} parent=1 // pred_region
      _
    $region37: #{grl_forward.3} parent=1 // pred_fallthru
      _
    // Predicated region
    $region38: #{grl_forward.3} parent=1 // pred_check
      _
    $region39: #{grl_forward.3} parent=1 // pred_check_branch
      %61 = sbr.rel (0) target = $region41
    $region40: #{grl_forward.3} parent=1 // pred_region
      _
    $region41: #{grl_forward.3} parent=1 // pred_fallthru
      _
    // Predicated region
    $region42: #{grl_forward.3} parent=1 // pred_check
      _
    $region43: #{grl_forward.3} parent=1 // pred_check_branch
      %63 = sbr.rel (0) target = $region45
    $region44: #{grl_forward.3} parent=1 // pred_region
      _
    $region45: #{grl_forward.3} parent=1 // pred_fallthru
      _
    // Predicated region
    $region46: #{grl_forward.3} parent=1 // pred_check
      _
    $region47: #{grl_forward.3} parent=1 // pred_check_branch
      %65 = sbr.rel (0) target = $region49
    $region48: #{grl_forward.3} parent=1 // pred_region
      _
    $region49: #{grl_forward.3} parent=1 // pred_fallthru
      _
    // Predicated region
    $region50: #{grl_forward.3} parent=1 // pred_check
      _
    $region51: #{grl_forward.3} parent=1 // pred_check_branch
      %67 = sbr.rel (0) target = $region53
    $region52: #{grl_forward.3} parent=1 // pred_region
      _
    $region53: #{grl_forward.3} parent=1 // pred_fallthru
      _
    // Predicated region
    $region54: #{grl_forward.3} parent=1 // pred_check
      _
    $region55: #{grl_forward.3} parent=1 // pred_check_branch
      %69 = sbr.rel (0) target = $region57
    $region56: #{grl_forward.3} parent=1 // pred_region
      _
    $region57: #{grl_forward.3} parent=1 // pred_fallthru
      _
    // Predicated region
    $region58: #{grl_forward.3} parent=1 // pred_check
      _
    $region59: #{grl_forward.3} parent=1 // pred_check_branch
      %71 = sbr.rel (0) target = $region61
    $region60: #{grl_forward.3} parent=1 // pred_region
      _
    $region61: #{grl_forward.3} parent=1 // pred_fallthru
      _
    // Predicated region
    $region62: #{grl_forward.3} parent=1 // pred_check
      _
    $region63: #{grl_forward.3} parent=1 // pred_check_branch
      %73 = sbr.rel (0) target = $region65
    $region64: #{grl_forward.3} parent=1 // pred_region
      _
    $region65: #{grl_forward.3} parent=1 // pred_fallthru
      _
    // Predicated region
    $region66: #{grl_forward.3} parent=1 // pred_check
      _
    $region67: #{grl_forward.3} parent=1 // pred_check_branch
      %75 = sbr.rel (0) target = $region69
    $region68: #{grl_forward.3} parent=1 // pred_region
      %77 = dma.done [#allocation7], 64
    $region69: #{grl_forward.3} parent=1 // pred_fallthru
      _
    // Predicated region
    $region70: #{grl_forward.3} parent=1 // pred_check
      _
    $region71: #{grl_forward.3} parent=1 // pred_check_branch
      %79 = sbr.rel (0) target = $region73
    $region72: #{grl_forward.3} parent=1 // pred_region
      %81 = dma.done [#allocation9], 64
    $region73: #{grl_forward.3} parent=1 // pred_fallthru
      _
    %82 = sfence
    %v83 = vld [vmem:[%s0] sm:$0xf]
    %s84 = sld [smem:[#allocation8]]
    %v85 = vstv %s84
    %v86 = vadd.f32 %v85, 0.0
    %s87 = sld [smem:[#allocation5]]
    %v88 = vstv %s87
    %v89 = vmul.f32 %v88, %v83
    %v90 = vadd.f32 %v86, %v89
    %s91 = sld [smem:[#allocation5 + $0x1]]
    %v92 = vstv %s91
    %v93 = vmul.f32 %v92, %v83
    %95 = vrot.lane.b32.xlu0 %v93, 127
    %v96 = vpop.permute.xlu0 %95
    %v98 = vadd.f32 %v90, %v96
    %s99 = sld [smem:[#allocation5 + $0x2]]
    %v100 = vstv %s99
    %v101 = vmul.f32 %v100, %v83
    %103 = vrot.lane.b32.xlu0 %v101, 126
    %v104 = vpop.permute.xlu0 %103
    %v106 = vadd.f32 %v98, %v104
    %vm107 = vcmask 107520
    %v108 = vsel %vm107, %v106, 0.0
    %109 = vadd.xlane.f32.xlu0 %v108
    %v110 = vpop.xlane.xlu0 %109
    %v111 = vrot.slane %v110, 4
    %v112 = vadd.f32 %v110, %v111
    %v113 = vrot.slane %v112, 2
    %v114 = vadd.f32 %v112, %v113
    %v115 = vrot.slane %v114, 1
    %v116 = vadd.f32 %v114, %v115
    %s117 = vtos %v116
    %v118 = vrcp.pop 28.0
    %v119 = vmul.f32 28.0, %v118
    %v120 = vsub.f32 1.0, %v119
    %v121 = vmul.f32 %v118, %v120
    %v122 = vadd.f32 %v118, %v121
    %vm123 = vweird.f32 %v118
    %v124 = vsel %vm123, %v118, %v122
    %s125 = vtos %v124
    %s126 = smul.f32 %s117, %s125
    %v127 = vstv %s126
    %v128 = vsub.f32 %v106, %v127
    %v129 = vmul.f32 %v128, %v128
    %v130 = vsel %vm107, %v129, 0.0
    %131 = vadd.xlane.f32.xlu0 %v130
    %v132 = vpop.xlane.xlu0 %131
    %v133 = vrot.slane %v132, 4
    %v134 = vadd.f32 %v132, %v133
    %v135 = vrot.slane %v134, 2
    %v136 = vadd.f32 %v134, %v135
    %v137 = vrot.slane %v136, 1
    %v138 = vadd.f32 %v136, %v137
    %s139 = vtos %v138
    %v140 = vrcp.pop 28.0
    %v141 = vmul.f32 28.0, %v140
    %v142 = vsub.f32 1.0, %v141
    %v143 = vmul.f32 %v140, %v142
    %v144 = vadd.f32 %v140, %v143
    %vm145 = vweird.f32 %v140
    %v146 = vsel %vm145, %v140, %v144
    %s147 = vtos %v146
    %s148 = smul.f32 %s139, %s147
    %s149 = sadd.f32 %s148, 1e-05
    %v150 = vstv %s149
    %v151 = vrsqrt.pop %v150
    %v152 = vmul.f32 %v151, %v150
    %v153 = vmul.f32 %v152, %v151
    %v154 = vmul.f32 0.5, %v153
    %v155 = vsub.f32 1.5, %v154
    %v156 = vmul.f32 %v151, %v155
    %vm157 = vweird.f32 %v150
    %vm158 = vweird.f32 %v151
    %vm159 = vmor %vm157, %vm158
    %v160 = vsel %vm159, %v151, %v156
    %s161 = vtos %v160
    %v162 = vstv %s161
    %v163 = vmul.f32 %v128, %v162
    %164 = vst.msk [vmem:[#allocation2] sm:$0x3] %vm107, %v163
    %s165 = sld [smem:[#allocation8 + $0x1]]
    %v166 = vstv %s165
    %v167 = vadd.f32 %v166, 0.0
    %s168 = sld [smem:[#allocation5 + $0x3]]
    %v169 = vstv %s168
    %v170 = vmul.f32 %v169, %v83
    %v171 = vadd.f32 %v167, %v170
    %s172 = sld [smem:[#allocation5 + $0x4]]
    %v173 = vstv %s172
    %v174 = vmul.f32 %v173, %v83
    %176 = vrot.lane.b32.xlu0 %v174, 127
    %v177 = vpop.permute.xlu0 %176
    %v179 = vadd.f32 %v171, %v177
    %s180 = sld [smem:[#allocation5 + $0x5]]
    %v181 = vstv %s180
    %v182 = vmul.f32 %v181, %v83
    %184 = vrot.lane.b32.xlu0 %v182, 126
    %v185 = vpop.permute.xlu0 %184
    %v187 = vadd.f32 %v179, %v185
    %v188 = vsel %vm107, %v187, 0.0
    %189 = vadd.xlane.f32.xlu0 %v188
    %v190 = vpop.xlane.xlu0 %189
    %v191 = vrot.slane %v190, 4
    %v192 = vadd.f32 %v190, %v191
    %v193 = vrot.slane %v192, 2
    %v194 = vadd.f32 %v192, %v193
    %v195 = vrot.slane %v194, 1
    %v196 = vadd.f32 %v194, %v195
    %s197 = vtos %v196
    %v198 = vrcp.pop 28.0
    %v199 = vmul.f32 28.0, %v198
    %v200 = vsub.f32 1.0, %v199
    %v201 = vmul.f32 %v198, %v200
    %v202 = vadd.f32 %v198, %v201
    %vm203 = vweird.f32 %v198
    %v204 = vsel %vm203, %v198, %v202
    %s205 = vtos %v204
    %s206 = smul.f32 %s197, %s205
    %v207 = vstv %s206
    %v208 = vsub.f32 %v187, %v207
    %v209 = vmul.f32 %v208, %v208
    %v210 = vsel %vm107, %v209, 0.0
    %211 = vadd.xlane.f32.xlu0 %v210
    %v212 = vpop.xlane.xlu0 %211
    %v213 = vrot.slane %v212, 4
    %v214 = vadd.f32 %v212, %v213
    %v215 = vrot.slane %v214, 2
    %v216 = vadd.f32 %v214, %v215
    %v217 = vrot.slane %v216, 1
    %v218 = vadd.f32 %v216, %v217
    %s219 = vtos %v218
    %v220 = vrcp.pop 28.0
    %v221 = vmul.f32 28.0, %v220
    %v222 = vsub.f32 1.0, %v221
    %v223 = vmul.f32 %v220, %v222
    %v224 = vadd.f32 %v220, %v223
    %vm225 = vweird.f32 %v220
    %v226 = vsel %vm225, %v220, %v224
    %s227 = vtos %v226
    %s228 = smul.f32 %s219, %s227
    %s229 = sadd.f32 %s228, 1e-05
    %v230 = vstv %s229
    %v231 = vrsqrt.pop %v230
    %v232 = vmul.f32 %v231, %v230
    %v233 = vmul.f32 %v232, %v231
    %v234 = vmul.f32 0.5, %v233
    %v235 = vsub.f32 1.5, %v234
    %v236 = vmul.f32 %v231, %v235
    %vm237 = vweird.f32 %v230
    %vm238 = vweird.f32 %v231
    %vm239 = vmor %vm237, %vm238
    %v240 = vsel %vm239, %v231, %v236
    %s241 = vtos %v240
    %v242 = vstv %s241
    %v243 = vmul.f32 %v208, %v242
    %245 = vrot.lane.b32.xlu0 %v243, 14
    %v246 = vpop.permute.xlu0 %245
    %vm248 = vcmask 222320
    %249 = vst.msk [vmem:[#allocation2] sm:$0x3] %vm248, %v246
    %s250 = sld [smem:[#allocation8 + $0x2]]
    %v251 = vstv %s250
    %v252 = vadd.f32 %v251, 0.0
    %s253 = sld [smem:[#allocation5 + $0x6]]
    %v254 = vstv %s253
    %v255 = vmul.f32 %v254, %v83
    %v256 = vadd.f32 %v252, %v255
    %s257 = sld [smem:[#allocation5 + $0x7]]
    %v258 = vstv %s257
    %v259 = vmul.f32 %v258, %v83
    %261 = vrot.lane.b32.xlu0 %v259, 127
    %v262 = vpop.permute.xlu0 %261
    %v264 = vadd.f32 %v256, %v262
    %s265 = sld [smem:[#allocation5 + $0x8]]
    %v266 = vstv %s265
    %v267 = vmul.f32 %v266, %v83
    %269 = vrot.lane.b32.xlu0 %v267, 126
    %v270 = vpop.permute.xlu0 %269
    %v272 = vadd.f32 %v264, %v270
    %v273 = vsel %vm107, %v272, 0.0
    %274 = vadd.xlane.f32.xlu0 %v273
    %v275 = vpop.xlane.xlu0 %274
    %v276 = vrot.slane %v275, 4
    %v277 = vadd.f32 %v275, %v276
    %v278 = vrot.slane %v277, 2
    %v279 = vadd.f32 %v277, %v278
    %v280 = vrot.slane %v279, 1
    %v281 = vadd.f32 %v279, %v280
    %s282 = vtos %v281
    %v283 = vrcp.pop 28.0
    %v284 = vmul.f32 28.0, %v283
    %v285 = vsub.f32 1.0, %v284
    %v286 = vmul.f32 %v283, %v285
    %v287 = vadd.f32 %v283, %v286
    %vm288 = vweird.f32 %v283
    %v289 = vsel %vm288, %v283, %v287
    %s290 = vtos %v289
    %s291 = smul.f32 %s282, %s290
    %v292 = vstv %s291
    %v293 = vsub.f32 %v272, %v292
    %v294 = vmul.f32 %v293, %v293
    %v295 = vsel %vm107, %v294, 0.0
    %296 = vadd.xlane.f32.xlu0 %v295
    %v297 = vpop.xlane.xlu0 %296
    %v298 = vrot.slane %v297, 4
    %v299 = vadd.f32 %v297, %v298
    %v300 = vrot.slane %v299, 2
    %v301 = vadd.f32 %v299, %v300
    %v302 = vrot.slane %v301, 1
    %v303 = vadd.f32 %v301, %v302
    %s304 = vtos %v303
    %v305 = vrcp.pop 28.0
    %v306 = vmul.f32 28.0, %v305
    %v307 = vsub.f32 1.0, %v306
    %v308 = vmul.f32 %v305, %v307
    %v309 = vadd.f32 %v305, %v308
    %vm310 = vweird.f32 %v305
    %v311 = vsel %vm310, %v305, %v309
    %s312 = vtos %v311
    %s313 = smul.f32 %s304, %s312
    %s314 = sadd.f32 %s313, 1e-05
    %v315 = vstv %s314
    %v316 = vrsqrt.pop %v315
    %v317 = vmul.f32 %v316, %v315
    %v318 = vmul.f32 %v317, %v316
    %v319 = vmul.f32 0.5, %v318
    %v320 = vsub.f32 1.5, %v319
    %v321 = vmul.f32 %v316, %v320
    %vm322 = vweird.f32 %v315
    %vm323 = vweird.f32 %v316
    %vm324 = vmor %vm322, %vm323
    %v325 = vsel %vm324, %v316, %v321
    %s326 = vtos %v325
    %v327 = vstv %s326
    %v328 = vmul.f32 %v293, %v327
    %330 = vrot.lane.b32.xlu0 %v328, 28
    %v331 = vpop.permute.xlu0 %330
    %vm333 = vcmask 337120
    %334 = vst.msk [vmem:[#allocation2] sm:$0x3] %vm333, %v331
    %s335 = sld [smem:[#allocation8 + $0x3]]
    %v336 = vstv %s335
    %v337 = vadd.f32 %v336, 0.0
    %s338 = sld [smem:[#allocation5 + $0x9]]
    %v339 = vstv %s338
    %v340 = vmul.f32 %v339, %v83
    %v341 = vadd.f32 %v337, %v340
    %s342 = sld [smem:[#allocation5 + $0xa]]
    %v343 = vstv %s342
    %v344 = vmul.f32 %v343, %v83
    %346 = vrot.lane.b32.xlu0 %v344, 127
    %v347 = vpop.permute.xlu0 %346
    %v349 = vadd.f32 %v341, %v347
    %s350 = sld [smem:[#allocation5 + $0xb]]
    %v351 = vstv %s350
    %v352 = vmul.f32 %v351, %v83
    %354 = vrot.lane.b32.xlu0 %v352, 126
    %v355 = vpop.permute.xlu0 %354
    %v357 = vadd.f32 %v349, %v355
    %v358 = vsel %vm107, %v357, 0.0
    %359 = vadd.xlane.f32.xlu0 %v358
    %v360 = vpop.xlane.xlu0 %359
    %v361 = vrot.slane %v360, 4
    %v362 = vadd.f32 %v360, %v361
    %v363 = vrot.slane %v362, 2
    %v364 = vadd.f32 %v362, %v363
    %v365 = vrot.slane %v364, 1
    %v366 = vadd.f32 %v364, %v365
    %s367 = vtos %v366
    %v368 = vrcp.pop 28.0
    %v369 = vmul.f32 28.0, %v368
    %v370 = vsub.f32 1.0, %v369
    %v371 = vmul.f32 %v368, %v370
    %v372 = vadd.f32 %v368, %v371
    %vm373 = vweird.f32 %v368
    %v374 = vsel %vm373, %v368, %v372
    %s375 = vtos %v374
    %s376 = smul.f32 %s367, %s375
    %v377 = vstv %s376
    %v378 = vsub.f32 %v357, %v377
    %v379 = vmul.f32 %v378, %v378
    %v380 = vsel %vm107, %v379, 0.0
    %381 = vadd.xlane.f32.xlu0 %v380
    %v382 = vpop.xlane.xlu0 %381
    %v383 = vrot.slane %v382, 4
    %v384 = vadd.f32 %v382, %v383
    %v385 = vrot.slane %v384, 2
    %v386 = vadd.f32 %v384, %v385
    %v387 = vrot.slane %v386, 1
    %v388 = vadd.f32 %v386, %v387
    %s389 = vtos %v388
    %v390 = vrcp.pop 28.0
    %v391 = vmul.f32 28.0, %v390
    %v392 = vsub.f32 1.0, %v391
    %v393 = vmul.f32 %v390, %v392
    %v394 = vadd.f32 %v390, %v393
    %vm395 = vweird.f32 %v390
    %v396 = vsel %vm395, %v390, %v394
    %s397 = vtos %v396
    %s398 = smul.f32 %s389, %s397
    %s399 = sadd.f32 %s398, 1e-05
    %v400 = vstv %s399
    %v401 = vrsqrt.pop %v400
    %v402 = vmul.f32 %v401, %v400
    %v403 = vmul.f32 %v402, %v401
    %v404 = vmul.f32 0.5, %v403
    %v405 = vsub.f32 1.5, %v404
    %v406 = vmul.f32 %v401, %v405
    %vm407 = vweird.f32 %v400
    %vm408 = vweird.f32 %v401
    %vm409 = vmor %vm407, %vm408
    %v410 = vsel %vm409, %v401, %v406
    %s411 = vtos %v410
    %v412 = vstv %s411
    %v413 = vmul.f32 %v378, %v412
    %415 = vrot.lane.b32.xlu0 %v413, 42
    %v416 = vpop.permute.xlu0 %415
    %vm418 = vcmask 451920
    %419 = vst.msk [vmem:[#allocation2] sm:$0x3] %vm418, %v416
    %s420 = sld [smem:[#allocation8 + $0x80]]
    %v421 = vstv %s420
    %v422 = vadd.f32 %v421, 0.0
    %s423 = sld [smem:[#allocation5 + $0x80]]
    %v424 = vstv %s423
    %v425 = vmul.f32 %v424, %v83
    %v426 = vadd.f32 %v422, %v425
    %s427 = sld [smem:[#allocation5 + $0x81]]
    %v428 = vstv %s427
    %v429 = vmul.f32 %v428, %v83
    %431 = vrot.lane.b32.xlu0 %v429, 127
    %v432 = vpop.permute.xlu0 %431
    %v434 = vadd.f32 %v426, %v432
    %s435 = sld [smem:[#allocation5 + $0x82]]
    %v436 = vstv %s435
    %v437 = vmul.f32 %v436, %v83
    %439 = vrot.lane.b32.xlu0 %v437, 126
    %v440 = vpop.permute.xlu0 %439
    %v442 = vadd.f32 %v434, %v440
    %v443 = vsel %vm107, %v442, 0.0
    %444 = vadd.xlane.f32.xlu0 %v443
    %v445 = vpop.xlane.xlu0 %444
    %v446 = vrot.slane %v445, 4
    %v447 = vadd.f32 %v445, %v446
    %v448 = vrot.slane %v447, 2
    %v449 = vadd.f32 %v447, %v448
    %v450 = vrot.slane %v449, 1
    %v451 = vadd.f32 %v449, %v450
    %s452 = vtos %v451
    %v453 = vrcp.pop 28.0
    %v454 = vmul.f32 28.0, %v453
    %v455 = vsub.f32 1.0, %v454
    %v456 = vmul.f32 %v453, %v455
    %v457 = vadd.f32 %v453, %v456
    %vm458 = vweird.f32 %v453
    %v459 = vsel %vm458, %v453, %v457
    %s460 = vtos %v459
    %s461 = smul.f32 %s452, %s460
    %v462 = vstv %s461
    %v463 = vsub.f32 %v442, %v462
    %v464 = vmul.f32 %v463, %v463
    %v465 = vsel %vm107, %v464, 0.0
    %466 = vadd.xlane.f32.xlu0 %v465
    %v467 = vpop.xlane.xlu0 %466
    %v468 = vrot.slane %v467, 4
    %v469 = vadd.f32 %v467, %v468
    %v470 = vrot.slane %v469, 2
    %v471 = vadd.f32 %v469, %v470
    %v472 = vrot.slane %v471, 1
    %v473 = vadd.f32 %v471, %v472
    %s474 = vtos %v473
    %v475 = vrcp.pop 28.0
    %v476 = vmul.f32 28.0, %v475
    %v477 = vsub.f32 1.0, %v476
    %v478 = vmul.f32 %v475, %v477
    %v479 = vadd.f32 %v475, %v478
    %vm480 = vweird.f32 %v475
    %v481 = vsel %vm480, %v475, %v479
    %s482 = vtos %v481
    %s483 = smul.f32 %s474, %s482
    %s484 = sadd.f32 %s483, 1e-05
    %v485 = vstv %s484
    %v486 = vrsqrt.pop %v485
    %v487 = vmul.f32 %v486, %v485
    %v488 = vmul.f32 %v487, %v486
    %v489 = vmul.f32 0.5, %v488
    %v490 = vsub.f32 1.5, %v489
    %v491 = vmul.f32 %v486, %v490
    %vm492 = vweird.f32 %v485
    %vm493 = vweird.f32 %v486
    %vm494 = vmor %vm492, %vm493
    %v495 = vsel %vm494, %v486, %v491
    %s496 = vtos %v495
    %v497 = vstv %s496
    %v498 = vmul.f32 %v463, %v497
    %499 = vst.msk [vmem:[#allocation2 + $0x2] sm:$0x3] %vm107, %v498
    %s500 = sld [smem:[#allocation8 + $0x81]]
    %v501 = vstv %s500
    %v502 = vadd.f32 %v501, 0.0
    %s503 = sld [smem:[#allocation5 + $0x83]]
    %v504 = vstv %s503
    %v505 = vmul.f32 %v504, %v83
    %v506 = vadd.f32 %v502, %v505
    %s507 = sld [smem:[#allocation5 + $0x84]]
    %v508 = vstv %s507
    %v509 = vmul.f32 %v508, %v83
    %511 = vrot.lane.b32.xlu0 %v509, 127
    %v512 = vpop.permute.xlu0 %511
    %v514 = vadd.f32 %v506, %v512
    %s515 = sld [smem:[#allocation5 + $0x85]]
    %v516 = vstv %s515
    %v517 = vmul.f32 %v516, %v83
    %519 = vrot.lane.b32.xlu0 %v517, 126
    %v520 = vpop.permute.xlu0 %519
    %v522 = vadd.f32 %v514, %v520
    %v523 = vsel %vm107, %v522, 0.0
    %524 = vadd.xlane.f32.xlu0 %v523
    %v525 = vpop.xlane.xlu0 %524
    %v526 = vrot.slane %v525, 4
    %v527 = vadd.f32 %v525, %v526
    %v528 = vrot.slane %v527, 2
    %v529 = vadd.f32 %v527, %v528
    %v530 = vrot.slane %v529, 1
    %v531 = vadd.f32 %v529, %v530
    %s532 = vtos %v531
    %v533 = vrcp.pop 28.0
    %v534 = vmul.f32 28.0, %v533
    %v535 = vsub.f32 1.0, %v534
    %v536 = vmul.f32 %v533, %v535
    %v537 = vadd.f32 %v533, %v536
    %vm538 = vweird.f32 %v533
    %v539 = vsel %vm538, %v533, %v537
    %s540 = vtos %v539
    %s541 = smul.f32 %s532, %s540
    %v542 = vstv %s541
    %v543 = vsub.f32 %v522, %v542
    %v544 = vmul.f32 %v543, %v543
    %v545 = vsel %vm107, %v544, 0.0
    %546 = vadd.xlane.f32.xlu0 %v545
    %v547 = vpop.xlane.xlu0 %546
    %v548 = vrot.slane %v547, 4
    %v549 = vadd.f32 %v547, %v548
    %v550 = vrot.slane %v549, 2
    %v551 = vadd.f32 %v549, %v550
    %v552 = vrot.slane %v551, 1
    %v553 = vadd.f32 %v551, %v552
    %s554 = vtos %v553
    %v555 = vrcp.pop 28.0
    %v556 = vmul.f32 28.0, %v555
    %v557 = vsub.f32 1.0, %v556
    %v558 = vmul.f32 %v555, %v557
    %v559 = vadd.f32 %v555, %v558
    %vm560 = vweird.f32 %v555
    %v561 = vsel %vm560, %v555, %v559
    %s562 = vtos %v561
    %s563 = smul.f32 %s554, %s562
    %s564 = sadd.f32 %s563, 1e-05
    %v565 = vstv %s564
    %v566 = vrsqrt.pop %v565
    %v567 = vmul.f32 %v566, %v565
    %v568 = vmul.f32 %v567, %v566
    %v569 = vmul.f32 0.5, %v568
    %v570 = vsub.f32 1.5, %v569
    %v571 = vmul.f32 %v566, %v570
    %vm572 = vweird.f32 %v565
    %vm573 = vweird.f32 %v566
    %vm574 = vmor %vm572, %vm573
    %v575 = vsel %vm574, %v566, %v571
    %s576 = vtos %v575
    %v577 = vstv %s576
    %v578 = vmul.f32 %v543, %v577
    %580 = vrot.lane.b32.xlu0 %v578, 14
    %v581 = vpop.permute.xlu0 %580
    %583 = vst.msk [vmem:[#allocation2 + $0x2] sm:$0x3] %vm248, %v581
    %s584 = sld [smem:[#allocation8 + $0x82]]
    %v585 = vstv %s584
    %v586 = vadd.f32 %v585, 0.0
    %s587 = sld [smem:[#allocation5 + $0x86]]
    %v588 = vstv %s587
    %v589 = vmul.f32 %v588, %v83
    %v590 = vadd.f32 %v586, %v589
    %s591 = sld [smem:[#allocation5 + $0x87]]
    %v592 = vstv %s591
    %v593 = vmul.f32 %v592, %v83
    %595 = vrot.lane.b32.xlu0 %v593, 127
    %v596 = vpop.permute.xlu0 %595
    %v598 = vadd.f32 %v590, %v596
    %s599 = sld [smem:[#allocation5 + $0x88]]
    %v600 = vstv %s599
    %v601 = vmul.f32 %v600, %v83
    %603 = vrot.lane.b32.xlu0 %v601, 126
    %v604 = vpop.permute.xlu0 %603
    %v606 = vadd.f32 %v598, %v604
    %v607 = vsel %vm107, %v606, 0.0
    %608 = vadd.xlane.f32.xlu0 %v607
    %v609 = vpop.xlane.xlu0 %608
    %v610 = vrot.slane %v609, 4
    %v611 = vadd.f32 %v609, %v610
    %v612 = vrot.slane %v611, 2
    %v613 = vadd.f32 %v611, %v612
    %v614 = vrot.slane %v613, 1
    %v615 = vadd.f32 %v613, %v614
    %s616 = vtos %v615
    %v617 = vrcp.pop 28.0
    %v618 = vmul.f32 28.0, %v617
    %v619 = vsub.f32 1.0, %v618
    %v620 = vmul.f32 %v617, %v619
    %v621 = vadd.f32 %v617, %v620
    %vm622 = vweird.f32 %v617
    %v623 = vsel %vm622, %v617, %v621
    %s624 = vtos %v623
    %s625 = smul.f32 %s616, %s624
    %v626 = vstv %s625
    %v627 = vsub.f32 %v606, %v626
    %v628 = vmul.f32 %v627, %v627
    %v629 = vsel %vm107, %v628, 0.0
    %630 = vadd.xlane.f32.xlu0 %v629
    %v631 = vpop.xlane.xlu0 %630
    %v632 = vrot.slane %v631, 4
    %v633 = vadd.f32 %v631, %v632
    %v634 = vrot.slane %v633, 2
    %v635 = vadd.f32 %v633, %v634
    %v636 = vrot.slane %v635, 1
    %v637 = vadd.f32 %v635, %v636
    %s638 = vtos %v637
    %v639 = vrcp.pop 28.0
    %v640 = vmul.f32 28.0, %v639
    %v641 = vsub.f32 1.0, %v640
    %v642 = vmul.f32 %v639, %v641
    %v643 = vadd.f32 %v639, %v642
    %vm644 = vweird.f32 %v639
    %v645 = vsel %vm644, %v639, %v643
    %s646 = vtos %v645
    %s647 = smul.f32 %s638, %s646
    %s648 = sadd.f32 %s647, 1e-05
    %v649 = vstv %s648
    %v650 = vrsqrt.pop %v649
    %v651 = vmul.f32 %v650, %v649
    %v652 = vmul.f32 %v651, %v650
    %v653 = vmul.f32 0.5, %v652
    %v654 = vsub.f32 1.5, %v653
    %v655 = vmul.f32 %v650, %v654
    %vm656 = vweird.f32 %v649
    %vm657 = vweird.f32 %v650
    %vm658 = vmor %vm656, %vm657
    %v659 = vsel %vm658, %v650, %v655
    %s660 = vtos %v659
    %v661 = vstv %s660
    %v662 = vmul.f32 %v627, %v661
    %664 = vrot.lane.b32.xlu0 %v662, 28
    %v665 = vpop.permute.xlu0 %664
    %667 = vst.msk [vmem:[#allocation2 + $0x2] sm:$0x3] %vm333, %v665
    %s668 = sld [smem:[#allocation8 + $0x83]]
    %v669 = vstv %s668
    %v670 = vadd.f32 %v669, 0.0
    %s671 = sld [smem:[#allocation5 + $0x89]]
    %v672 = vstv %s671
    %v673 = vmul.f32 %v672, %v83
    %v674 = vadd.f32 %v670, %v673
    %s675 = sld [smem:[#allocation5 + $0x8a]]
    %v676 = vstv %s675
    %v677 = vmul.f32 %v676, %v83
    %679 = vrot.lane.b32.xlu0 %v677, 127
    %v680 = vpop.permute.xlu0 %679
    %v682 = vadd.f32 %v674, %v680
    %s683 = sld [smem:[#allocation5 + $0x8b]]
    %v684 = vstv %s683
    %v685 = vmul.f32 %v684, %v83
    %687 = vrot.lane.b32.xlu0 %v685, 126
    %v688 = vpop.permute.xlu0 %687
    %v690 = vadd.f32 %v682, %v688
    %v691 = vsel %vm107, %v690, 0.0
    %692 = vadd.xlane.f32.xlu0 %v691
    %v693 = vpop.xlane.xlu0 %692
    %v694 = vrot.slane %v693, 4
    %v695 = vadd.f32 %v693, %v694
    %v696 = vrot.slane %v695, 2
    %v697 = vadd.f32 %v695, %v696
    %v698 = vrot.slane %v697, 1
    %v699 = vadd.f32 %v697, %v698
    %s700 = vtos %v699
    %v701 = vrcp.pop 28.0
    %v702 = vmul.f32 28.0, %v701
    %v703 = vsub.f32 1.0, %v702
    %v704 = vmul.f32 %v701, %v703
    %v705 = vadd.f32 %v701, %v704
    %vm706 = vweird.f32 %v701
    %v707 = vsel %vm706, %v701, %v705
    %s708 = vtos %v707
    %s709 = smul.f32 %s700, %s708
    %v710 = vstv %s709
    %v711 = vsub.f32 %v690, %v710
    %v712 = vmul.f32 %v711, %v711
    %v713 = vsel %vm107, %v712, 0.0
    %714 = vadd.xlane.f32.xlu0 %v713
    %v715 = vpop.xlane.xlu0 %714
    %v716 = vrot.slane %v715, 4
    %v717 = vadd.f32 %v715, %v716
    %v718 = vrot.slane %v717, 2
    %v719 = vadd.f32 %v717, %v718
    %v720 = vrot.slane %v719, 1
    %v721 = vadd.f32 %v719, %v720
    %s722 = vtos %v721
    %v723 = vrcp.pop 28.0
    %v724 = vmul.f32 28.0, %v723
    %v725 = vsub.f32 1.0, %v724
    %v726 = vmul.f32 %v723, %v725
    %v727 = vadd.f32 %v723, %v726
    %vm728 = vweird.f32 %v723
    %v729 = vsel %vm728, %v723, %v727
    %s730 = vtos %v729
    %s731 = smul.f32 %s722, %s730
    %s732 = sadd.f32 %s731, 1e-05
    %v733 = vstv %s732
    %v734 = vrsqrt.pop %v733
    %v735 = vmul.f32 %v734, %v733
    %v736 = vmul.f32 %v735, %v734
    %v737 = vmul.f32 0.5, %v736
    %v738 = vsub.f32 1.5, %v737
    %v739 = vmul.f32 %v734, %v738
    %vm740 = vweird.f32 %v733
    %vm741 = vweird.f32 %v734
    %vm742 = vmor %vm740, %vm741
    %v743 = vsel %vm742, %v734, %v739
    %s744 = vtos %v743
    %v745 = vstv %s744
    %v746 = vmul.f32 %v711, %v745
    %748 = vrot.lane.b32.xlu0 %v746, 42
    %v749 = vpop.permute.xlu0 %748
    %751 = vst.msk [vmem:[#allocation2 + $0x2] sm:$0x3] %vm418, %v749
    %s752 = sld [smem:[#allocation8 + $0x100]]
    %v753 = vstv %s752
    %v754 = vadd.f32 %v753, 0.0
    %s755 = sld [smem:[#allocation5 + $0x100]]
    %v756 = vstv %s755
    %v757 = vmul.f32 %v756, %v83
    %v758 = vadd.f32 %v754, %v757
    %s759 = sld [smem:[#allocation5 + $0x101]]
    %v760 = vstv %s759
    %v761 = vmul.f32 %v760, %v83
    %763 = vrot.lane.b32.xlu0 %v761, 127
    %v764 = vpop.permute.xlu0 %763
    %v766 = vadd.f32 %v758, %v764
    %s767 = sld [smem:[#allocation5 + $0x102]]
    %v768 = vstv %s767
    %v769 = vmul.f32 %v768, %v83
    %771 = vrot.lane.b32.xlu0 %v769, 126
    %v772 = vpop.permute.xlu0 %771
    %v774 = vadd.f32 %v766, %v772
    %v776 = vrot.slane %v774, 2
    %v778 = vsel %vm107, %v776, 0.0
    %779 = vadd.xlane.f32.xlu0 %v778
    %v780 = vpop.xlane.xlu0 %779
    %v781 = vrot.slane %v780, 4
    %v782 = vadd.f32 %v780, %v781
    %v783 = vrot.slane %v782, 2
    %v784 = vadd.f32 %v782, %v783
    %v785 = vrot.slane %v784, 1
    %v786 = vadd.f32 %v784, %v785
    %s787 = vtos %v786
    %v788 = vrcp.pop 28.0
    %v789 = vmul.f32 28.0, %v788
    %v790 = vsub.f32 1.0, %v789
    %v791 = vmul.f32 %v788, %v790
    %v792 = vadd.f32 %v788, %v791
    %vm793 = vweird.f32 %v788
    %v794 = vsel %vm793, %v788, %v792
    %s795 = vtos %v794
    %s796 = smul.f32 %s787, %s795
    %v797 = vstv %s796
    %v798 = vsub.f32 %v774, %v797
    %v799 = vmul.f32 %v798, %v798
    %v801 = vrot.slane %v799, 2
    %v803 = vsel %vm107, %v801, 0.0
    %804 = vadd.xlane.f32.xlu0 %v803
    %v805 = vpop.xlane.xlu0 %804
    %v806 = vrot.slane %v805, 4
    %v807 = vadd.f32 %v805, %v806
    %v808 = vrot.slane %v807, 2
    %v809 = vadd.f32 %v807, %v808
    %v810 = vrot.slane %v809, 1
    %v811 = vadd.f32 %v809, %v810
    %s812 = vtos %v811
    %v813 = vrcp.pop 28.0
    %v814 = vmul.f32 28.0, %v813
    %v815 = vsub.f32 1.0, %v814
    %v816 = vmul.f32 %v813, %v815
    %v817 = vadd.f32 %v813, %v816
    %vm818 = vweird.f32 %v813
    %v819 = vsel %vm818, %v813, %v817
    %s820 = vtos %v819
    %s821 = smul.f32 %s812, %s820
    %s822 = sadd.f32 %s821, 1e-05
    %v823 = vstv %s822
    %v824 = vrsqrt.pop %v823
    %v825 = vmul.f32 %v824, %v823
    %v826 = vmul.f32 %v825, %v824
    %v827 = vmul.f32 0.5, %v826
    %v828 = vsub.f32 1.5, %v827
    %v829 = vmul.f32 %v824, %v828
    %vm830 = vweird.f32 %v823
    %vm831 = vweird.f32 %v824
    %vm832 = vmor %vm830, %vm831
    %v833 = vsel %vm832, %v824, %v829
    %s834 = vtos %v833
    %v835 = vstv %s834
    %v836 = vmul.f32 %v798, %v835
    %vm837 = vcmask 109570
    %838 = vst.msk [vmem:[#allocation2 + $0x2] sm:$0xc] %vm837, %v836
    %s839 = sld [smem:[#allocation8 + $0x101]]
    %v840 = vstv %s839
    %v841 = vadd.f32 %v840, 0.0
    %s842 = sld [smem:[#allocation5 + $0x103]]
    %v843 = vstv %s842
    %v844 = vmul.f32 %v843, %v83
    %v845 = vadd.f32 %v841, %v844
    %s846 = sld [smem:[#allocation5 + $0x104]]
    %v847 = vstv %s846
    %v848 = vmul.f32 %v847, %v83
    %850 = vrot.lane.b32.xlu0 %v848, 127
    %v851 = vpop.permute.xlu0 %850
    %v853 = vadd.f32 %v845, %v851
    %s854 = sld [smem:[#allocation5 + $0x105]]
    %v855 = vstv %s854
    %v856 = vmul.f32 %v855, %v83
    %858 = vrot.lane.b32.xlu0 %v856, 126
    %v859 = vpop.permute.xlu0 %858
    %v861 = vadd.f32 %v853, %v859
    %v863 = vrot.slane %v861, 2
    %v865 = vsel %vm107, %v863, 0.0
    %866 = vadd.xlane.f32.xlu0 %v865
    %v867 = vpop.xlane.xlu0 %866
    %v868 = vrot.slane %v867, 4
    %v869 = vadd.f32 %v867, %v868
    %v870 = vrot.slane %v869, 2
    %v871 = vadd.f32 %v869, %v870
    %v872 = vrot.slane %v871, 1
    %v873 = vadd.f32 %v871, %v872
    %s874 = vtos %v873
    %v875 = vrcp.pop 28.0
    %v876 = vmul.f32 28.0, %v875
    %v877 = vsub.f32 1.0, %v876
    %v878 = vmul.f32 %v875, %v877
    %v879 = vadd.f32 %v875, %v878
    %vm880 = vweird.f32 %v875
    %v881 = vsel %vm880, %v875, %v879
    %s882 = vtos %v881
    %s883 = smul.f32 %s874, %s882
    %v884 = vstv %s883
    %v885 = vsub.f32 %v861, %v884
    %v886 = vmul.f32 %v885, %v885
    %v888 = vrot.slane %v886, 2
    %v890 = vsel %vm107, %v888, 0.0
    %891 = vadd.xlane.f32.xlu0 %v890
    %v892 = vpop.xlane.xlu0 %891
    %v893 = vrot.slane %v892, 4
    %v894 = vadd.f32 %v892, %v893
    %v895 = vrot.slane %v894, 2
    %v896 = vadd.f32 %v894, %v895
    %v897 = vrot.slane %v896, 1
    %v898 = vadd.f32 %v896, %v897
    %s899 = vtos %v898
    %v900 = vrcp.pop 28.0
    %v901 = vmul.f32 28.0, %v900
    %v902 = vsub.f32 1.0, %v901
    %v903 = vmul.f32 %v900, %v902
    %v904 = vadd.f32 %v900, %v903
    %vm905 = vweird.f32 %v900
    %v906 = vsel %vm905, %v900, %v904
    %s907 = vtos %v906
    %s908 = smul.f32 %s899, %s907
    %s909 = sadd.f32 %s908, 1e-05
    %v910 = vstv %s909
    %v911 = vrsqrt.pop %v910
    %v912 = vmul.f32 %v911, %v910
    %v913 = vmul.f32 %v912, %v911
    %v914 = vmul.f32 0.5, %v913
    %v915 = vsub.f32 1.5, %v914
    %v916 = vmul.f32 %v911, %v915
    %vm917 = vweird.f32 %v910
    %vm918 = vweird.f32 %v911
    %vm919 = vmor %vm917, %vm918
    %v920 = vsel %vm919, %v911, %v916
    %s921 = vtos %v920
    %v922 = vstv %s921
    %v923 = vmul.f32 %v885, %v922
    %925 = vrot.lane.b32.xlu0 %v923, 14
    %v926 = vpop.permute.xlu0 %925
    %vm928 = vcmask 224370
    %929 = vst.msk [vmem:[#allocation2 + $0x2] sm:$0xc] %vm928, %v926
    %s930 = sld [smem:[#allocation8 + $0x102]]
    %v931 = vstv %s930
    %v932 = vadd.f32 %v931, 0.0
    %s933 = sld [smem:[#allocation5 + $0x106]]
    %v934 = vstv %s933
    %v935 = vmul.f32 %v934, %v83
    %v936 = vadd.f32 %v932, %v935
    %s937 = sld [smem:[#allocation5 + $0x107]]
    %v938 = vstv %s937
    %v939 = vmul.f32 %v938, %v83
    %941 = vrot.lane.b32.xlu0 %v939, 127
    %v942 = vpop.permute.xlu0 %941
    %v944 = vadd.f32 %v936, %v942
    %s945 = sld [smem:[#allocation5 + $0x108]]
    %v946 = vstv %s945
    %v947 = vmul.f32 %v946, %v83
    %949 = vrot.lane.b32.xlu0 %v947, 126
    %v950 = vpop.permute.xlu0 %949
    %v952 = vadd.f32 %v944, %v950
    %v954 = vrot.slane %v952, 2
    %v956 = vsel %vm107, %v954, 0.0
    %957 = vadd.xlane.f32.xlu0 %v956
    %v958 = vpop.xlane.xlu0 %957
    %v959 = vrot.slane %v958, 4
    %v960 = vadd.f32 %v958, %v959
    %v961 = vrot.slane %v960, 2
    %v962 = vadd.f32 %v960, %v961
    %v963 = vrot.slane %v962, 1
    %v964 = vadd.f32 %v962, %v963
    %s965 = vtos %v964
    %v966 = vrcp.pop 28.0
    %v967 = vmul.f32 28.0, %v966
    %v968 = vsub.f32 1.0, %v967
    %v969 = vmul.f32 %v966, %v968
    %v970 = vadd.f32 %v966, %v969
    %vm971 = vweird.f32 %v966
    %v972 = vsel %vm971, %v966, %v970
    %s973 = vtos %v972
    %s974 = smul.f32 %s965, %s973
    %v975 = vstv %s974
    %v976 = vsub.f32 %v952, %v975
    %v977 = vmul.f32 %v976, %v976
    %v979 = vrot.slane %v977, 2
    %v981 = vsel %vm107, %v979, 0.0
    %982 = vadd.xlane.f32.xlu0 %v981
    %v983 = vpop.xlane.xlu0 %982
    %v984 = vrot.slane %v983, 4
    %v985 = vadd.f32 %v983, %v984
    %v986 = vrot.slane %v985, 2
    %v987 = vadd.f32 %v985, %v986
    %v988 = vrot.slane %v987, 1
    %v989 = vadd.f32 %v987, %v988
    %s990 = vtos %v989
    %v991 = vrcp.pop 28.0
    %v992 = vmul.f32 28.0, %v991
    %v993 = vsub.f32 1.0, %v992
    %v994 = vmul.f32 %v991, %v993
    %v995 = vadd.f32 %v991, %v994
    %vm996 = vweird.f32 %v991
    %v997 = vsel %vm996, %v991, %v995
    %s998 = vtos %v997
    %s999 = smul.f32 %s990, %s998
    %s1000 = sadd.f32 %s999, 1e-05
    %v1001 = vstv %s1000
    %v1002 = vrsqrt.pop %v1001
    %v1003 = vmul.f32 %v1002, %v1001
    %v1004 = vmul.f32 %v1003, %v1002
    %v1005 = vmul.f32 0.5, %v1004
    %v1006 = vsub.f32 1.5, %v1005
    %v1007 = vmul.f32 %v1002, %v1006
    %vm1008 = vweird.f32 %v1001
    %vm1009 = vweird.f32 %v1002
    %vm1010 = vmor %vm1008, %vm1009
    %v1011 = vsel %vm1010, %v1002, %v1007
    %s1012 = vtos %v1011
    %v1013 = vstv %s1012
    %v1014 = vmul.f32 %v976, %v1013
    %1016 = vrot.lane.b32.xlu0 %v1014, 28
    %v1017 = vpop.permute.xlu0 %1016
    %vm1019 = vcmask 339170
    %1020 = vst.msk [vmem:[#allocation2 + $0x2] sm:$0xc] %vm1019, %v1017
    %s1021 = sld [smem:[#allocation8 + $0x103]]
    %v1022 = vstv %s1021
    %v1023 = vadd.f32 %v1022, 0.0
    %s1024 = sld [smem:[#allocation5 + $0x109]]
    %v1025 = vstv %s1024
    %v1026 = vmul.f32 %v1025, %v83
    %v1027 = vadd.f32 %v1023, %v1026
    %s1028 = sld [smem:[#allocation5 + $0x10a]]
    %v1029 = vstv %s1028
    %v1030 = vmul.f32 %v1029, %v83
    %1032 = vrot.lane.b32.xlu0 %v1030, 127
    %v1033 = vpop.permute.xlu0 %1032
    %v1035 = vadd.f32 %v1027, %v1033
    %s1036 = sld [smem:[#allocation5 + $0x10b]]
    %v1037 = vstv %s1036
    %v1038 = vmul.f32 %v1037, %v83
    %1040 = vrot.lane.b32.xlu0 %v1038, 126
    %v1041 = vpop.permute.xlu0 %1040
    %v1043 = vadd.f32 %v1035, %v1041
    %v1045 = vrot.slane %v1043, 2
    %v1047 = vsel %vm107, %v1045, 0.0
    %1048 = vadd.xlane.f32.xlu0 %v1047
    %v1049 = vpop.xlane.xlu0 %1048
    %v1050 = vrot.slane %v1049, 4
    %v1051 = vadd.f32 %v1049, %v1050
    %v1052 = vrot.slane %v1051, 2
    %v1053 = vadd.f32 %v1051, %v1052
    %v1054 = vrot.slane %v1053, 1
    %v1055 = vadd.f32 %v1053, %v1054
    %s1056 = vtos %v1055
    %v1057 = vrcp.pop 28.0
    %v1058 = vmul.f32 28.0, %v1057
    %v1059 = vsub.f32 1.0, %v1058
    %v1060 = vmul.f32 %v1057, %v1059
    %v1061 = vadd.f32 %v1057, %v1060
    %vm1062 = vweird.f32 %v1057
    %v1063 = vsel %vm1062, %v1057, %v1061
    %s1064 = vtos %v1063
    %s1065 = smul.f32 %s1056, %s1064
    %v1066 = vstv %s1065
    %v1067 = vsub.f32 %v1043, %v1066
    %v1068 = vmul.f32 %v1067, %v1067
    %v1070 = vrot.slane %v1068, 2
    %v1072 = vsel %vm107, %v1070, 0.0
    %1073 = vadd.xlane.f32.xlu0 %v1072
    %v1074 = vpop.xlane.xlu0 %1073
    %v1075 = vrot.slane %v1074, 4
    %v1076 = vadd.f32 %v1074, %v1075
    %v1077 = vrot.slane %v1076, 2
    %v1078 = vadd.f32 %v1076, %v1077
    %v1079 = vrot.slane %v1078, 1
    %v1080 = vadd.f32 %v1078, %v1079
    %s1081 = vtos %v1080
    %v1082 = vrcp.pop 28.0
    %v1083 = vmul.f32 28.0, %v1082
    %v1084 = vsub.f32 1.0, %v1083
    %v1085 = vmul.f32 %v1082, %v1084
    %v1086 = vadd.f32 %v1082, %v1085
    %vm1087 = vweird.f32 %v1082
    %v1088 = vsel %vm1087, %v1082, %v1086
    %s1089 = vtos %v1088
    %s1090 = smul.f32 %s1081, %s1089
    %s1091 = sadd.f32 %s1090, 1e-05
    %v1092 = vstv %s1091
    %v1093 = vrsqrt.pop %v1092
    %v1094 = vmul.f32 %v1093, %v1092
    %v1095 = vmul.f32 %v1094, %v1093
    %v1096 = vmul.f32 0.5, %v1095
    %v1097 = vsub.f32 1.5, %v1096
    %v1098 = vmul.f32 %v1093, %v1097
    %vm1099 = vweird.f32 %v1092
    %vm1100 = vweird.f32 %v1093
    %vm1101 = vmor %vm1099, %vm1100
    %v1102 = vsel %vm1101, %v1093, %v1098
    %s1103 = vtos %v1102
    %v1104 = vstv %s1103
    %v1105 = vmul.f32 %v1067, %v1104
    %1107 = vrot.lane.b32.xlu0 %v1105, 42
    %v1108 = vpop.permute.xlu0 %1107
    %vm1110 = vcmask 453970
    %1111 = vst.msk [vmem:[#allocation2 + $0x2] sm:$0xc] %vm1110, %v1108
    %s1112 = sld [smem:[#allocation8 + $0x180]]
    %v1113 = vstv %s1112
    %v1114 = vadd.f32 %v1113, 0.0
    %s1115 = sld [smem:[#allocation5 + $0x180]]
    %v1116 = vstv %s1115
    %v1117 = vmul.f32 %v1116, %v83
    %v1118 = vadd.f32 %v1114, %v1117
    %s1119 = sld [smem:[#allocation5 + $0x181]]
    %v1120 = vstv %s1119
    %v1121 = vmul.f32 %v1120, %v83
    %1123 = vrot.lane.b32.xlu0 %v1121, 127
    %v1124 = vpop.permute.xlu0 %1123
    %v1126 = vadd.f32 %v1118, %v1124
    %s1127 = sld [smem:[#allocation5 + $0x182]]
    %v1128 = vstv %s1127
    %v1129 = vmul.f32 %v1128, %v83
    %1131 = vrot.lane.b32.xlu0 %v1129, 126
    %v1132 = vpop.permute.xlu0 %1131
    %v1134 = vadd.f32 %v1126, %v1132
    %v1136 = vrot.slane %v1134, 2
    %v1138 = vsel %vm107, %v1136, 0.0
    %1139 = vadd.xlane.f32.xlu0 %v1138
    %v1140 = vpop.xlane.xlu0 %1139
    %v1141 = vrot.slane %v1140, 4
    %v1142 = vadd.f32 %v1140, %v1141
    %v1143 = vrot.slane %v1142, 2
    %v1144 = vadd.f32 %v1142, %v1143
    %v1145 = vrot.slane %v1144, 1
    %v1146 = vadd.f32 %v1144, %v1145
    %s1147 = vtos %v1146
    %v1148 = vrcp.pop 28.0
    %v1149 = vmul.f32 28.0, %v1148
    %v1150 = vsub.f32 1.0, %v1149
    %v1151 = vmul.f32 %v1148, %v1150
    %v1152 = vadd.f32 %v1148, %v1151
    %vm1153 = vweird.f32 %v1148
    %v1154 = vsel %vm1153, %v1148, %v1152
    %s1155 = vtos %v1154
    %s1156 = smul.f32 %s1147, %s1155
    %v1157 = vstv %s1156
    %v1158 = vsub.f32 %v1134, %v1157
    %v1159 = vmul.f32 %v1158, %v1158
    %v1161 = vrot.slane %v1159, 2
    %v1163 = vsel %vm107, %v1161, 0.0
    %1164 = vadd.xlane.f32.xlu0 %v1163
    %v1165 = vpop.xlane.xlu0 %1164
    %v1166 = vrot.slane %v1165, 4
    %v1167 = vadd.f32 %v1165, %v1166
    %v1168 = vrot.slane %v1167, 2
    %v1169 = vadd.f32 %v1167, %v1168
    %v1170 = vrot.slane %v1169, 1
    %v1171 = vadd.f32 %v1169, %v1170
    %s1172 = vtos %v1171
    %v1173 = vrcp.pop 28.0
    %v1174 = vmul.f32 28.0, %v1173
    %v1175 = vsub.f32 1.0, %v1174
    %v1176 = vmul.f32 %v1173, %v1175
    %v1177 = vadd.f32 %v1173, %v1176
    %vm1178 = vweird.f32 %v1173
    %v1179 = vsel %vm1178, %v1173, %v1177
    %s1180 = vtos %v1179
    %s1181 = smul.f32 %s1172, %s1180
    %s1182 = sadd.f32 %s1181, 1e-05
    %v1183 = vstv %s1182
    %v1184 = vrsqrt.pop %v1183
    %v1185 = vmul.f32 %v1184, %v1183
    %v1186 = vmul.f32 %v1185, %v1184
    %v1187 = vmul.f32 0.5, %v1186
    %v1188 = vsub.f32 1.5, %v1187
    %v1189 = vmul.f32 %v1184, %v1188
    %vm1190 = vweird.f32 %v1183
    %vm1191 = vweird.f32 %v1184
    %vm1192 = vmor %vm1190, %vm1191
    %v1193 = vsel %vm1192, %v1184, %v1189
    %s1194 = vtos %v1193
    %v1195 = vstv %s1194
    %v1196 = vmul.f32 %v1158, %v1195
    %1197 = vst.msk [vmem:[#allocation2 + $0x4] sm:$0xc] %vm837, %v1196
    %s1198 = sld [smem:[#allocation8 + $0x181]]
    %v1199 = vstv %s1198
    %v1200 = vadd.f32 %v1199, 0.0
    %s1201 = sld [smem:[#allocation5 + $0x183]]
    %v1202 = vstv %s1201
    %v1203 = vmul.f32 %v1202, %v83
    %v1204 = vadd.f32 %v1200, %v1203
    %s1205 = sld [smem:[#allocation5 + $0x184]]
    %v1206 = vstv %s1205
    %v1207 = vmul.f32 %v1206, %v83
    %1209 = vrot.lane.b32.xlu0 %v1207, 127
    %v1210 = vpop.permute.xlu0 %1209
    %v1212 = vadd.f32 %v1204, %v1210
    %s1213 = sld [smem:[#allocation5 + $0x185]]
    %v1214 = vstv %s1213
    %v1215 = vmul.f32 %v1214, %v83
    %1217 = vrot.lane.b32.xlu0 %v1215, 126
    %v1218 = vpop.permute.xlu0 %1217
    %v1220 = vadd.f32 %v1212, %v1218
    %v1222 = vrot.slane %v1220, 2
    %v1224 = vsel %vm107, %v1222, 0.0
    %1225 = vadd.xlane.f32.xlu0 %v1224
    %v1226 = vpop.xlane.xlu0 %1225
    %v1227 = vrot.slane %v1226, 4
    %v1228 = vadd.f32 %v1226, %v1227
    %v1229 = vrot.slane %v1228, 2
    %v1230 = vadd.f32 %v1228, %v1229
    %v1231 = vrot.slane %v1230, 1
    %v1232 = vadd.f32 %v1230, %v1231
    %s1233 = vtos %v1232
    %v1234 = vrcp.pop 28.0
    %v1235 = vmul.f32 28.0, %v1234
    %v1236 = vsub.f32 1.0, %v1235
    %v1237 = vmul.f32 %v1234, %v1236
    %v1238 = vadd.f32 %v1234, %v1237
    %vm1239 = vweird.f32 %v1234
    %v1240 = vsel %vm1239, %v1234, %v1238
    %s1241 = vtos %v1240
    %s1242 = smul.f32 %s1233, %s1241
    %v1243 = vstv %s1242
    %v1244 = vsub.f32 %v1220, %v1243
    %v1245 = vmul.f32 %v1244, %v1244
    %v1247 = vrot.slane %v1245, 2
    %v1249 = vsel %vm107, %v1247, 0.0
    %1250 = vadd.xlane.f32.xlu0 %v1249
    %v1251 = vpop.xlane.xlu0 %1250
    %v1252 = vrot.slane %v1251, 4
    %v1253 = vadd.f32 %v1251, %v1252
    %v1254 = vrot.slane %v1253, 2
    %v1255 = vadd.f32 %v1253, %v1254
    %v1256 = vrot.slane %v1255, 1
    %v1257 = vadd.f32 %v1255, %v1256
    %s1258 = vtos %v1257
    %v1259 = vrcp.pop 28.0
    %v1260 = vmul.f32 28.0, %v1259
    %v1261 = vsub.f32 1.0, %v1260
    %v1262 = vmul.f32 %v1259, %v1261
    %v1263 = vadd.f32 %v1259, %v1262
    %vm1264 = vweird.f32 %v1259
    %v1265 = vsel %vm1264, %v1259, %v1263
    %s1266 = vtos %v1265
    %s1267 = smul.f32 %s1258, %s1266
    %s1268 = sadd.f32 %s1267, 1e-05
    %v1269 = vstv %s1268
    %v1270 = vrsqrt.pop %v1269
    %v1271 = vmul.f32 %v1270, %v1269
    %v1272 = vmul.f32 %v1271, %v1270
    %v1273 = vmul.f32 0.5, %v1272
    %v1274 = vsub.f32 1.5, %v1273
    %v1275 = vmul.f32 %v1270, %v1274
    %vm1276 = vweird.f32 %v1269
    %vm1277 = vweird.f32 %v1270
    %vm1278 = vmor %vm1276, %vm1277
    %v1279 = vsel %vm1278, %v1270, %v1275
    %s1280 = vtos %v1279
    %v1281 = vstv %s1280
    %v1282 = vmul.f32 %v1244, %v1281
    %1284 = vrot.lane.b32.xlu0 %v1282, 14
    %v1285 = vpop.permute.xlu0 %1284
    %1287 = vst.msk [vmem:[#allocation2 + $0x4] sm:$0xc] %vm928, %v1285
    %s1288 = sld [smem:[#allocation8 + $0x182]]
    %v1289 = vstv %s1288
    %v1290 = vadd.f32 %v1289, 0.0
    %s1291 = sld [smem:[#allocation5 + $0x186]]
    %v1292 = vstv %s1291
    %v1293 = vmul.f32 %v1292, %v83
    %v1294 = vadd.f32 %v1290, %v1293
    %s1295 = sld [smem:[#allocation5 + $0x187]]
    %v1296 = vstv %s1295
    %v1297 = vmul.f32 %v1296, %v83
    %1299 = vrot.lane.b32.xlu0 %v1297, 127
    %v1300 = vpop.permute.xlu0 %1299
    %v1302 = vadd.f32 %v1294, %v1300
    %s1303 = sld [smem:[#allocation5 + $0x188]]
    %v1304 = vstv %s1303
    %v1305 = vmul.f32 %v1304, %v83
    %1307 = vrot.lane.b32.xlu0 %v1305, 126
    %v1308 = vpop.permute.xlu0 %1307
    %v1310 = vadd.f32 %v1302, %v1308
    %v1312 = vrot.slane %v1310, 2
    %v1314 = vsel %vm107, %v1312, 0.0
    %1315 = vadd.xlane.f32.xlu0 %v1314
    %v1316 = vpop.xlane.xlu0 %1315
    %v1317 = vrot.slane %v1316, 4
    %v1318 = vadd.f32 %v1316, %v1317
    %v1319 = vrot.slane %v1318, 2
    %v1320 = vadd.f32 %v1318, %v1319
    %v1321 = vrot.slane %v1320, 1
    %v1322 = vadd.f32 %v1320, %v1321
    %s1323 = vtos %v1322
    %v1324 = vrcp.pop 28.0
    %v1325 = vmul.f32 28.0, %v1324
    %v1326 = vsub.f32 1.0, %v1325
    %v1327 = vmul.f32 %v1324, %v1326
    %v1328 = vadd.f32 %v1324, %v1327
    %vm1329 = vweird.f32 %v1324
    %v1330 = vsel %vm1329, %v1324, %v1328
    %s1331 = vtos %v1330
    %s1332 = smul.f32 %s1323, %s1331
    %v1333 = vstv %s1332
    %v1334 = vsub.f32 %v1310, %v1333
    %v1335 = vmul.f32 %v1334, %v1334
    %v1337 = vrot.slane %v1335, 2
    %v1339 = vsel %vm107, %v1337, 0.0
    %1340 = vadd.xlane.f32.xlu0 %v1339
    %v1341 = vpop.xlane.xlu0 %1340
    %v1342 = vrot.slane %v1341, 4
    %v1343 = vadd.f32 %v1341, %v1342
    %v1344 = vrot.slane %v1343, 2
    %v1345 = vadd.f32 %v1343, %v1344
    %v1346 = vrot.slane %v1345, 1
    %v1347 = vadd.f32 %v1345, %v1346
    %s1348 = vtos %v1347
    %v1349 = vrcp.pop 28.0
    %v1350 = vmul.f32 28.0, %v1349
    %v1351 = vsub.f32 1.0, %v1350
    %v1352 = vmul.f32 %v1349, %v1351
    %v1353 = vadd.f32 %v1349, %v1352
    %vm1354 = vweird.f32 %v1349
    %v1355 = vsel %vm1354, %v1349, %v1353
    %s1356 = vtos %v1355
    %s1357 = smul.f32 %s1348, %s1356
    %s1358 = sadd.f32 %s1357, 1e-05
    %v1359 = vstv %s1358
    %v1360 = vrsqrt.pop %v1359
    %v1361 = vmul.f32 %v1360, %v1359
    %v1362 = vmul.f32 %v1361, %v1360
    %v1363 = vmul.f32 0.5, %v1362
    %v1364 = vsub.f32 1.5, %v1363
    %v1365 = vmul.f32 %v1360, %v1364
    %vm1366 = vweird.f32 %v1359
    %vm1367 = vweird.f32 %v1360
    %vm1368 = vmor %vm1366, %vm1367
    %v1369 = vsel %vm1368, %v1360, %v1365
    %s1370 = vtos %v1369
    %v1371 = vstv %s1370
    %v1372 = vmul.f32 %v1334, %v1371
    %1374 = vrot.lane.b32.xlu0 %v1372, 28
    %v1375 = vpop.permute.xlu0 %1374
    %1377 = vst.msk [vmem:[#allocation2 + $0x4] sm:$0xc] %vm1019, %v1375
    %s1378 = sld [smem:[#allocation8 + $0x183]]
    %v1379 = vstv %s1378
    %v1380 = vadd.f32 %v1379, 0.0
    %s1381 = sld [smem:[#allocation5 + $0x189]]
    %v1382 = vstv %s1381
    %v1383 = vmul.f32 %v1382, %v83
    %v1384 = vadd.f32 %v1380, %v1383
    %s1385 = sld [smem:[#allocation5 + $0x18a]]
    %v1386 = vstv %s1385
    %v1387 = vmul.f32 %v1386, %v83
    %1389 = vrot.lane.b32.xlu0 %v1387, 127
    %v1390 = vpop.permute.xlu0 %1389
    %v1392 = vadd.f32 %v1384, %v1390
    %s1393 = sld [smem:[#allocation5 + $0x18b]]
    %v1394 = vstv %s1393
    %v1395 = vmul.f32 %v1394, %v83
    %1397 = vrot.lane.b32.xlu0 %v1395, 126
    %v1398 = vpop.permute.xlu0 %1397
    %v1400 = vadd.f32 %v1392, %v1398
    %v1402 = vrot.slane %v1400, 2
    %v1404 = vsel %vm107, %v1402, 0.0
    %1405 = vadd.xlane.f32.xlu0 %v1404
    %v1406 = vpop.xlane.xlu0 %1405
    %v1407 = vrot.slane %v1406, 4
    %v1408 = vadd.f32 %v1406, %v1407
    %v1409 = vrot.slane %v1408, 2
    %v1410 = vadd.f32 %v1408, %v1409
    %v1411 = vrot.slane %v1410, 1
    %v1412 = vadd.f32 %v1410, %v1411
    %s1413 = vtos %v1412
    %v1414 = vrcp.pop 28.0
    %v1415 = vmul.f32 28.0, %v1414
    %v1416 = vsub.f32 1.0, %v1415
    %v1417 = vmul.f32 %v1414, %v1416
    %v1418 = vadd.f32 %v1414, %v1417
    %vm1419 = vweird.f32 %v1414
    %v1420 = vsel %vm1419, %v1414, %v1418
    %s1421 = vtos %v1420
    %s1422 = smul.f32 %s1413, %s1421
    %v1423 = vstv %s1422
    %v1424 = vsub.f32 %v1400, %v1423
    %v1425 = vmul.f32 %v1424, %v1424
    %v1427 = vrot.slane %v1425, 2
    %v1429 = vsel %vm107, %v1427, 0.0
    %1430 = vadd.xlane.f32.xlu0 %v1429
    %v1431 = vpop.xlane.xlu0 %1430
    %v1432 = vrot.slane %v1431, 4
    %v1433 = vadd.f32 %v1431, %v1432
    %v1434 = vrot.slane %v1433, 2
    %v1435 = vadd.f32 %v1433, %v1434
    %v1436 = vrot.slane %v1435, 1
    %v1437 = vadd.f32 %v1435, %v1436
    %s1438 = vtos %v1437
    %v1439 = vrcp.pop 28.0
    %v1440 = vmul.f32 28.0, %v1439
    %v1441 = vsub.f32 1.0, %v1440
    %v1442 = vmul.f32 %v1439, %v1441
    %v1443 = vadd.f32 %v1439, %v1442
    %vm1444 = vweird.f32 %v1439
    %v1445 = vsel %vm1444, %v1439, %v1443
    %s1446 = vtos %v1445
    %s1447 = smul.f32 %s1438, %s1446
    %s1448 = sadd.f32 %s1447, 1e-05
    %v1449 = vstv %s1448
    %v1450 = vrsqrt.pop %v1449
    %v1451 = vmul.f32 %v1450, %v1449
    %v1452 = vmul.f32 %v1451, %v1450
    %v1453 = vmul.f32 0.5, %v1452
    %v1454 = vsub.f32 1.5, %v1453
    %v1455 = vmul.f32 %v1450, %v1454
    %vm1456 = vweird.f32 %v1449
    %vm1457 = vweird.f32 %v1450
    %vm1458 = vmor %vm1456, %vm1457
    %v1459 = vsel %vm1458, %v1450, %v1455
    %s1460 = vtos %v1459
    %v1461 = vstv %s1460
    %v1462 = vmul.f32 %v1424, %v1461
    %1464 = vrot.lane.b32.xlu0 %v1462, 42
    %v1465 = vpop.permute.xlu0 %1464
    %1467 = vst.msk [vmem:[#allocation2 + $0x4] sm:$0xc] %vm1110, %v1465
    %v1468 = vld [vmem:[#allocation2] sm:$0x3]
    %v1469 = vld [vmem:[%s6] sm:$0xff]
    %v1470 = vld [vmem:[%s6 + $0x8] sm:$0xff]
    %v1471 = vld [vmem:[%s6 + $0x10] sm:$0xff]
    %v1472 = vld [vmem:[%s6 + $0x18] sm:$0xff]
    %v1473 = vld [vmem:[%s6 + $0x20] sm:$0xff]
    %v1474 = vld [vmem:[%s6 + $0x28] sm:$0xff]
    %v1475 = vld [vmem:[%s6 + $0x30] sm:$0xff]
    %v1476 = vld [vmem:[%s7] sm:$0x1]
    %v1477 = vperm.slane %v1476, 0
    %vm1478 = vcmask 457728
    %v1480 = vsel %vm1478, %v1468, 0
    %1482 = vmatpush.msra.mxu0 0.0
    %1483 = vmatpush.msra.mxu0 0.0
    %1484 = vmatpush.msra.mxu0 0.0
    %1485 = vmatpush.msra.mxu0 0.0
    %1486 = vmatpush.msra.mxu0 0.0
    %1487 = vmatpush.msra.mxu0 0.0
    %1488 = vmatpush.msra.mxu0 0.0
    %1489 = vmatpush.msra.mxu0 0.0
    %1490 = vmatpush.msra.mxu0 0.0
    %1491 = vmatpush.msra.mxu0 %v1475
    %1492 = vmatpush.msra.mxu0 %v1474
    %1493 = vmatpush.msra.mxu0 %v1473
    %1494 = vmatpush.msra.mxu0 %v1472
    %1495 = vmatpush.msra.mxu0 %v1471
    %1496 = vmatpush.msra.mxu0 %v1470
    %1497 = vmatpush.msra.mxu0 %v1469
    %1498 = vmatmul.f32.gmra.mxu0 %v1480
    %v1499 = vpop.f32.mrf.mxu0
    %v1500 = vadd.f32 %v1477, %v1499
    %1501 = vdwg.mxu0
    %v1502 = vld [vmem:[#allocation2 + $0x2] sm:$0x3]
    %v1503 = vld [vmem:[%s6 + $0x38] sm:$0xff]
    %v1504 = vld [vmem:[%s6 + $0x40] sm:$0xff]
    %v1505 = vld [vmem:[%s6 + $0x48] sm:$0xff]
    %v1506 = vld [vmem:[%s6 + $0x50] sm:$0xff]
    %v1507 = vld [vmem:[%s6 + $0x58] sm:$0xff]
    %v1508 = vld [vmem:[%s6 + $0x60] sm:$0xff]
    %v1509 = vld [vmem:[%s6 + $0x68] sm:$0xff]
    %v1510 = vld [vmem:[%s7 + $0x1] sm:$0x1]
    %v1511 = vperm.slane %v1510, 0
    %v1513 = vsel %vm1478, %v1502, 0
    %1515 = vmatpush.msra.mxu0 0.0
    %1516 = vmatpush.msra.mxu0 0.0
    %1517 = vmatpush.msra.mxu0 0.0
    %1518 = vmatpush.msra.mxu0 0.0
    %1519 = vmatpush.msra.mxu0 0.0
    %1520 = vmatpush.msra.mxu0 0.0
    %1521 = vmatpush.msra.mxu0 0.0
    %1522 = vmatpush.msra.mxu0 0.0
    %1523 = vmatpush.msra.mxu0 0.0
    %1524 = vmatpush.msra.mxu0 %v1509
    %1525 = vmatpush.msra.mxu0 %v1508
    %1526 = vmatpush.msra.mxu0 %v1507
    %1527 = vmatpush.msra.mxu0 %v1506
    %1528 = vmatpush.msra.mxu0 %v1505
    %1529 = vmatpush.msra.mxu0 %v1504
    %1530 = vmatpush.msra.mxu0 %v1503
    %1531 = vmatmul.f32.gmra.mxu0 %v1513
    %v1532 = vpop.f32.mrf.mxu0
    %v1533 = vadd.f32 %v1511, %v1532
    %1534 = vdwg.mxu0
    %v1535 = vmax.f32 %v1533, 0.0
    %v1536 = vand.u32 2147483647, %v1533
    %v1537 = vsub.f32 0.0, %v1536
    %v1538 = vmul.f32 %v1537, 1.442695
    %v1539 = vpow.pop %v1538
    %v1540 = vadd.f32 %v1539, 1.0
    %v1541 = vlog2.pop %v1540
    %v1542 = vmul.f32 %v1541, 0.6931472
    %v1543 = vadd.f32 %v1535, %v1542
    %v1544 = vld [vmem:[%s2] sm:$0x3]
    %v1545 = vmul.f32 %v1543, 0.5
    %v1546 = vmul.f32 %v1545, 1.442695
    %v1547 = vpow.pop %v1546
    %v1548 = vmul.f32 %v1544, %v1547
    %v1549 = vadd.f32 %v1500, %v1548
    %vm1550 = vcmask 254976
    %1551 = vst.msk [vmem:[%s16] sm:$0x3] %vm1550, %v1549
    %v1552 = vld [vmem:[#allocation2 + $0x4] sm:$0x3]
    %v1553 = vld [vmem:[%s6 + $0x70] sm:$0xff]
    %v1554 = vld [vmem:[%s6 + $0x78] sm:$0xff]
    %v1555 = vld [vmem:[%s6 + $0x80] sm:$0xff]
    %v1556 = vld [vmem:[%s6 + $0x88] sm:$0xff]
    %v1557 = vld [vmem:[%s6 + $0x90] sm:$0xff]
    %v1558 = vld [vmem:[%s6 + $0x98] sm:$0xff]
    %v1559 = vld [vmem:[%s6 + $0xa0] sm:$0xff]
    %v1560 = vld [vmem:[%s7 + $0x2] sm:$0x1]
    %v1561 = vperm.slane %v1560, 0
    %v1563 = vsel %vm1478, %v1552, 0
    %1565 = vmatpush.msra.mxu0 0.0
    %1566 = vmatpush.msra.mxu0 0.0
    %1567 = vmatpush.msra.mxu0 0.0
    %1568 = vmatpush.msra.mxu0 0.0
    %1569 = vmatpush.msra.mxu0 0.0
    %1570 = vmatpush.msra.mxu0 0.0
    %1571 = vmatpush.msra.mxu0 0.0
    %1572 = vmatpush.msra.mxu0 0.0
    %1573 = vmatpush.msra.mxu0 0.0
    %1574 = vmatpush.msra.mxu0 %v1559
    %1575 = vmatpush.msra.mxu0 %v1558
    %1576 = vmatpush.msra.mxu0 %v1557
    %1577 = vmatpush.msra.mxu0 %v1556
    %1578 = vmatpush.msra.mxu0 %v1555
    %1579 = vmatpush.msra.mxu0 %v1554
    %1580 = vmatpush.msra.mxu0 %v1553
    %1581 = vmatmul.f32.gmra.mxu0 %v1563
    %v1582 = vpop.f32.mrf.mxu0
    %v1583 = vadd.f32 %v1561, %v1582
    %1584 = vdwg.mxu0
    %v1585 = vld [vmem:[#allocation2 + $0x6] sm:$0x3]
    %v1586 = vld [vmem:[%s6 + $0xa8] sm:$0xff]
    %v1587 = vld [vmem:[%s6 + $0xb0] sm:$0xff]
    %v1588 = vld [vmem:[%s6 + $0xb8] sm:$0xff]
    %v1589 = vld [vmem:[%s6 + $0xc0] sm:$0xff]
    %v1590 = vld [vmem:[%s6 + $0xc8] sm:$0xff]
    %v1591 = vld [vmem:[%s6 + $0xd0] sm:$0xff]
    %v1592 = vld [vmem:[%s6 + $0xd8] sm:$0xff]
    %v1593 = vld [vmem:[%s7 + $0x3] sm:$0x1]
    %v1594 = vperm.slane %v1593, 0
    %v1596 = vsel %vm1478, %v1585, 0
    %1598 = vmatpush.msra.mxu0 0.0
    %1599 = vmatpush.msra.mxu0 0.0
    %1600 = vmatpush.msra.mxu0 0.0
    %1601 = vmatpush.msra.mxu0 0.0
    %1602 = vmatpush.msra.mxu0 0.0
    %1603 = vmatpush.msra.mxu0 0.0
    %1604 = vmatpush.msra.mxu0 0.0
    %1605 = vmatpush.msra.mxu0 0.0
    %1606 = vmatpush.msra.mxu0 0.0
    %1607 = vmatpush.msra.mxu0 %v1592
    %1608 = vmatpush.msra.mxu0 %v1591
    %1609 = vmatpush.msra.mxu0 %v1590
    %1610 = vmatpush.msra.mxu0 %v1589
    %1611 = vmatpush.msra.mxu0 %v1588
    %1612 = vmatpush.msra.mxu0 %v1587
    %1613 = vmatpush.msra.mxu0 %v1586
    %1614 = vmatmul.f32.gmra.mxu0 %v1596
    %v1615 = vpop.f32.mrf.mxu0
    %v1616 = vadd.f32 %v1594, %v1615
    %1617 = vdwg.mxu0
    %v1618 = vmax.f32 %v1616, 0.0
    %v1619 = vand.u32 2147483647, %v1616
    %v1620 = vsub.f32 0.0, %v1619
    %v1621 = vmul.f32 %v1620, 1.442695
    %v1622 = vpow.pop %v1621
    %v1623 = vadd.f32 %v1622, 1.0
    %v1624 = vlog2.pop %v1623
    %v1625 = vmul.f32 %v1624, 0.6931472
    %v1626 = vadd.f32 %v1618, %v1625
    %v1627 = vld [vmem:[%s2 + $0x2] sm:$0x3]
    %v1628 = vmul.f32 %v1626, 0.5
    %v1629 = vmul.f32 %v1628, 1.442695
    %v1630 = vpow.pop %v1629
    %v1631 = vmul.f32 %v1627, %v1630
    %v1632 = vadd.f32 %v1583, %v1631
    %1633 = vst.msk [vmem:[%s16 + $0x2] sm:$0x3] %vm1550, %v1632
    %v1634 = vld [vmem:[%s16] sm:$0xf]
    %v1635 = vld [vmem:[%s8] sm:$0xff]
    %v1636 = vld [vmem:[%s8 + $0x8] sm:$0xff]
    %v1637 = vld [vmem:[%s8 + $0x10] sm:$0xff]
    %v1638 = vld [vmem:[%s8 + $0x18] sm:$0xff]
    %v1639 = vld [vmem:[%s9] sm:$0x1]
    %v1640 = vperm.slane %v1639, 0
    %vm1641 = vcmask 261120
    %v1643 = vsel %vm1641, %v1549, 0
    %1645 = vmatpush.msra.mxu0 0.0
    %1646 = vmatpush.msra.mxu0 0.0
    %1647 = vmatpush.msra.mxu0 0.0
    %1648 = vmatpush.msra.mxu0 0.0
    %1649 = vmatpush.msra.mxu0 0.0
    %1650 = vmatpush.msra.mxu0 0.0
    %1651 = vmatpush.msra.mxu0 0.0
    %1652 = vmatpush.msra.mxu0 0.0
    %1653 = vmatpush.msra.mxu0 0.0
    %1654 = vmatpush.msra.mxu0 0.0
    %1655 = vmatpush.msra.mxu0 0.0
    %1656 = vmatpush.msra.mxu0 0.0
    %1657 = vmatpush.msra.mxu0 %v1638
    %1658 = vmatpush.msra.mxu0 %v1637
    %1659 = vmatpush.msra.mxu0 %v1636
    %1660 = vmatpush.msra.mxu0 %v1635
    %1661 = vmatmul.f32.gmra.mxu0 %v1643
    %v1662 = vpop.f32.mrf.mxu0
    %v1663 = vadd.f32 %v1640, %v1662
    %1664 = vdwg.mxu0
    %v1665 = vld [vmem:[%s1] sm:$0x3]
    %v1666 = vsub.f32 %v1663, %v1665
    %v1667 = vmul.f32 %v1666, %v1666
    %v1668 = vsel %vm1550, %v1667, 0.0
    %1669 = vadd.xlane.f32.xlu0 %v1668
    %v1670 = vpop.xlane.xlu0 %1669
    %v1671 = vrot.slane %v1670, 4
    %v1672 = vadd.f32 %v1670, %v1671
    %v1673 = vrot.slane %v1672, 2
    %v1674 = vadd.f32 %v1672, %v1673
    %v1675 = vrot.slane %v1674, 1
    %v1676 = vadd.f32 %v1674, %v1675
    %s1677 = vtos %v1676
    %v1678 = vrcp.pop 64.0
    %v1679 = vmul.f32 64.0, %v1678
    %v1680 = vsub.f32 1.0, %v1679
    %v1681 = vmul.f32 %v1678, %v1680
    %v1682 = vadd.f32 %v1678, %v1681
    %vm1683 = vweird.f32 %v1678
    %v1684 = vsel %vm1683, %v1678, %v1682
    %s1685 = vtos %v1684
    %s1686 = smul.f32 %s1677, %s1685
    %v1687 = vsub.f32 %v1549, %v1500
    %v1688 = vmul.f32 %v1687, %v1687
    %v1689 = vsub.f32 0.0, %v1543
    %v1690 = vmul.f32 %v1689, 1.442695
    %v1691 = vpow.pop %v1690
    %v1692 = vmul.f32 %v1688, %v1691
    %v1693 = vadd.f32 %v1543, %v1692
    %v1694 = vmul.f32 %v1693, -0.5
    %v1695 = vmul.f32 %v1549, 0.5
    %v1696 = vmul.f32 %v1695, %v1549
    %v1697 = vadd.f32 %v1694, %v1696
    %v1698 = vsel %vm1550, %v1697, 0.0
    %1699 = vadd.xlane.f32.xlu0 %v1698
    %v1700 = vpop.xlane.xlu0 %1699
    %v1701 = vrot.slane %v1700, 4
    %v1702 = vadd.f32 %v1700, %v1701
    %v1703 = vrot.slane %v1702, 2
    %v1704 = vadd.f32 %v1702, %v1703
    %v1705 = vrot.slane %v1704, 1
    %v1706 = vadd.f32 %v1704, %v1705
    %s1707 = vtos %v1706
    %v1708 = vrcp.pop 2.0
    %v1709 = vmul.f32 2.0, %v1708
    %v1710 = vsub.f32 1.0, %v1709
    %v1711 = vmul.f32 %v1708, %v1710
    %v1712 = vadd.f32 %v1708, %v1711
    %vm1713 = vweird.f32 %v1708
    %v1714 = vsel %vm1713, %v1708, %v1712
    %s1715 = vtos %v1714
    %s1716 = smul.f32 %s1707, %s1715
    %s1717 = ssub.f32 0.0, %s1686
    %s1718 = ssub.f32 %s1717, %s1716
    %v1719 = vld [vmem:[%s8 + $0x20] sm:$0xff]
    %v1720 = vld [vmem:[%s8 + $0x28] sm:$0xff]
    %v1721 = vld [vmem:[%s8 + $0x30] sm:$0xff]
    %v1722 = vld [vmem:[%s8 + $0x38] sm:$0xff]
    %v1723 = vld [vmem:[%s9 + $0x1] sm:$0x1]
    %v1724 = vperm.slane %v1723, 0
    %v1726 = vsel %vm1641, %v1632, 0
    %1728 = vmatpush.msra.mxu0 0.0
    %1729 = vmatpush.msra.mxu0 0.0
    %1730 = vmatpush.msra.mxu0 0.0
    %1731 = vmatpush.msra.mxu0 0.0
    %1732 = vmatpush.msra.mxu0 0.0
    %1733 = vmatpush.msra.mxu0 0.0
    %1734 = vmatpush.msra.mxu0 0.0
    %1735 = vmatpush.msra.mxu0 0.0
    %1736 = vmatpush.msra.mxu0 0.0
    %1737 = vmatpush.msra.mxu0 0.0
    %1738 = vmatpush.msra.mxu0 0.0
    %1739 = vmatpush.msra.mxu0 0.0
    %1740 = vmatpush.msra.mxu0 %v1722
    %1741 = vmatpush.msra.mxu0 %v1721
    %1742 = vmatpush.msra.mxu0 %v1720
    %1743 = vmatpush.msra.mxu0 %v1719
    %1744 = vmatmul.f32.gmra.mxu0 %v1726
    %v1745 = vpop.f32.mrf.mxu0
    %v1746 = vadd.f32 %v1724, %v1745
    %1747 = vdwg.mxu0
    %v1748 = vld [vmem:[%s1 + $0x2] sm:$0x3]
    %v1749 = vsub.f32 %v1746, %v1748
    %v1750 = vmul.f32 %v1749, %v1749
    %v1751 = vsel %vm1550, %v1750, 0.0
    %1752 = vadd.xlane.f32.xlu0 %v1751
    %v1753 = vpop.xlane.xlu0 %1752
    %v1754 = vrot.slane %v1753, 4
    %v1755 = vadd.f32 %v1753, %v1754
    %v1756 = vrot.slane %v1755, 2
    %v1757 = vadd.f32 %v1755, %v1756
    %v1758 = vrot.slane %v1757, 1
    %v1759 = vadd.f32 %v1757, %v1758
    %s1760 = vtos %v1759
    %v1761 = vrcp.pop 64.0
    %v1762 = vmul.f32 64.0, %v1761
    %v1763 = vsub.f32 1.0, %v1762
    %v1764 = vmul.f32 %v1761, %v1763
    %v1765 = vadd.f32 %v1761, %v1764
    %vm1766 = vweird.f32 %v1761
    %v1767 = vsel %vm1766, %v1761, %v1765
    %s1768 = vtos %v1767
    %s1769 = smul.f32 %s1760, %s1768
    %v1770 = vsub.f32 %v1632, %v1583
    %v1771 = vmul.f32 %v1770, %v1770
    %v1772 = vsub.f32 0.0, %v1626
    %v1773 = vmul.f32 %v1772, 1.442695
    %v1774 = vpow.pop %v1773
    %v1775 = vmul.f32 %v1771, %v1774
    %v1776 = vadd.f32 %v1626, %v1775
    %v1777 = vmul.f32 %v1776, -0.5
    %v1778 = vmul.f32 %v1632, 0.5
    %v1779 = vmul.f32 %v1778, %v1632
    %v1780 = vadd.f32 %v1777, %v1779
    %v1781 = vsel %vm1550, %v1780, 0.0
    %1782 = vadd.xlane.f32.xlu0 %v1781
    %v1783 = vpop.xlane.xlu0 %1782
    %v1784 = vrot.slane %v1783, 4
    %v1785 = vadd.f32 %v1783, %v1784
    %v1786 = vrot.slane %v1785, 2
    %v1787 = vadd.f32 %v1785, %v1786
    %v1788 = vrot.slane %v1787, 1
    %v1789 = vadd.f32 %v1787, %v1788
    %s1790 = vtos %v1789
    %v1791 = vrcp.pop 2.0
    %v1792 = vmul.f32 2.0, %v1791
    %v1793 = vsub.f32 1.0, %v1792
    %v1794 = vmul.f32 %v1791, %v1793
    %v1795 = vadd.f32 %v1791, %v1794
    %vm1796 = vweird.f32 %v1791
    %v1797 = vsel %vm1796, %v1791, %v1795
    %s1798 = vtos %v1797
    %s1799 = smul.f32 %s1790, %s1798
    %s1800 = ssub.f32 %s1718, %s1769
    %s1801 = ssub.f32 %s1800, %s1799
    %v1802 = vld [vmem:[%s1] sm:$0xf]
    %v1803 = vld [vmem:[%s10] sm:$0xff]
    %v1804 = vld [vmem:[%s10 + $0x8] sm:$0xff]
    %v1805 = vld [vmem:[%s10 + $0x10] sm:$0xff]
    %v1806 = vld [vmem:[%s10 + $0x18] sm:$0xff]
    %v1807 = vld [vmem:[%s11] sm:$0x1]
    %v1809 = vperm.slane %v1807, 0
    %v1812 = vsel %vm1641, %v1802, 0
    %1814 = vmatpush.msra.mxu0 0.0
    %1815 = vmatpush.msra.mxu0 0.0
    %1816 = vmatpush.msra.mxu0 0.0
    %1817 = vmatpush.msra.mxu0 0.0
    %1818 = vmatpush.msra.mxu0 0.0
    %1819 = vmatpush.msra.mxu0 0.0
    %1820 = vmatpush.msra.mxu0 0.0
    %1821 = vmatpush.msra.mxu0 0.0
    %1822 = vmatpush.msra.mxu0 0.0
    %1823 = vmatpush.msra.mxu0 0.0
    %1824 = vmatpush.msra.mxu0 0.0
    %1825 = vmatpush.msra.mxu0 0.0
    %1826 = vmatpush.msra.mxu0 %v1806
    %1827 = vmatpush.msra.mxu0 %v1805
    %1828 = vmatpush.msra.mxu0 %v1804
    %1829 = vmatpush.msra.mxu0 %v1803
    %1830 = vmatmul.f32.gmra.mxu0 %v1812
    %v1831 = vpop.f32.mrf.mxu0
    %v1832 = vadd.f32 %v1809, %v1831
    %1833 = vdwg.mxu0
    %v1834 = vld [vmem:[%s3] sm:$0xf]
    %vm1835 = vcmask 31744
    %v1837 = vsel %vm1835, %v1834, 0
    %vm1839 = vcmask 1043456
    %v1841 = vsel %vm1839, %v1634, 0
    %1843 = vmatpush.msra.mxu0 0.0
    %1844 = vmatpush.msra.mxu0 0.0
    %1845 = vmatpush.msra.mxu0 0.0
    %1846 = vmatpush.msra.mxu0 0.0
    %1847 = vmatpush.msra.mxu0 0.0
    %1848 = vmatpush.msra.mxu0 0.0
    %1849 = vmatpush.msra.mxu0 0.0
    %1850 = vmatpush.msra.mxu0 0.0
    %1851 = vmatpush.msra.mxu0 0.0
    %1852 = vmatpush.msra.mxu0 0.0
    %1853 = vmatpush.msra.mxu0 0.0
    %1854 = vmatpush.msra.mxu0 0.0
    %1855 = vmatpush.msra.mxu0 0.0
    %1856 = vmatpush.msra.mxu0 0.0
    %1857 = vmatpush.msra.mxu0 0.0
    %1858 = vmatpush.msra.mxu0 %v1841
    %1859 = vmatmul.f32.gmra.mxu0 %v1837
    %v1860 = vpop.f32.mrf.mxu0
    %v1861 = vadd.f32 0.0, %v1860
    %1862 = vdwg.mxu0
    %vm1863 = vcmask 257024
    %1864 = vst.msk [vmem:[#allocation3] sm:$0xf] %vm1863, %v1832
    %1865 = vst.msk [vmem:[#allocation3 + $0x4] sm:$0xf] %vm1863, %v1832
    %1866 = vrot.lane.b32.xlu0 %v1634, 32
    %v1867 = vpop.permute.xlu0 %1866
    %vm1869 = vcmask 519424
    %1870 = vst.msk [vmem:[#allocation3] sm:$0xf] %vm1869, %v1867
    %1872 = vrot.lane.b32.xlu0 %v1861, 32
    %v1873 = vpop.permute.xlu0 %1872
    %1875 = vst.msk [vmem:[#allocation3 + $0x4] sm:$0xf] %vm1869, %v1873
    %v1876 = vld [vmem:[#allocation3] sm:$0xff]
    %v1877 = vld [vmem:[%s12] sm:$0xff]
    %v1878 = vld [vmem:[%s12 + $0x8] sm:$0xff]
    %v1879 = vld [vmem:[%s12 + $0x10] sm:$0xff]
    %v1880 = vld [vmem:[%s12 + $0x18] sm:$0xff]
    %v1881 = vld [vmem:[%s12 + $0x20] sm:$0xff]
    %v1882 = vld [vmem:[%s12 + $0x28] sm:$0xff]
    %v1883 = vld [vmem:[%s12 + $0x30] sm:$0xff]
    %v1884 = vld [vmem:[%s12 + $0x38] sm:$0xff]
    %v1885 = vld [vmem:[%s13] sm:$0x1]
    %v1887 = vperm.slane %v1885, 0
    %vm1889 = vcmask 523264
    %v1891 = vsel %vm1889, %v1876, 0
    %1893 = vmatpush.msra.mxu0 0.0
    %1894 = vmatpush.msra.mxu0 0.0
    %1895 = vmatpush.msra.mxu0 0.0
    %1896 = vmatpush.msra.mxu0 0.0
    %1897 = vmatpush.msra.mxu0 0.0
    %1898 = vmatpush.msra.mxu0 0.0
    %1899 = vmatpush.msra.mxu0 0.0
    %1900 = vmatpush.msra.mxu0 0.0
    %1901 = vmatpush.msra.mxu0 %v1884
    %1902 = vmatpush.msra.mxu0 %v1883
    %1903 = vmatpush.msra.mxu0 %v1882
    %1904 = vmatpush.msra.mxu0 %v1881
    %1905 = vmatpush.msra.mxu0 %v1880
    %1906 = vmatpush.msra.mxu0 %v1879
    %1907 = vmatpush.msra.mxu0 %v1878
    %1908 = vmatpush.msra.mxu0 %v1877
    %1909 = vmatmul.f32.gmra.mxu0 %v1891
    %v1910 = vpop.f32.mrf.mxu0
    %v1911 = vadd.f32 %v1887, %v1910
    %1912 = vdwg.mxu0
    %v1913 = vmax.f32 %v1911, 0.0
    %v1914 = vld [vmem:[%s14] sm:$0x1]
    %v1916 = vperm.slane %v1914, 0
    %v1918 = vmul.f32 %v1913, %v1916
    %vm1919 = vcmask 64512
    %v1920 = vsel %vm1919, %v1918, 0.0
    %1921 = vadd.xlane.f32.xlu0 %v1920
    %v1922 = vpop.xlane.xlu0 %1921
    %v1923 = vld [vmem:[#allocation4] sm:$0x1]
    %v1925 = vperm.slane %v1923, 0
    %v1927 = vadd.f32 %v1922, %v1925
    %v1928 = vsub.f32 0.0, %v1927
    %v1929 = vmul.f32 %v1928, 1.442695
    %v1930 = vpow.pop %v1929
    %v1931 = vadd.f32 %v1930, 1.0
    %v1932 = vrcp.pop %v1931
    %v1933 = vmul.f32 %v1932, 1.442695
    %v1934 = vpow.pop %v1933
    %v1936 = vrot.slane %v1934, 4
    %vm1938 = vcmask 1024
    %v1939 = vsel %vm1938, %v1936, 0.0
    %1940 = vadd.xlane.f32.xlu0 %v1939
    %v1941 = vpop.xlane.xlu0 %1940
    %v1942 = vrot.slane %v1941, 4
    %v1943 = vadd.f32 %v1941, %v1942
    %v1944 = vrot.slane %v1943, 2
    %v1945 = vadd.f32 %v1943, %v1944
    %v1946 = vrot.slane %v1945, 1
    %v1947 = vadd.f32 %v1945, %v1946
    %s1948 = vtos %v1947
    %v1949 = vrcp.pop 2.0
    %v1950 = vmul.f32 2.0, %v1949
    %v1951 = vsub.f32 1.0, %v1950
    %v1952 = vmul.f32 %v1949, %v1951
    %v1953 = vadd.f32 %v1949, %v1952
    %vm1954 = vweird.f32 %v1949
    %v1955 = vsel %vm1954, %v1949, %v1953
    %s1956 = vtos %v1955
    %s1957 = smul.f32 %s1948, %s1956
    %v1958 = vstv %s1957
    %v1959 = vrcp.pop %v1958
    %v1960 = vmul.f32 %v1958, %v1959
    %v1961 = vsub.f32 1.0, %v1960
    %v1962 = vmul.f32 %v1959, %v1961
    %v1963 = vadd.f32 %v1959, %v1962
    %vm1964 = vweird.f32 %v1958
    %vm1965 = vweird.f32 %v1959
    %vm1966 = vmor %vm1964, %vm1965
    %v1967 = vsel %vm1966, %v1959, %v1963
    %v1968 = vand.u32 2147483647, %v1958
    %vm1969 = vcmp.eq.f32.partialorder %v1968, 8.507059e+37
    %v1970 = vand.u32 %v1958, 2147483648
    %v1971 = vor.u32 1.1754944e-38, %v1970
    %v1972 = vsel %vm1969, %v1971, %v1967
    %s1973 = vtos %v1972
    %v1974 = vstv %s1973
    %v1975 = vmul.f32 %v1974, %v1934
    %v1977 = vrot.slane %v1975, 4
    %v1979 = vsub.f32 %v1932, %v1977
    %v1980 = vsel %vm1938, %v1979, 0.0
    %1981 = vadd.xlane.f32.xlu0 %v1980
    %v1982 = vpop.xlane.xlu0 %1981
    %v1983 = vrot.slane %v1982, 4
    %v1984 = vadd.f32 %v1982, %v1983
    %v1985 = vrot.slane %v1984, 2
    %v1986 = vadd.f32 %v1984, %v1985
    %v1987 = vrot.slane %v1986, 1
    %v1988 = vadd.f32 %v1986, %v1987
    %s1989 = vtos %v1988
    %v1990 = vrcp.pop 2.0
    %v1991 = vmul.f32 2.0, %v1990
    %v1992 = vsub.f32 1.0, %v1991
    %v1993 = vmul.f32 %v1990, %v1992
    %v1994 = vadd.f32 %v1990, %v1993
    %vm1995 = vweird.f32 %v1990
    %v1996 = vsel %vm1995, %v1990, %v1994
    %s1997 = vtos %v1996
    %s1998 = smul.f32 %s1989, %s1997
    %s1999 = sadd.f32 %s1998, 0.0
    %v2000 = vrot.slane %v1934, 6
    %v2002 = vsel %vm1938, %v2000, 0.0
    %2003 = vadd.xlane.f32.xlu0 %v2002
    %v2004 = vpop.xlane.xlu0 %2003
    %v2005 = vrot.slane %v2004, 4
    %v2006 = vadd.f32 %v2004, %v2005
    %v2007 = vrot.slane %v2006, 2
    %v2008 = vadd.f32 %v2006, %v2007
    %v2009 = vrot.slane %v2008, 1
    %v2010 = vadd.f32 %v2008, %v2009
    %s2011 = vtos %v2010
    %v2012 = vrcp.pop 2.0
    %v2013 = vmul.f32 2.0, %v2012
    %v2014 = vsub.f32 1.0, %v2013
    %v2015 = vmul.f32 %v2012, %v2014
    %v2016 = vadd.f32 %v2012, %v2015
    %vm2017 = vweird.f32 %v2012
    %v2018 = vsel %vm2017, %v2012, %v2016
    %s2019 = vtos %v2018
    %s2020 = smul.f32 %s2011, %s2019
    %v2021 = vstv %s2020
    %v2022 = vrcp.pop %v2021
    %v2023 = vmul.f32 %v2021, %v2022
    %v2024 = vsub.f32 1.0, %v2023
    %v2025 = vmul.f32 %v2022, %v2024
    %v2026 = vadd.f32 %v2022, %v2025
    %vm2027 = vweird.f32 %v2021
    %vm2028 = vweird.f32 %v2022
    %vm2029 = vmor %vm2027, %vm2028
    %v2030 = vsel %vm2029, %v2022, %v2026
    %v2031 = vand.u32 2147483647, %v2021
    %vm2032 = vcmp.eq.f32.partialorder %v2031, 8.507059e+37
    %v2033 = vand.u32 %v2021, 2147483648
    %v2034 = vor.u32 1.1754944e-38, %v2033
    %v2035 = vsel %vm2032, %v2034, %v2030
    %s2036 = vtos %v2035
    %v2037 = vstv %s2036
    %v2038 = vmul.f32 %v2037, %v1934
    %v2040 = vrot.slane %v2038, 4
    %v2042 = vsub.f32 %v1932, %v2040
    %v2044 = vrot.slane %v2042, 2
    %v2046 = vsel %vm1938, %v2044, 0.0
    %2047 = vadd.xlane.f32.xlu0 %v2046
    %v2048 = vpop.xlane.xlu0 %2047
    %v2049 = vrot.slane %v2048, 4
    %v2050 = vadd.f32 %v2048, %v2049
    %v2051 = vrot.slane %v2050, 2
    %v2052 = vadd.f32 %v2050, %v2051
    %v2053 = vrot.slane %v2052, 1
    %v2054 = vadd.f32 %v2052, %v2053
    %s2055 = vtos %v2054
    %v2056 = vrcp.pop 2.0
    %v2057 = vmul.f32 2.0, %v2056
    %v2058 = vsub.f32 1.0, %v2057
    %v2059 = vmul.f32 %v2056, %v2058
    %v2060 = vadd.f32 %v2056, %v2059
    %vm2061 = vweird.f32 %v2056
    %v2062 = vsel %vm2061, %v2056, %v2060
    %s2063 = vtos %v2062
    %s2064 = smul.f32 %s2055, %s2063
    %s2065 = sadd.f32 %s1999, %s2064
    %s2066 = sadd.f32 %s1801, %s2065
    %v2067 = vstv %s2066
    %vm2068 = vcmask 0
    %2069 = vst.msk [vmem:[#allocation10] sm:$0x1] %vm2068, %v2067
    // Predicated region
    $region74: #{grl_forward.3} parent=1 // pred_check
      _
    $region75: #{grl_forward.3} parent=1 // pred_check_branch
      %2071 = sbr.rel (0) target = $region77
    $region76: #{grl_forward.3} parent=1 // pred_region
      _
    $region77: #{grl_forward.3} parent=1 // pred_fallthru
      _
    // Predicated region
    $region78: #{grl_forward.3} parent=1 // pred_check
      _
    $region79: #{grl_forward.3} parent=1 // pred_check_branch
      %2073 = sbr.rel (0) target = $region81
    $region80: #{grl_forward.3} parent=1 // pred_region
      %2075 = vsyncadd [#allocation6], 0
      %s2077 = sshll.u32 [#allocation10], 4
      %s2078 = int_to_ptr.vmem [resolvable:$true] %s2077
      %s2079 = sshll.u32 %s17, 4
      %s2080 = int_to_ptr.hbm [resolvable:$true] %s2079
      %2082 = dma.vmem_to_hbm [thread:$0]  %s2078, 16, %s2080, [#allocation6]
    $region81: #{grl_forward.3} parent=1 // pred_fallthru
      _
    // Predicated region
    $region82: #{grl_forward.3} parent=1 // pred_check
      _
    $region83: #{grl_forward.3} parent=1 // pred_check_branch
      %2084 = sbr.rel (0) target = $region85
    $region84: #{grl_forward.3} parent=1 // pred_region
      _
    $region85: #{grl_forward.3} parent=1 // pred_fallthru
      _
    // Predicated region
    $region86: #{grl_forward.3} parent=1 // pred_check
      _
    $region87: #{grl_forward.3} parent=1 // pred_check_branch
      %2086 = sbr.rel (0) target = $region89
    $region88: #{grl_forward.3} parent=1 // pred_region
      %2088 = dma.done [#allocation6], 16
    $region89: #{grl_forward.3} parent=1 // pred_fallthru
      _
    %2089 = vsyncpa [#allocation6], 1
    %2090 = vsyncpa [#allocation7], 1
    %2091 = vsyncpa [#allocation9], 1

</llo_original>
